<compile_context>
chip_gen: v6e
topology: v6e:2x2x1
jax: 0.10.0
libtpu: 0.0.40
codegen_flags: <defaults>
</compile_context>

<pallas_src>
import functools

import jax
import jax.numpy as jnp
from jax import lax
from jax.experimental import pallas as pl
from jax.experimental.pallas import tpu as pltpu


def _round_up(x, m):
    return ((x + m - 1) // m) * m


# ----------------------- kernel 1: streamed point features -----------------------

def _point_feat_kernel(x_ref, w1_ref, b1_ref, w2_ref, b2_ref, w3_ref, b3_ref,
                       g_ref, acc_ref):
    """One (batch b, point-tile nt) grid step.

    x_ref:   (1, k, TN)  point tile (channels on sublanes, points on lanes)
    w*_ref:  bf16 BN-folded conv weights; b*_ref: (1, C) f32 BN-folded biases
    g_ref:   (1, 1, 1024) max-pooled global feature, written at the last tile
    acc_ref: (8, 1024)    f32 running partial-max scratch
    """
    nt = pl.program_id(1)

    @pl.when(nt == 0)
    def _init():
        acc_ref[...] = jnp.full(acc_ref.shape, -jnp.inf, dtype=acc_ref.dtype)

    # (k, TN) tile; cast to bf16 in-kernel (no extra HBM cast pass for x).
    x = x_ref[0].astype(jnp.bfloat16)

    # conv1: contract the channel axis (axis 0 of both operands) -> (TN, 64).
    h = lax.dot_general(x, w1_ref[...], (((0,), (0,)), ((), ())),
                        preferred_element_type=jnp.float32)
    h = jnp.maximum(h + b1_ref[...], 0.0).astype(jnp.bfloat16)
    # conv2 -> (TN, 128)
    h = jnp.dot(h, w2_ref[...], preferred_element_type=jnp.float32)
    h = jnp.maximum(h + b2_ref[...], 0.0).astype(jnp.bfloat16)
    # conv3 -> (TN, 1024); keep f32 for the max accumulator.
    h = jnp.dot(h, w3_ref[...], preferred_element_type=jnp.float32)
    h = jnp.maximum(h + b3_ref[...], 0.0)

    # Partial max over this tile into an (8, 1024) accumulator: reducing over
    # the leading (vreg) axis is pure VPU vmax, no per-tile XLU reduction.
    tn = h.shape[0]
    if tn >= 8 and tn % 8 == 0:
        part = jnp.max(h.reshape(tn // 8, 8, 1024), axis=0)
    else:
        part = jnp.broadcast_to(jnp.max(h, axis=0, keepdims=True), (8, 1024))
    acc_ref[...] = jnp.maximum(acc_ref[...], part)

    @pl.when(nt == pl.num_programs(1) - 1)
    def _finalize():
        # Single cross-sublane reduce per batch element.
        g_ref[0] = jnp.max(acc_ref[...], axis=0, keepdims=True)


# ------------------------- kernel 2: head MLP over batch -------------------------

def _head_kernel(g_ref, wf1_ref, bf1_ref, wf2_ref, bf2_ref, wf3_ref, bf3_ref,
                 out_ref):
    """fc1/fc2/fc3 (+ identity folded into bf3) batched over B: (B,1024)->(B,KKp)."""
    f = jnp.maximum(
        jnp.dot(g_ref[...], wf1_ref[...], preferred_element_type=jnp.float32)
        + bf1_ref[...], 0.0)
    f = jnp.maximum(
        jnp.dot(f, wf2_ref[...], preferred_element_type=jnp.float32)
        + bf2_ref[...], 0.0)
    out_ref[...] = (
        jnp.dot(f, wf3_ref[...], preferred_element_type=jnp.float32)
        + bf3_ref[...])


def _fold_bn(W, b, bn, eps=1e-5):
    """Fold eval-mode BatchNorm into a linear layer (W: (Cin, Cout), b: (Cout,))."""
    gamma, beta, mean, var = bn
    scale = gamma / jnp.sqrt(var + eps)
    return W * scale[None, :], (b - mean) * scale + beta


@functools.partial(jax.jit, static_argnames=("k",))
def stnkd_forward(x, params, k):
    """x: (B, k, N) float32  ->  (B, k, k) float32 (STNkd forward, eval-mode BN)."""
    B, k_in, N = x.shape
    assert k_in == k
    KK = k * k
    KKp = max(_round_up(KK, 128), 128)   # lane-dense head output even for small k

    # Fold BN into preceding layers (mathematically identical in eval mode).
    W1, b1 = _fold_bn(params["W1"], params["b1"], params["bn1"])
    W2, b2 = _fold_bn(params["W2"], params["b2"], params["bn2"])
    W3, b3 = _fold_bn(params["W3"], params["b3"], params["bn3"])
    Wf1, bf1 = _fold_bn(params["Wf1"], params["bf1"], params["bn4"])
    Wf2, bf2 = _fold_bn(params["Wf2"], params["bf2"], params["bn5"])
    Wf3 = params["Wf3"]
    bf3 = params["bf3"] + jnp.eye(k, dtype=jnp.float32).reshape(-1)
    if KKp != KK:
        Wf3 = jnp.pad(Wf3, ((0, 0), (0, KKp - KK)))
        bf3 = jnp.pad(bf3, (0, KKp - KK))

    # Point-tile size: one tile for N <= 1024 (no padding / extra grid steps),
    # else lane-aligned 1024-point tiles with replicate padding (max-invariant).
    MAX_TN = 1024
    if N <= MAX_TN:
        TN, Np = N, N
        xs = x.astype(jnp.float32)
    else:
        TN = MAX_TN
        Np = _round_up(N, TN)
        xs = x.astype(jnp.float32)
        if Np != N:
            pad = jnp.broadcast_to(xs[:, :, -1:], (B, k, Np - N))
            xs = jnp.concatenate([xs, pad], axis=2)
    NT = Np // TN

    to2d = lambda v: v.reshape(1, -1).astype(jnp.float32)
    tobf16 = lambda w: w.astype(jnp.bfloat16)
    const = lambda bs: pl.BlockSpec(bs, lambda b, n, _bs=bs: (0,) * len(_bs))

    flops1 = 2 * B * Np * (k * 64 + 64 * 128 + 128 * 1024)
    bytes1 = (4 * B * Np * k
              + 2 * (k * 64 + 64 * 128 + 128 * 1024)
              + 4 * (64 + 128 + 1024)
              + 4 * B * 1024)

    g = pl.pallas_call(
        _point_feat_kernel,
        out_shape=jax.ShapeDtypeStruct((B, 1, 1024), jnp.float32),
        grid_spec=pltpu.PrefetchScalarGridSpec(
            num_scalar_prefetch=0,
            grid=(B, NT),
            in_specs=[
                pl.BlockSpec((1, k, TN), lambda b, n: (b, 0, n)),  # point tile
                const((k, 64)), const((1, 64)),
                const((64, 128)), const((1, 128)),
                const((128, 1024)), const((1, 1024)),
            ],
            out_specs=pl.BlockSpec((1, 1, 1024), lambda b, n: (b, 0, 0)),
            scratch_shapes=[pltpu.VMEM((8, 1024), jnp.float32)],
        ),
        compiler_params=pltpu.CompilerParams(
            dimension_semantics=("parallel", "arbitrary"),
        ),
        cost_estimate=pl.CostEstimate(
            flops=flops1, transcendentals=0, bytes_accessed=bytes1),
    )(xs,
      tobf16(W1), to2d(b1),
      tobf16(W2), to2d(b2),
      tobf16(W3), to2d(b3))

    g2 = g[:, 0, :]  # (B, 1024) global feature

    flops2 = 2 * B * (1024 * 512 + 512 * 256 + 256 * KKp)
    bytes2 = 4 * (B * 1024 + 1024 * 512 + 512 + 512 * 256 + 256
                  + 256 * KKp + KKp + B * KKp)

    out = pl.pallas_call(
        _head_kernel,
        out_shape=jax.ShapeDtypeStruct((B, KKp), jnp.float32),
        grid_spec=pltpu.PrefetchScalarGridSpec(
            num_scalar_prefetch=0,
            grid=(1,),
            in_specs=[
                pl.BlockSpec((B, 1024), lambda i: (0, 0)),
                pl.BlockSpec((1024, 512), lambda i: (0, 0)),
                pl.BlockSpec((1, 512), lambda i: (0, 0)),
                pl.BlockSpec((512, 256), lambda i: (0, 0)),
                pl.BlockSpec((1, 256), lambda i: (0, 0)),
                pl.BlockSpec((256, KKp), lambda i: (0, 0)),
                pl.BlockSpec((1, KKp), lambda i: (0, 0)),
            ],
            out_specs=pl.BlockSpec((B, KKp), lambda i: (0, 0)),
        ),
        compiler_params=pltpu.CompilerParams(
            dimension_semantics=("arbitrary",),
        ),
        cost_estimate=pl.CostEstimate(
            flops=flops2, transcendentals=0, bytes_accessed=bytes2),
    )(g2,
      Wf1.astype(jnp.float32), to2d(bf1),
      Wf2.astype(jnp.float32), to2d(bf2),
      Wf3.astype(jnp.float32), to2d(bf3))

    return out[:, :KK].reshape(B, k, k)


# ----------------------------- pure-JAX reference -----------------------------

def stnkd_reference(x, p, k, eps=1e-5):
    def bn(y, bnp):
        gamma, beta, mean, var = bnp
        return (y - mean) / jnp.sqrt(var + eps) * gamma + beta

    B = x.shape[0]
    h = jnp.transpose(x, (0, 2, 1))                                  # (B, N, k)
    h = jax.nn.relu(bn(h @ p["W1"] + p["b1"], p["bn1"]))
    h = jax.nn.relu(bn(h @ p["W2"] + p["b2"], p["bn2"]))
    h = jax.nn.relu(bn(h @ p["W3"] + p["b3"], p["bn3"]))
    g = jnp.max(h, axis=1)                                           # (B, 1024)
    f = jax.nn.relu(bn(g @ p["Wf1"] + p["bf1"], p["bn4"]))
    f = jax.nn.relu(bn(f @ p["Wf2"] + p["bf2"], p["bn5"]))
    out = f @ p["Wf3"] + p["bf3"] + jnp.eye(k, dtype=jnp.float32).reshape(-1)
    return out.reshape(B, k, k)


def _init_params(key, k):
    keys = iter(jax.random.split(key, 40))

    def lin(cin, cout, scale=0.05):
        W = jax.random.normal(next(keys), (cin, cout), jnp.float32) * scale
        b = jax.random.normal(next(keys), (cout,), jnp.float32) * 0.05
        return W, b

    def bnp(c):
        gamma = jax.random.uniform(next(keys), (c,), jnp.float32, 0.5, 1.5)
        beta = jax.random.normal(next(keys), (c,), jnp.float32) * 0.1
        mean = jax.random.normal(next(keys), (c,), jnp.float32) * 0.1
        var = jax.random.uniform(next(keys), (c,), jnp.float32, 0.5, 1.5)
        return (gamma, beta, mean, var)

    p = {}
    p["W1"], p["b1"] = lin(k, 64)          # conv1 (1x1) stored as W^T: (Cin, Cout)
    p["bn1"] = bnp(64)
    p["W2"], p["b2"] = lin(64, 128)
    p["bn2"] = bnp(128)
    p["W3"], p["b3"] = lin(128, 1024)
    p["bn3"] = bnp(1024)
    p["Wf1"], p["bf1"] = lin(1024, 512)
    p["bn4"] = bnp(512)
    p["Wf2"], p["bf2"] = lin(512, 256)
    p["bn5"] = bnp(256)
    p["Wf3"], p["bf3"] = lin(256, k * k)
    return p


if __name__ == "__main__":
    key = jax.random.PRNGKey(0)
    k_param, k_x1, k_x2 = jax.random.split(key, 3)

    B, K = 2, 16  # small STNkd: batch=2, transform dim k=16
    params = _init_params(k_param, K)

    # Config 1: single-tile path (N <= 1024, no padding, one grid step / batch).
    N1 = 320
    x1 = jax.random.normal(k_x1, (B, K, N1), dtype=jnp.float32)
    out1 = stnkd_forward(x1, params, K)
    jax.block_until_ready(out1)
    ref1 = stnkd_reference(x1, params, K)
    assert out1.shape == (B, K, K), out1.shape
    # bf16 matmul path (f32 accumulation) -> slightly looser tolerance than pure f32.
    assert jnp.allclose(out1, ref1, atol=3e-2, rtol=3e-2), (
        float(jnp.max(jnp.abs(out1 - ref1))))

    # Config 2: streaming path (N > 1024, multiple point tiles + replicate pad).
    N2 = 2500
    x2 = jax.random.normal(k_x2, (B, K, N2), dtype=jnp.float32)
    out2 = stnkd_forward(x2, params, K)
    jax.block_until_ready(out2)
    ref2 = stnkd_reference(x2, params, K)
    assert out2.shape == (B, K, K), out2.shape
    assert jnp.allclose(out2, ref2, atol=3e-2, rtol=3e-2), (
        float(jnp.max(jnp.abs(out2 - ref2))))

    print("KERNEL_OK")
</pallas_src>

<mosaic_0001>
module attributes {stable_mosaic.version = 11 : i64} {
  func.func @_point_feat_kernel(%arg0: i32, %arg1: i32, %arg2: memref<1x16x320xf32, #tpu.memory_space<vmem>>, %arg3: memref<16x64xbf16, #tpu.memory_space<vmem>>, %arg4: memref<1x64xf32, #tpu.memory_space<vmem>>, %arg5: memref<64x128xbf16, #tpu.memory_space<vmem>>, %arg6: memref<1x128xf32, #tpu.memory_space<vmem>>, %arg7: memref<128x1024xbf16, #tpu.memory_space<vmem>>, %arg8: memref<1x1024xf32, #tpu.memory_space<vmem>>, %arg9: memref<1x1x1024xf32, #tpu.memory_space<vmem>>, %arg10: memref<8x1024xf32, #tpu.memory_space<vmem>>) attributes {dimension_semantics = [#tpu.dimension_semantics<parallel>, #tpu.dimension_semantics<arbitrary>], iteration_bounds = array<i64: 2, 1>, scalar_prefetch = 0 : i64, scratch_operands = 1 : i64, tpu.core_type = #tpu.core_type<tc>, window_params = [{transform_indices = @transform_0, window_bounds = array<i64: 1, 16, 320>}, {pipeline_mode = #tpu.pipeline_mode<synchronous>, transform_indices = @transform_1, window_bounds = array<i64: 16, 64>}, {pipeline_mode = #tpu.pipeline_mode<synchronous>, transform_indices = @transform_2, window_bounds = array<i64: 1, 64>}, {pipeline_mode = #tpu.pipeline_mode<synchronous>, transform_indices = @transform_3, window_bounds = array<i64: 64, 128>}, {pipeline_mode = #tpu.pipeline_mode<synchronous>, transform_indices = @transform_4, window_bounds = array<i64: 1, 128>}, {pipeline_mode = #tpu.pipeline_mode<synchronous>, transform_indices = @transform_5, window_bounds = array<i64: 128, 1024>}, {pipeline_mode = #tpu.pipeline_mode<synchronous>, transform_indices = @transform_6, window_bounds = array<i64: 1, 1024>}, {transform_indices = @transform_7, window_bounds = array<i64: 1, 1, 1024>}]} {
    %c0_i32 = arith.constant 0 : i32
    %0 = arith.cmpi eq, %arg1, %c0_i32 : i32
    %1 = arith.extui %0 : i1 to i32
    %c0_i32_0 = arith.constant 0 : i32
    %2 = arith.cmpi ne, %1, %c0_i32_0 : i32
    scf.if %2 {
      %cst_27 = arith.constant 0xFF800000 : f32
      %37 = vector.broadcast %cst_27 : f32 to vector<8x1024xf32>
      %c0_28 = arith.constant 0 : index
      %c0_29 = arith.constant 0 : index
      %38 = vector.load %arg10[%c0_28, %c0_29] : memref<8x1024xf32, #tpu.memory_space<vmem>>, vector<8x1024xf32>
      tpu.vector_store %arg10[%c0_28, %c0_29], %37 {strides = array<i32>} : memref<8x1024xf32, #tpu.memory_space<vmem>>, vector<8x1024xf32>,
    } else {
    }
    %c0 = arith.constant 0 : index
    %c0_1 = arith.constant 0 : index
    %c0_2 = arith.constant 0 : index
    %3 = vector.load %arg2[%c0, %c0_1, %c0_2] : memref<1x16x320xf32, #tpu.memory_space<vmem>>, vector<1x16x320xf32>
    %4 = vector.shape_cast %3 : vector<1x16x320xf32> to vector<16x320xf32>
    %5 = arith.truncf %4 : vector<16x320xf32> to vector<16x320xbf16>
    %c0_3 = arith.constant 0 : index
    %c0_4 = arith.constant 0 : index
    %6 = vector.load %arg3[%c0_3, %c0_4] : memref<16x64xbf16, #tpu.memory_space<vmem>>, vector<16x64xbf16>
    %cst = arith.constant dense<0.000000e+00> : vector<320x64xf32>
    %7 = tpu.matmul %5, %6, %cst {dimension_numbers = #tpu.dot_dimension_numbers<[0], [0], [1], [1], [0, 1, 1, 1], [], []>} : vector<16x320xbf16>, vector<16x64xbf16>, vector<320x64xf32> -> vector<320x64xf32>
    %c0_5 = arith.constant 0 : index
    %c0_6 = arith.constant 0 : index
    %8 = vector.load %arg4[%c0_5, %c0_6] : memref<1x64xf32, #tpu.memory_space<vmem>>, vector<1x64xf32>
    %9 = vector.broadcast %8 : vector<1x64xf32> to vector<320x64xf32>
    %10 = arith.addf %7, %9 : vector<320x64xf32>
    %cst_7 = arith.constant 0.000000e+00 : f32
    %11 = vector.broadcast %cst_7 : f32 to vector<320x64xf32>
    %12 = arith.maximumf %10, %11 : vector<320x64xf32>
    %13 = arith.truncf %12 : vector<320x64xf32> to vector<320x64xbf16>
    %c0_8 = arith.constant 0 : index
    %c0_9 = arith.constant 0 : index
    %14 = vector.load %arg5[%c0_8, %c0_9] : memref<64x128xbf16, #tpu.memory_space<vmem>>, vector<64x128xbf16>
    %cst_10 = arith.constant dense<0.000000e+00> : vector<320x128xf32>
    %15 = tpu.matmul %13, %14, %cst_10 {dimension_numbers = #tpu.dot_dimension_numbers<[1], [0], [0], [1], [0, 0, 1, 1], [], []>} : vector<320x64xbf16>, vector<64x128xbf16>, vector<320x128xf32> -> vector<320x128xf32>
    %c0_11 = arith.constant 0 : index
    %c0_12 = arith.constant 0 : index
    %16 = vector.load %arg6[%c0_11, %c0_12] : memref<1x128xf32, #tpu.memory_space<vmem>>, vector<1x128xf32>
    %17 = vector.broadcast %16 : vector<1x128xf32> to vector<320x128xf32>
    %18 = arith.addf %15, %17 : vector<320x128xf32>
    %cst_13 = arith.constant 0.000000e+00 : f32
    %19 = vector.broadcast %cst_13 : f32 to vector<320x128xf32>
    %20 = arith.maximumf %18, %19 : vector<320x128xf32>
    %21 = arith.truncf %20 : vector<320x128xf32> to vector<320x128xbf16>
    %c0_14 = arith.constant 0 : index
    %c0_15 = arith.constant 0 : index
    %22 = vector.load %arg7[%c0_14, %c0_15] : memref<128x1024xbf16, #tpu.memory_space<vmem>>, vector<128x1024xbf16>
    %cst_16 = arith.constant dense<0.000000e+00> : vector<320x1024xf32>
    %23 = tpu.matmul %21, %22, %cst_16 {dimension_numbers = #tpu.dot_dimension_numbers<[1], [0], [0], [1], [0, 0, 1, 1], [], []>} : vector<320x128xbf16>, vector<128x1024xbf16>, vector<320x1024xf32> -> vector<320x1024xf32>
    %c0_17 = arith.constant 0 : index
    %c0_18 = arith.constant 0 : index
    %24 = vector.load %arg8[%c0_17, %c0_18] : memref<1x1024xf32, #tpu.memory_space<vmem>>, vector<1x1024xf32>
    %25 = vector.broadcast %24 : vector<1x1024xf32> to vector<320x1024xf32>
    %26 = arith.addf %23, %25 : vector<320x1024xf32>
    %cst_19 = arith.constant 0.000000e+00 : f32
    %27 = vector.broadcast %cst_19 : f32 to vector<320x1024xf32>
    %28 = arith.maximumf %26, %27 : vector<320x1024xf32>
    %29 = vector.shape_cast %28 : vector<320x1024xf32> to vector<40x8x1024xf32>
    %cst_20 = arith.constant dense<0xFF800000> : vector<8x1024xf32>
    %30 = vector.multi_reduction <maximumf>, %29, %cst_20 [0] : vector<40x8x1024xf32> to vector<8x1024xf32>
    %c0_21 = arith.constant 0 : index
    %c0_22 = arith.constant 0 : index
    %31 = vector.load %arg10[%c0_21, %c0_22] : memref<8x1024xf32, #tpu.memory_space<vmem>>, vector<8x1024xf32>
    %32 = arith.maximumf %31, %30 : vector<8x1024xf32>
    %c0_23 = arith.constant 0 : index
    %c0_24 = arith.constant 0 : index
    %33 = vector.load %arg10[%c0_23, %c0_24] : memref<8x1024xf32, #tpu.memory_space<vmem>>, vector<8x1024xf32>
    tpu.vector_store %arg10[%c0_23, %c0_24], %32 {strides = array<i32>} : memref<8x1024xf32, #tpu.memory_space<vmem>>, vector<8x1024xf32>,
    %c0_i32_25 = arith.constant 0 : i32
    %34 = arith.cmpi eq, %arg1, %c0_i32_25 : i32
    %35 = arith.extui %34 : i1 to i32
    %c0_i32_26 = arith.constant 0 : i32
    %36 = arith.cmpi ne, %35, %c0_i32_26 : i32
    scf.if %36 {
      %c0_27 = arith.constant 0 : index
      %c0_28 = arith.constant 0 : index
      %37 = vector.load %arg10[%c0_27, %c0_28] : memref<8x1024xf32, #tpu.memory_space<vmem>>, vector<8x1024xf32>
      %cst_29 = arith.constant dense<0xFF800000> : vector<1024xf32>
      %38 = vector.multi_reduction <maximumf>, %37, %cst_29 [0] : vector<8x1024xf32> to vector<1024xf32>
      %39 = vector.shape_cast %38 : vector<1024xf32> to vector<1x1024xf32>
      %c0_30 = arith.constant 0 : index
      %c0_31 = arith.constant 0 : index
      %c0_32 = arith.constant 0 : index
      %40 = vector.load %arg9[%c0_30, %c0_31, %c0_32] : memref<1x1x1024xf32, #tpu.memory_space<vmem>>, vector<1x1x1024xf32>
      %41 = vector.shape_cast %40 : vector<1x1x1024xf32> to vector<1x1024xf32>
      %42 = vector.shape_cast %39 : vector<1x1024xf32> to vector<1x1x1024xf32>
      tpu.vector_store %arg9[%c0_30, %c0_31, %c0_32], %42 {strides = array<i32>} : memref<1x1x1024xf32, #tpu.memory_space<vmem>>, vector<1x1x1024xf32>,
    } else {
    }
    return
  }
  func.func @transform_0(%arg0: i32, %arg1: i32) -> (i32, i32, i32) {
    %c0_i32 = arith.constant 0 : i32
    %c0_i32_0 = arith.constant 0 : i32
    return %arg0, %c0_i32, %arg1 : i32, i32, i32
  }
  func.func @transform_1(%arg0: i32, %arg1: i32) -> (i32, i32) {
    %c0_i32 = arith.constant 0 : i32
    %c0_i32_0 = arith.constant 0 : i32
    %c0_i32_1 = arith.constant 0 : i32
    return %c0_i32, %c0_i32_0 : i32, i32
  }
  func.func @transform_2(%arg0: i32, %arg1: i32) -> (i32, i32) {
    %c0_i32 = arith.constant 0 : i32
    %c0_i32_0 = arith.constant 0 : i32
    %c0_i32_1 = arith.constant 0 : i32
    return %c0_i32, %c0_i32_0 : i32, i32
  }
  func.func @transform_3(%arg0: i32, %arg1: i32) -> (i32, i32) {
    %c0_i32 = arith.constant 0 : i32
    %c0_i32_0 = arith.constant 0 : i32
    %c0_i32_1 = arith.constant 0 : i32
    return %c0_i32, %c0_i32_0 : i32, i32
  }
  func.func @transform_4(%arg0: i32, %arg1: i32) -> (i32, i32) {
    %c0_i32 = arith.constant 0 : i32
    %c0_i32_0 = arith.constant 0 : i32
    %c0_i32_1 = arith.constant 0 : i32
    return %c0_i32, %c0_i32_0 : i32, i32
  }
  func.func @transform_5(%arg0: i32, %arg1: i32) -> (i32, i32) {
    %c0_i32 = arith.constant 0 : i32
    %c0_i32_0 = arith.constant 0 : i32
    %c0_i32_1 = arith.constant 0 : i32
    return %c0_i32, %c0_i32_0 : i32, i32
  }
  func.func @transform_6(%arg0: i32, %arg1: i32) -> (i32, i32) {
    %c0_i32 = arith.constant 0 : i32
    %c0_i32_0 = arith.constant 0 : i32
    %c0_i32_1 = arith.constant 0 : i32
    return %c0_i32, %c0_i32_0 : i32, i32
  }
  func.func @transform_7(%arg0: i32, %arg1: i32) -> (i32, i32, i32) {
    %c0_i32 = arith.constant 0 : i32
    %c0_i32_0 = arith.constant 0 : i32
    %c0_i32_1 = arith.constant 0 : i32
    return %arg0, %c0_i32, %c0_i32_0 : i32, i32, i32
  }
}

module attributes {stable_mosaic.version = 11 : i64} {
  func.func @_head_kernel(%arg0: i32, %arg1: memref<2x1024xf32, #tpu.memory_space<vmem>>, %arg2: memref<1024x512xf32, #tpu.memory_space<vmem>>, %arg3: memref<1x512xf32, #tpu.memory_space<vmem>>, %arg4: memref<512x256xf32, #tpu.memory_space<vmem>>, %arg5: memref<1x256xf32, #tpu.memory_space<vmem>>, %arg6: memref<256x256xf32, #tpu.memory_space<vmem>>, %arg7: memref<1x256xf32, #tpu.memory_space<vmem>>, %arg8: memref<2x256xf32, #tpu.memory_space<vmem>>) attributes {dimension_semantics = [#tpu.dimension_semantics<arbitrary>], iteration_bounds = array<i64: 1>, scalar_prefetch = 0 : i64, scratch_operands = 0 : i64, tpu.core_type = #tpu.core_type<tc>, window_params = [{pipeline_mode = #tpu.pipeline_mode<synchronous>, transform_indices = @transform_0, window_bounds = array<i64: 2, 1024>}, {pipeline_mode = #tpu.pipeline_mode<synchronous>, transform_indices = @transform_1, window_bounds = array<i64: 1024, 512>}, {pipeline_mode = #tpu.pipeline_mode<synchronous>, transform_indices = @transform_2, window_bounds = array<i64: 1, 512>}, {pipeline_mode = #tpu.pipeline_mode<synchronous>, transform_indices = @transform_3, window_bounds = array<i64: 512, 256>}, {pipeline_mode = #tpu.pipeline_mode<synchronous>, transform_indices = @transform_4, window_bounds = array<i64: 1, 256>}, {pipeline_mode = #tpu.pipeline_mode<synchronous>, transform_indices = @transform_5, window_bounds = array<i64: 256, 256>}, {pipeline_mode = #tpu.pipeline_mode<synchronous>, transform_indices = @transform_6, window_bounds = array<i64: 1, 256>}, {pipeline_mode = #tpu.pipeline_mode<synchronous>, transform_indices = @transform_7, window_bounds = array<i64: 2, 256>}]} {
    %c0 = arith.constant 0 : index
    %c0_0 = arith.constant 0 : index
    %0 = vector.load %arg1[%c0, %c0_0] : memref<2x1024xf32, #tpu.memory_space<vmem>>, vector<2x1024xf32>
    %c0_1 = arith.constant 0 : index
    %c0_2 = arith.constant 0 : index
    %1 = vector.load %arg2[%c0_1, %c0_2] : memref<1024x512xf32, #tpu.memory_space<vmem>>, vector<1024x512xf32>
    %cst = arith.constant dense<0.000000e+00> : vector<2x512xf32>
    %2 = tpu.matmul %0, %1, %cst {dimension_numbers = #tpu.dot_dimension_numbers<[1], [0], [0], [1], [0, 0, 1, 1], [], []>} : vector<2x1024xf32>, vector<1024x512xf32>, vector<2x512xf32> -> vector<2x512xf32>
    %c0_3 = arith.constant 0 : index
    %c0_4 = arith.constant 0 : index
    %3 = vector.load %arg3[%c0_3, %c0_4] : memref<1x512xf32, #tpu.memory_space<vmem>>, vector<1x512xf32>
    %4 = vector.broadcast %3 : vector<1x512xf32> to vector<2x512xf32>
    %5 = arith.addf %2, %4 : vector<2x512xf32>
    %cst_5 = arith.constant 0.000000e+00 : f32
    %6 = vector.broadcast %cst_5 : f32 to vector<2x512xf32>
    %7 = arith.maximumf %5, %6 : vector<2x512xf32>
    %c0_6 = arith.constant 0 : index
    %c0_7 = arith.constant 0 : index
    %8 = vector.load %arg4[%c0_6, %c0_7] : memref<512x256xf32, #tpu.memory_space<vmem>>, vector<512x256xf32>
    %cst_8 = arith.constant dense<0.000000e+00> : vector<2x256xf32>
    %9 = tpu.matmul %7, %8, %cst_8 {dimension_numbers = #tpu.dot_dimension_numbers<[1], [0], [0], [1], [0, 0, 1, 1], [], []>} : vector<2x512xf32>, vector<512x256xf32>, vector<2x256xf32> -> vector<2x256xf32>
    %c0_9 = arith.constant 0 : index
    %c0_10 = arith.constant 0 : index
    %10 = vector.load %arg5[%c0_9, %c0_10] : memref<1x256xf32, #tpu.memory_space<vmem>>, vector<1x256xf32>
    %11 = vector.broadcast %10 : vector<1x256xf32> to vector<2x256xf32>
    %12 = arith.addf %9, %11 : vector<2x256xf32>
    %cst_11 = arith.constant 0.000000e+00 : f32
    %13 = vector.broadcast %cst_11 : f32 to vector<2x256xf32>
    %14 = arith.maximumf %12, %13 : vector<2x256xf32>
    %c0_12 = arith.constant 0 : index
    %c0_13 = arith.constant 0 : index
    %15 = vector.load %arg6[%c0_12, %c0_13] : memref<256x256xf32, #tpu.memory_space<vmem>>, vector<256x256xf32>
    %cst_14 = arith.constant dense<0.000000e+00> : vector<2x256xf32>
    %16 = tpu.matmul %14, %15, %cst_14 {dimension_numbers = #tpu.dot_dimension_numbers<[1], [0], [0], [1], [0, 0, 1, 1], [], []>} : vector<2x256xf32>, vector<256x256xf32>, vector<2x256xf32> -> vector<2x256xf32>
    %c0_15 = arith.constant 0 : index
    %c0_16 = arith.constant 0 : index
    %17 = vector.load %arg7[%c0_15, %c0_16] : memref<1x256xf32, #tpu.memory_space<vmem>>, vector<1x256xf32>
    %18 = vector.broadcast %17 : vector<1x256xf32> to vector<2x256xf32>
    %19 = arith.addf %16, %18 : vector<2x256xf32>
    %c0_17 = arith.constant 0 : index
    %c0_18 = arith.constant 0 : index
    %20 = vector.load %arg8[%c0_17, %c0_18] : memref<2x256xf32, #tpu.memory_space<vmem>>, vector<2x256xf32>
    tpu.vector_store %arg8[%c0_17, %c0_18], %19 {strides = array<i32>} : memref<2x256xf32, #tpu.memory_space<vmem>>, vector<2x256xf32>,
    return
  }
  func.func @transform_0(%arg0: i32) -> (i32, i32) {
    %c0_i32 = arith.constant 0 : i32
    %c0_i32_0 = arith.constant 0 : i32
    %c0_i32_1 = arith.constant 0 : i32
    return %c0_i32, %c0_i32_0 : i32, i32
  }
  func.func @transform_1(%arg0: i32) -> (i32, i32) {
    %c0_i32 = arith.constant 0 : i32
    %c0_i32_0 = arith.constant 0 : i32
    %c0_i32_1 = arith.constant 0 : i32
    return %c0_i32, %c0_i32_0 : i32, i32
  }
  func.func @transform_2(%arg0: i32) -> (i32, i32) {
    %c0_i32 = arith.constant 0 : i32
    %c0_i32_0 = arith.constant 0 : i32
    %c0_i32_1 = arith.constant 0 : i32
    return %c0_i32, %c0_i32_0 : i32, i32
  }
  func.func @transform_3(%arg0: i32) -> (i32, i32) {
    %c0_i32 = arith.constant 0 : i32
    %c0_i32_0 = arith.constant 0 : i32
    %c0_i32_1 = arith.constant 0 : i32
    return %c0_i32, %c0_i32_0 : i32, i32
  }
  func.func @transform_4(%arg0: i32) -> (i32, i32) {
    %c0_i32 = arith.constant 0 : i32
    %c0_i32_0 = arith.constant 0 : i32
    %c0_i32_1 = arith.constant 0 : i32
    return %c0_i32, %c0_i32_0 : i32, i32
  }
  func.func @transform_5(%arg0: i32) -> (i32, i32) {
    %c0_i32 = arith.constant 0 : i32
    %c0_i32_0 = arith.constant 0 : i32
    %c0_i32_1 = arith.constant 0 : i32
    return %c0_i32, %c0_i32_0 : i32, i32
  }
  func.func @transform_6(%arg0: i32) -> (i32, i32) {
    %c0_i32 = arith.constant 0 : i32
    %c0_i32_0 = arith.constant 0 : i32
    %c0_i32_1 = arith.constant 0 : i32
    return %c0_i32, %c0_i32_0 : i32, i32
  }
  func.func @transform_7(%arg0: i32) -> (i32, i32) {
    %c0_i32 = arith.constant 0 : i32
    %c0_i32_0 = arith.constant 0 : i32
    %c0_i32_1 = arith.constant 0 : i32
    return %c0_i32, %c0_i32_0 : i32, i32
  }
}

</mosaic_0001>

<llo_original>
// kernel: stnkd_forward.2
$region0: #{stnkd_forward.2}
  #allocation0 [shape = 'u32[]', space=smem, size = 0x4, offset = 0x4, fixed_abs, tag = 'smem constant byte address 0x4 - core index']
  #allocation1 [shape = 'u32[144,128]{1,0:T(1,128)}', space=vmem, size = 0x12000, scoped, tag = 'internal scratch']
  #allocation2 [shape = 'f32[8,1024]{1,0:T(8,128)}', space=vmem, size = 0x8000, scoped, tag = 'scratch operand']
  %s0 = inlined_call_operand.hbm [shape: f32[2,16,320], index: 0, kind: input, shape index: {}]
  %s1 = inlined_call_operand.vmem [shape: bf16[16,64], index: 1, kind: input, shape index: {}]
  %s2 = inlined_call_operand.vmem [shape: f32[1,64], index: 2, kind: input, shape index: {}]
  %s3 = inlined_call_operand.vmem [shape: bf16[64,128], index: 3, kind: input, shape index: {}]
  %s4 = inlined_call_operand.vmem [shape: f32[1,128], index: 4, kind: input, shape index: {}]
  %s5 = inlined_call_operand.vmem [shape: bf16[128,1024], index: 5, kind: input, shape index: {}]
  %s6 = inlined_call_operand.vmem [shape: f32[1,1024], index: 6, kind: input, shape index: {}]
  %s7 = inlined_call_operand.vmem [shape: f32[2,1,1024], index: 7, kind: output, shape index: {}]
  %s8 = sld [smem:[#allocation0]]
  $region73: #{stnkd_forward.2} parent=0
    _
  %s10 = ssub.s32 1, %s8
  %s11 = scalar_select 0, %s10, %s8
  $region1: #{stnkd_forward.2} parent=0
    #allocation3 [shape = 'u8[49152]{0}', space=vmem, size = 0xc000, scoped, tag = 'input window, operand 0']
    #allocation4 [shape = 's32[2]{0}', space=sflag, size = 0x8, scoped, tag = 'scoped memory for stnkd_forward.2']
    %12 = vsyncpa [#allocation4], 0
    %s13 = scalar_lea.sflag [#allocation4], 1
    %14 = vsyncpa %s13, 0
    loop: start=0, step=1, limit=4
    $region2: #{stnkd_forward.2} parent=1 // loop_pre_header
      _
    $region3: #{stnkd_forward.2} parent=1 // loop_header
      %s16 = sphi 0, %s20
      %p17 = scmp.ge.s32.totalorder %s16, 4
      %s23 = sphi 0, %s35
      %s24 = sphi 0, %s31
      %s25 = sphi 0, %s23
      %s26 = sphi 0, %s24
      %s27 = sphi 0, %s25
      %s28 = sphi 0, %s26
      %s40 = sphi 0, %s42
      %s43 = sphi 0, %s40
      %s44 = sphi 0, %s43
      %s60 = sphi 0, %s44
      %s64 = sphi 0, %s64
      %s66 = sphi 0, %s64
      %s67 = sphi 0, %s66
      %s81 = sphi 0, %s67
      %s85 = sphi 0, %s85
      %s87 = sphi 0, %s85
      %s88 = sphi 0, %s87
      %s102 = sphi 0, %s88
      %s106 = sphi 0, %s106
      %s108 = sphi 0, %s106
      %s109 = sphi 0, %s108
      %s123 = sphi 0, %s109
      %s127 = sphi 0, %s127
      %s129 = sphi 0, %s127
      %s130 = sphi 0, %s129
      %s144 = sphi 0, %s130
      %s148 = sphi 0, %s148
      %s150 = sphi 0, %s148
      %s151 = sphi 0, %s150
      %s165 = sphi 0, %s151
      %s169 = sphi 0, %s169
      %s171 = sphi 0, %s169
      %s172 = sphi 0, %s171
      %s186 = sphi 0, %s172
      %s192 = sphi 0, %s194
      %s195 = sphi 0, %s192
      %s196 = sphi 0, %s195
      %s212 = sphi 0, %s196
    $region4: #{stnkd_forward.2} parent=1 // loop_header_branch
      %19 = sbr.rel (%p17) target = $region8
    $region5: #{stnkd_forward.2} parent=1 // loop_body
      %s21 = ssub.s32 %s16, 1
      %s22 = ssub.s32 %s16, 2
      %s29 = sadd.s32 1, %s24
      %p30 = scmp.ge.s32.totalorder %s29, 1
      %s31 = scalar_select %p30, 0, %s29
      %s32 = sadd.s32 1, %s23
      %s33 = scalar_select %p30, %s32, %s23
      %p34 = scmp.ge.s32.totalorder %s33, 2
      %s35 = scalar_select %p34, 0, %s33
      %s36 = ssub.s32 %s23, %s35
      %s37 = ssub.s32 %s24, %s31
      %s38 = sor.u32 %s36, %s37
      %p39 = scmp.eq.s32.totalorder %s38, 0
      %s41 = sadd.s32 %s40, 1
      %s42 = scalar_select %p39, %s40, %s41
      %p45 = pneg %p39
      %p46 = scmp.eq.s32.totalorder %s16, 1
      %p47 = por %p45, %p46
      %p48 = scmp.ne.s32.totalorder %s40, %s43
      %p49 = scmp.eq.s32.totalorder %s16, 0
      %p50 = por %p48, %p49
      %p51 = scmp.ne.s32.totalorder %s40, %s43
      %p52 = scmp.eq.s32.totalorder %s21, 1
      %p53 = por %p51, %p52
      %p54 = scmp.ne.s32.totalorder %s43, %s44
      %p55 = scmp.eq.s32.totalorder %s21, 0
      %p56 = por %p54, %p55
      %p57 = scmp.ne.s32.totalorder %s43, %s44
      %p58 = scmp.eq.s32.totalorder %s22, 1
      %p59 = por %p57, %p58
      %p61 = scmp.ne.s32.totalorder %s44, %s60
      %p62 = scmp.eq.s32.totalorder %s22, 0
      %p63 = por %p61, %p62
      %s65 = sadd.s32 %s64, 1
      %p68 = scmp.eq.s32.totalorder %s16, 1
      %p69 = scmp.ne.s32.totalorder %s64, %s66
      %p70 = scmp.eq.s32.totalorder %s16, 0
      %p71 = por %p69, %p70
      %p72 = scmp.ne.s32.totalorder %s64, %s66
      %p73 = scmp.eq.s32.totalorder %s21, 1
      %p74 = por %p72, %p73
      %p75 = scmp.ne.s32.totalorder %s66, %s67
      %p76 = scmp.eq.s32.totalorder %s21, 0
      %p77 = por %p75, %p76
      %p78 = scmp.ne.s32.totalorder %s66, %s67
      %p79 = scmp.eq.s32.totalorder %s22, 1
      %p80 = por %p78, %p79
      %p82 = scmp.ne.s32.totalorder %s67, %s81
      %p83 = scmp.eq.s32.totalorder %s22, 0
      %p84 = por %p82, %p83
      %s86 = sadd.s32 %s85, 1
      %p89 = scmp.eq.s32.totalorder %s16, 1
      %p90 = scmp.ne.s32.totalorder %s85, %s87
      %p91 = scmp.eq.s32.totalorder %s16, 0
      %p92 = por %p90, %p91
      %p93 = scmp.ne.s32.totalorder %s85, %s87
      %p94 = scmp.eq.s32.totalorder %s21, 1
      %p95 = por %p93, %p94
      %p96 = scmp.ne.s32.totalorder %s87, %s88
      %p97 = scmp.eq.s32.totalorder %s21, 0
      %p98 = por %p96, %p97
      %p99 = scmp.ne.s32.totalorder %s87, %s88
      %p100 = scmp.eq.s32.totalorder %s22, 1
      %p101 = por %p99, %p100
      %p103 = scmp.ne.s32.totalorder %s88, %s102
      %p104 = scmp.eq.s32.totalorder %s22, 0
      %p105 = por %p103, %p104
      %s107 = sadd.s32 %s106, 1
      %p110 = scmp.eq.s32.totalorder %s16, 1
      %p111 = scmp.ne.s32.totalorder %s106, %s108
      %p112 = scmp.eq.s32.totalorder %s16, 0
      %p113 = por %p111, %p112
      %p114 = scmp.ne.s32.totalorder %s106, %s108
      %p115 = scmp.eq.s32.totalorder %s21, 1
      %p116 = por %p114, %p115
      %p117 = scmp.ne.s32.totalorder %s108, %s109
      %p118 = scmp.eq.s32.totalorder %s21, 0
      %p119 = por %p117, %p118
      %p120 = scmp.ne.s32.totalorder %s108, %s109
      %p121 = scmp.eq.s32.totalorder %s22, 1
      %p122 = por %p120, %p121
      %p124 = scmp.ne.s32.totalorder %s109, %s123
      %p125 = scmp.eq.s32.totalorder %s22, 0
      %p126 = por %p124, %p125
      %s128 = sadd.s32 %s127, 1
      %p131 = scmp.eq.s32.totalorder %s16, 1
      %p132 = scmp.ne.s32.totalorder %s127, %s129
      %p133 = scmp.eq.s32.totalorder %s16, 0
      %p134 = por %p132, %p133
      %p135 = scmp.ne.s32.totalorder %s127, %s129
      %p136 = scmp.eq.s32.totalorder %s21, 1
      %p137 = por %p135, %p136
      %p138 = scmp.ne.s32.totalorder %s129, %s130
      %p139 = scmp.eq.s32.totalorder %s21, 0
      %p140 = por %p138, %p139
      %p141 = scmp.ne.s32.totalorder %s129, %s130
      %p142 = scmp.eq.s32.totalorder %s22, 1
      %p143 = por %p141, %p142
      %p145 = scmp.ne.s32.totalorder %s130, %s144
      %p146 = scmp.eq.s32.totalorder %s22, 0
      %p147 = por %p145, %p146
      %s149 = sadd.s32 %s148, 1
      %p152 = scmp.eq.s32.totalorder %s16, 1
      %p153 = scmp.ne.s32.totalorder %s148, %s150
      %p154 = scmp.eq.s32.totalorder %s16, 0
      %p155 = por %p153, %p154
      %p156 = scmp.ne.s32.totalorder %s148, %s150
      %p157 = scmp.eq.s32.totalorder %s21, 1
      %p158 = por %p156, %p157
      %p159 = scmp.ne.s32.totalorder %s150, %s151
      %p160 = scmp.eq.s32.totalorder %s21, 0
      %p161 = por %p159, %p160
      %p162 = scmp.ne.s32.totalorder %s150, %s151
      %p163 = scmp.eq.s32.totalorder %s22, 1
      %p164 = por %p162, %p163
      %p166 = scmp.ne.s32.totalorder %s151, %s165
      %p167 = scmp.eq.s32.totalorder %s22, 0
      %p168 = por %p166, %p167
      %s170 = sadd.s32 %s169, 1
      %p173 = scmp.eq.s32.totalorder %s16, 1
      %p174 = scmp.ne.s32.totalorder %s169, %s171
      %p175 = scmp.eq.s32.totalorder %s16, 0
      %p176 = por %p174, %p175
      %p177 = scmp.ne.s32.totalorder %s169, %s171
      %p178 = scmp.eq.s32.totalorder %s21, 1
      %p179 = por %p177, %p178
      %p180 = scmp.ne.s32.totalorder %s171, %s172
      %p181 = scmp.eq.s32.totalorder %s21, 0
      %p182 = por %p180, %p181
      %p183 = scmp.ne.s32.totalorder %s171, %s172
      %p184 = scmp.eq.s32.totalorder %s22, 1
      %p185 = por %p183, %p184
      %p187 = scmp.ne.s32.totalorder %s172, %s186
      %p188 = scmp.eq.s32.totalorder %s22, 0
      %p189 = por %p187, %p188
      %s190 = ssub.s32 %s23, %s35
      %p191 = scmp.eq.s32.totalorder %s190, 0
      %s193 = sadd.s32 %s192, 1
      %s194 = scalar_select %p191, %s192, %s193
      %p197 = pneg %p191
      %p198 = scmp.eq.s32.totalorder %s16, 1
      %p199 = por %p197, %p198
      %p200 = scmp.ne.s32.totalorder %s192, %s195
      %p201 = scmp.eq.s32.totalorder %s16, 0
      %p202 = por %p200, %p201
      %p203 = scmp.ne.s32.totalorder %s192, %s195
      %p204 = scmp.eq.s32.totalorder %s21, 1
      %p205 = por %p203, %p204
      %p206 = scmp.ne.s32.totalorder %s195, %s196
      %p207 = scmp.eq.s32.totalorder %s21, 0
      %p208 = por %p206, %p207
      %p209 = scmp.ne.s32.totalorder %s195, %s196
      %p210 = scmp.eq.s32.totalorder %s22, 1
      %p211 = por %p209, %p210
      %p213 = scmp.ne.s32.totalorder %s196, %s212
      %p214 = scmp.eq.s32.totalorder %s22, 0
      %p215 = por %p213, %p214
      %p216 = scmp.le.s32.totalorder 1, %s16
      %p217 = scmp.lt.s32.totalorder %s16, 3
      %p218 = pnand %p216, %p217
      %p219 = pneg %p218
      // Predicated region
      $region9: #{stnkd_forward.2} parent=5 // pred_check
        _
      $region10: #{stnkd_forward.2} parent=5 // pred_check_branch
        %221 = sbr.rel (%p218) target = $region12
      $region11: #{stnkd_forward.2} parent=5 // pred_region
        %s222 = ssub.s32 %s16, 1
        // Predicated region
        $region13: #{stnkd_forward.2} parent=11 // pred_check
          %p223 = pneg %p77
        $region14: #{stnkd_forward.2} parent=11 // pred_check_branch
          %225 = sbr.rel (%p223) target = $region16
        $region15: #{stnkd_forward.2} parent=11 // pred_region
          _
        $region16: #{stnkd_forward.2} parent=11 // pred_fallthru
          _
        // Predicated region
        $region17: #{stnkd_forward.2} parent=11 // pred_check
          %p226 = pneg %p98
        $region18: #{stnkd_forward.2} parent=11 // pred_check_branch
          %228 = sbr.rel (%p226) target = $region20
        $region19: #{stnkd_forward.2} parent=11 // pred_region
          _
        $region20: #{stnkd_forward.2} parent=11 // pred_fallthru
          _
        // Predicated region
        $region21: #{stnkd_forward.2} parent=11 // pred_check
          %p229 = pneg %p119
        $region22: #{stnkd_forward.2} parent=11 // pred_check_branch
          %231 = sbr.rel (%p229) target = $region24
        $region23: #{stnkd_forward.2} parent=11 // pred_region
          _
        $region24: #{stnkd_forward.2} parent=11 // pred_fallthru
          _
        // Predicated region
        $region25: #{stnkd_forward.2} parent=11 // pred_check
          %p232 = pneg %p140
        $region26: #{stnkd_forward.2} parent=11 // pred_check_branch
          %234 = sbr.rel (%p232) target = $region28
        $region27: #{stnkd_forward.2} parent=11 // pred_region
          _
        $region28: #{stnkd_forward.2} parent=11 // pred_fallthru
          _
        // Predicated region
        $region29: #{stnkd_forward.2} parent=11 // pred_check
          %p235 = pneg %p161
        $region30: #{stnkd_forward.2} parent=11 // pred_check_branch
          %237 = sbr.rel (%p235) target = $region32
        $region31: #{stnkd_forward.2} parent=11 // pred_region
          _
        $region32: #{stnkd_forward.2} parent=11 // pred_fallthru
          _
        // Predicated region
        $region33: #{stnkd_forward.2} parent=11 // pred_check
          %p238 = pneg %p182
        $region34: #{stnkd_forward.2} parent=11 // pred_check_branch
          %240 = sbr.rel (%p238) target = $region36
        $region35: #{stnkd_forward.2} parent=11 // pred_region
          _
        $region36: #{stnkd_forward.2} parent=11 // pred_fallthru
          _
      $region12: #{stnkd_forward.2} parent=5 // pred_fallthru
        _
      %p241 = scmp.lt.s32.totalorder %s16, 2
      // Predicated region
      $region37: #{stnkd_forward.2} parent=5 // pred_check
        %p242 = pneg %p241
      $region38: #{stnkd_forward.2} parent=5 // pred_check_branch
        %244 = sbr.rel (%p242) target = $region40
      $region39: #{stnkd_forward.2} parent=5 // pred_region
        // Predicated region
        $region41: #{stnkd_forward.2} parent=39 // pred_check
          %p245 = pneg %p50
        $region42: #{stnkd_forward.2} parent=39 // pred_check_branch
          %247 = sbr.rel (%p245) target = $region44
        $region43: #{stnkd_forward.2} parent=39 // pred_region
          %s248 = sand.u32 %s40, 1
          %s249 = scalar_lea.sflag [#allocation4], %s248
          %s250 = sand.u32 %s40, 1
          %s251 = smul.addr %s250, 48
          %s252 = scalar_lea.vmem [#allocation3], %s251
          %s253 = smul.u32 3, %s24
          %s255 = ssub.s32 768, 768
          %256 = vsyncadd %s249, %s255
          %s257 = smul.addr %s23, 6
          %s258 = sadd.s32 %s253, %s257
          %s259 = smul.addr %s258, 128
          %s260 = scalar_lea.hbm %s0, %s259
          %s261 = sshll.u32 %s252, 4
          %s262 = int_to_ptr.vmem [resolvable:$true] %s261
          %267 = dma.hbm_to_vmem [thread:$0]  %s260, 768, %s262, %s249, 384, 384, 24
        $region44: #{stnkd_forward.2} parent=39 // pred_fallthru
          _
      $region40: #{stnkd_forward.2} parent=5 // pred_fallthru
        _
      %p268 = scmp.le.s32.totalorder 1, %s16
      %p269 = scmp.lt.s32.totalorder %s16, 3
      %p270 = pnand %p268, %p269
      %p271 = pneg %p270
      // Predicated region
      $region45: #{stnkd_forward.2} parent=5 // pred_check
        _
      $region46: #{stnkd_forward.2} parent=5 // pred_check_branch
        %273 = sbr.rel (%p270) target = $region48
      $region47: #{stnkd_forward.2} parent=5 // pred_region
        %s274 = ssub.s32 %s16, 1
        %s275 = sand.u32 %s43, 1
        %s276 = scalar_lea.sflag [#allocation4], %s275
        %s277 = sand.u32 %s43, 1
        %s278 = smul.addr %s277, 48
        %s279 = scalar_lea.vmem [#allocation3], %s278
        // Predicated region
        $region49: #{stnkd_forward.2} parent=47 // pred_check
          %p280 = pneg %p56
        $region50: #{stnkd_forward.2} parent=47 // pred_check_branch
          %282 = sbr.rel (%p280) target = $region52
        $region51: #{stnkd_forward.2} parent=47 // pred_region
          %283 = dma.done %s276, 768
        $region52: #{stnkd_forward.2} parent=47 // pred_fallthru
          _
        %s284 = sand.u32 %s43, 1
        %s285 = scalar_lea.sflag [#allocation4], %s284
        %s286 = sand.u32 %s43, 1
        %s287 = smul.addr %s286, 48
        %s288 = scalar_lea.vmem [#allocation3], %s287
        %p289 = pneg %p56
        %p290 = pneg %p53
        %p291 = pneg %p77
        %p292 = pneg %p74
        %p293 = pneg %p98
        %p294 = pneg %p95
        %p295 = pneg %p119
        %p296 = pneg %p116
        %p297 = pneg %p140
        %p298 = pneg %p137
        %p299 = pneg %p161
        %p300 = pneg %p158
        %p301 = pneg %p182
        %p302 = pneg %p179
        %p303 = pneg %p208
        %p304 = pneg %p205
        %p305 = scmp.lt.s32.totalorder %s25, 1
        %s306 = scalar_select %p305, %s25, 1
        %s307 = smul.addr %s306, 8
        %s308 = scalar_lea.vmem %s7, %s307
        %s309 = smul.u32 3, %s26
        %p310 = scmp.lt.s32.totalorder %s25, 1
        %s311 = scalar_select %p310, %s25, 1
        %s312 = smul.addr %s311, 8
        %s313 = scalar_lea.vmem %s7, %s312
        %p315 = scmp.eq.s32.totalorder %s26, 0
        // Predicated region
        $region53: #{stnkd_forward.2} parent=47 // pred_check
          %p316 = pneg %p315
        $region54: #{stnkd_forward.2} parent=47 // pred_check_branch
          %318 = sbr.rel (%p316) target = $region56
        $region55: #{stnkd_forward.2} parent=47 // pred_region
          %319 = vst [vmem:[#allocation2] sm:$0xff] -inf
          %320 = vst [vmem:[#allocation2 + $0x8] sm:$0xff] -inf
          %321 = vst [vmem:[#allocation2 + $0x10] sm:$0xff] -inf
          %322 = vst [vmem:[#allocation2 + $0x18] sm:$0xff] -inf
          %323 = vst [vmem:[#allocation2 + $0x20] sm:$0xff] -inf
          %324 = vst [vmem:[#allocation2 + $0x28] sm:$0xff] -inf
          %325 = vst [vmem:[#allocation2 + $0x30] sm:$0xff] -inf
          %326 = vst [vmem:[#allocation2 + $0x38] sm:$0xff] -inf
        $region56: #{stnkd_forward.2} parent=47 // pred_fallthru
          _
        %v327 = vld [vmem:[%s279] sm:$0xff]
        %v328 = vld [vmem:[%s279 + $0x8] sm:$0xff]
        %v329 = vld [vmem:[%s279 + $0x10] sm:$0xff]
        %v330 = vld [vmem:[%s279 + $0x18] sm:$0xff]
        %v331 = vld [vmem:[%s279 + $0x20] sm:$0xff]
        %v332 = vld [vmem:[%s279 + $0x28] sm:$0xff]
        %v333 = vpack.c.bf16 %v330, %v327
        %v334 = vpack.c.bf16 %v331, %v328
        %v335 = vpack.c.bf16 %v332, %v329
        %v336 = vld [vmem:[%s1] sm:$0xf]
        %v337 = vld [vmem:[%s1 + $0x4] sm:$0xf]
        %v338 = vld [vmem:[%s2] sm:$0x1]
        %v340 = vlaneseq
        %v341 = vshrl.u32 %v340, 7
        %v342 = vsub.s32 0, %v341
        %v343 = vrot.slane %v338, %v342
        %345 = vxpose.xlu0.c.b16.start [1/8] %v333, 128
        %346 = vxpose.xlu0.c.b16.cont [2/8] 0, 128
        %347 = vxpose.xlu0.c.b16.cont [3/8] 0, 128
        %348 = vxpose.xlu0.c.b16.cont [4/8] 0, 128
        %349 = vxpose.xlu0.c.b16.cont [5/8] 0, 128
        %350 = vxpose.xlu0.c.b16.cont [6/8] 0, 128
        %351 = vxpose.xlu0.c.b16.cont [7/8] 0, 128
        %352 = vxpose.xlu0.c.b16.end [8/8] 0, 128
        %v353 = vpop.trf.xlu0
        %v354 = vpop.trf.xlu0
        %v355 = vpop.trf.xlu0
        %v356 = vpop.trf.xlu0
        %v357 = vpop.trf.xlu0
        %v358 = vpop.trf.xlu0
        %v359 = vpop.trf.xlu0
        %v360 = vpop.trf.xlu0
        %361 = vxpose.xlu0.c.b16.start [1/8] %v334, 128
        %362 = vxpose.xlu0.c.b16.cont [2/8] 0, 128
        %363 = vxpose.xlu0.c.b16.cont [3/8] 0, 128
        %364 = vxpose.xlu0.c.b16.cont [4/8] 0, 128
        %365 = vxpose.xlu0.c.b16.cont [5/8] 0, 128
        %366 = vxpose.xlu0.c.b16.cont [6/8] 0, 128
        %367 = vxpose.xlu0.c.b16.cont [7/8] 0, 128
        %368 = vxpose.xlu0.c.b16.end [8/8] 0, 128
        %v369 = vpop.trf.xlu0
        %v370 = vpop.trf.xlu0
        %v371 = vpop.trf.xlu0
        %v372 = vpop.trf.xlu0
        %v373 = vpop.trf.xlu0
        %v374 = vpop.trf.xlu0
        %v375 = vpop.trf.xlu0
        %v376 = vpop.trf.xlu0
        %377 = vxpose.xlu0.c.b16.start [1/8] %v335, 128
        %378 = vxpose.xlu0.c.b16.cont [2/8] 0, 128
        %379 = vxpose.xlu0.c.b16.cont [3/8] 0, 128
        %380 = vxpose.xlu0.c.b16.cont [4/8] 0, 128
        %381 = vxpose.xlu0.c.b16.cont [5/8] 0, 128
        %382 = vxpose.xlu0.c.b16.cont [6/8] 0, 128
        %383 = vxpose.xlu0.c.b16.cont [7/8] 0, 128
        %384 = vxpose.xlu0.c.b16.end [8/8] 0, 128
        %v385 = vpop.trf.xlu0
        %v386 = vpop.trf.xlu0
        %v387 = vpop.trf.xlu0
        %v388 = vpop.trf.xlu0
        %v389 = vpop.trf.xlu0
        %v390 = vpop.trf.xlu0
        %v391 = vpop.trf.xlu0
        %v392 = vpop.trf.xlu0
        %v395 = vunpack.c.l.b16 %v336
        %v396 = vunpack.c.l.b16 %v337
        %v397 = vpack.c.b16 %v396, %v395
        %vm399 = vcmask 130048
        %v401 = vsel %vm399, %v353, 0
        %v404 = vsel %vm399, %v354, 0
        %v407 = vsel %vm399, %v355, 0
        %v410 = vsel %vm399, %v356, 0
        %v413 = vsel %vm399, %v357, 0
        %v416 = vsel %vm399, %v358, 0
        %v419 = vsel %vm399, %v359, 0
        %v422 = vsel %vm399, %v360, 0
        %v425 = vsel %vm399, %v369, 0
        %v428 = vsel %vm399, %v370, 0
        %v431 = vsel %vm399, %v371, 0
        %v434 = vsel %vm399, %v372, 0
        %v437 = vsel %vm399, %v373, 0
        %v440 = vsel %vm399, %v374, 0
        %v443 = vsel %vm399, %v375, 0
        %v446 = vsel %vm399, %v376, 0
        %v449 = vsel %vm399, %v385, 0
        %v452 = vsel %vm399, %v386, 0
        %v455 = vsel %vm399, %v387, 0
        %v458 = vsel %vm399, %v388, 0
        %460 = vmatprep.subr.bf16.mxu0 0
        %461 = vmatpush1.bf16.msra.mxu0 0
        %462 = vmatprep.subr.bf16.mxu0 0
        %463 = vmatpush1.bf16.msra.mxu0 0
        %464 = vmatprep.subr.bf16.mxu0 0
        %465 = vmatpush1.bf16.msra.mxu0 0
        %466 = vmatprep.subr.bf16.mxu0 0
        %467 = vmatpush1.bf16.msra.mxu0 0
        %468 = vmatprep.subr.bf16.mxu0 0
        %469 = vmatpush1.bf16.msra.mxu0 0
        %470 = vmatprep.subr.bf16.mxu0 0
        %471 = vmatpush1.bf16.msra.mxu0 0
        %472 = vmatprep.subr.bf16.mxu0 0
        %473 = vmatpush1.bf16.msra.mxu0 0
        %474 = vmatprep.subr.bf16.mxu0 0
        %475 = vmatpush1.bf16.msra.mxu0 %v397
        %476 = vmatprep.subr.bf16.mxu0 0
        %477 = vmatpush2.bf16.msra.mxu0 0
        %478 = vmatprep.subr.bf16.mxu0 0
        %479 = vmatpush2.bf16.msra.mxu0 0
        %480 = vmatprep.subr.bf16.mxu0 0
        %481 = vmatpush2.bf16.msra.mxu0 0
        %482 = vmatprep.subr.bf16.mxu0 0
        %483 = vmatpush2.bf16.msra.mxu0 0
        %484 = vmatprep.subr.bf16.mxu0 0
        %485 = vmatpush2.bf16.msra.mxu0 0
        %486 = vmatprep.subr.bf16.mxu0 0
        %487 = vmatpush2.bf16.msra.mxu0 0
        %488 = vmatprep.subr.bf16.mxu0 0
        %489 = vmatpush2.bf16.msra.mxu0 0
        %490 = vmatprep.subr.bf16.mxu0 0
        %491 = vmatpush2.bf16.msra.mxu0 0
        %492 = vmatprep.mubr.bf16.mxu0 0
        %493 = vmatmul.mubr.bf16.gmra.mxu0 %v401
        %v494 = vpop.f32.mrf.mxu0
        %v495 = vadd.f32 %v343, %v494
        %v496 = vpop.f32.mrf.mxu0
        %v497 = vpop.f32.mrf.mxu0
        %v498 = vadd.f32 %v343, %v497
        %v499 = vpop.f32.mrf.mxu0
        %500 = vmatprep.mubr.bf16.mxu0 0
        %501 = vmatmul.mubr.bf16.gmra.mxu0 %v404
        %v502 = vpop.f32.mrf.mxu0
        %v503 = vadd.f32 %v343, %v502
        %v504 = vpop.f32.mrf.mxu0
        %v505 = vpop.f32.mrf.mxu0
        %v506 = vadd.f32 %v343, %v505
        %v507 = vpop.f32.mrf.mxu0
        %508 = vmatprep.mubr.bf16.mxu0 0
        %509 = vmatmul.mubr.bf16.gmra.mxu0 %v407
        %v510 = vpop.f32.mrf.mxu0
        %v511 = vadd.f32 %v343, %v510
        %v512 = vpop.f32.mrf.mxu0
        %v513 = vpop.f32.mrf.mxu0
        %v514 = vadd.f32 %v343, %v513
        %v515 = vpop.f32.mrf.mxu0
        %516 = vmatprep.mubr.bf16.mxu0 0
        %517 = vmatmul.mubr.bf16.gmra.mxu0 %v410
        %v518 = vpop.f32.mrf.mxu0
        %v519 = vadd.f32 %v343, %v518
        %v520 = vpop.f32.mrf.mxu0
        %v521 = vpop.f32.mrf.mxu0
        %v522 = vadd.f32 %v343, %v521
        %v523 = vpop.f32.mrf.mxu0
        %524 = vmatprep.mubr.bf16.mxu0 0
        %525 = vmatmul.mubr.bf16.gmra.mxu0 %v413
        %v526 = vpop.f32.mrf.mxu0
        %v527 = vadd.f32 %v343, %v526
        %v528 = vpop.f32.mrf.mxu0
        %v529 = vpop.f32.mrf.mxu0
        %v530 = vadd.f32 %v343, %v529
        %v531 = vpop.f32.mrf.mxu0
        %532 = vmatprep.mubr.bf16.mxu0 0
        %533 = vmatmul.mubr.bf16.gmra.mxu0 %v416
        %v534 = vpop.f32.mrf.mxu0
        %v535 = vadd.f32 %v343, %v534
        %v536 = vpop.f32.mrf.mxu0
        %v537 = vpop.f32.mrf.mxu0
        %v538 = vadd.f32 %v343, %v537
        %v539 = vpop.f32.mrf.mxu0
        %540 = vmatprep.mubr.bf16.mxu0 0
        %541 = vmatmul.mubr.bf16.gmra.mxu0 %v419
        %v542 = vpop.f32.mrf.mxu0
        %v543 = vadd.f32 %v343, %v542
        %v544 = vpop.f32.mrf.mxu0
        %v545 = vpop.f32.mrf.mxu0
        %v546 = vadd.f32 %v343, %v545
        %v547 = vpop.f32.mrf.mxu0
        %548 = vmatprep.mubr.bf16.mxu0 0
        %549 = vmatmul.mubr.bf16.gmra.mxu0 %v422
        %v550 = vpop.f32.mrf.mxu0
        %v551 = vadd.f32 %v343, %v550
        %v552 = vpop.f32.mrf.mxu0
        %v553 = vpop.f32.mrf.mxu0
        %v554 = vadd.f32 %v343, %v553
        %v555 = vpop.f32.mrf.mxu0
        %556 = vmatprep.mubr.bf16.mxu0 0
        %557 = vmatmul.mubr.bf16.gmra.mxu0 %v425
        %v558 = vpop.f32.mrf.mxu0
        %v559 = vadd.f32 %v343, %v558
        %v560 = vpop.f32.mrf.mxu0
        %v561 = vpop.f32.mrf.mxu0
        %v562 = vadd.f32 %v343, %v561
        %v563 = vpop.f32.mrf.mxu0
        %564 = vmatprep.mubr.bf16.mxu0 0
        %565 = vmatmul.mubr.bf16.gmra.mxu0 %v428
        %v566 = vpop.f32.mrf.mxu0
        %v567 = vadd.f32 %v343, %v566
        %v568 = vpop.f32.mrf.mxu0
        %v569 = vpop.f32.mrf.mxu0
        %v570 = vadd.f32 %v343, %v569
        %v571 = vpop.f32.mrf.mxu0
        %572 = vmatprep.mubr.bf16.mxu0 0
        %573 = vmatmul.mubr.bf16.gmra.mxu0 %v431
        %v574 = vpop.f32.mrf.mxu0
        %v575 = vadd.f32 %v343, %v574
        %v576 = vpop.f32.mrf.mxu0
        %v577 = vpop.f32.mrf.mxu0
        %v578 = vadd.f32 %v343, %v577
        %v579 = vpop.f32.mrf.mxu0
        %580 = vmatprep.mubr.bf16.mxu0 0
        %581 = vmatmul.mubr.bf16.gmra.mxu0 %v434
        %v582 = vpop.f32.mrf.mxu0
        %v583 = vadd.f32 %v343, %v582
        %v584 = vpop.f32.mrf.mxu0
        %v585 = vpop.f32.mrf.mxu0
        %v586 = vadd.f32 %v343, %v585
        %v587 = vpop.f32.mrf.mxu0
        %588 = vmatprep.mubr.bf16.mxu0 0
        %589 = vmatmul.mubr.bf16.gmra.mxu0 %v437
        %v590 = vpop.f32.mrf.mxu0
        %v591 = vadd.f32 %v343, %v590
        %v592 = vpop.f32.mrf.mxu0
        %v593 = vpop.f32.mrf.mxu0
        %v594 = vadd.f32 %v343, %v593
        %v595 = vpop.f32.mrf.mxu0
        %596 = vmatprep.mubr.bf16.mxu0 0
        %597 = vmatmul.mubr.bf16.gmra.mxu0 %v440
        %v598 = vpop.f32.mrf.mxu0
        %v599 = vadd.f32 %v343, %v598
        %v600 = vpop.f32.mrf.mxu0
        %v601 = vpop.f32.mrf.mxu0
        %v602 = vadd.f32 %v343, %v601
        %v603 = vpop.f32.mrf.mxu0
        %604 = vmatprep.mubr.bf16.mxu0 0
        %605 = vmatmul.mubr.bf16.gmra.mxu0 %v443
        %v606 = vpop.f32.mrf.mxu0
        %v607 = vadd.f32 %v343, %v606
        %v608 = vpop.f32.mrf.mxu0
        %v609 = vpop.f32.mrf.mxu0
        %v610 = vadd.f32 %v343, %v609
        %v611 = vpop.f32.mrf.mxu0
        %612 = vmatprep.mubr.bf16.mxu0 0
        %613 = vmatmul.mubr.bf16.gmra.mxu0 %v446
        %v614 = vpop.f32.mrf.mxu0
        %v615 = vadd.f32 %v343, %v614
        %v616 = vpop.f32.mrf.mxu0
        %v617 = vpop.f32.mrf.mxu0
        %v618 = vadd.f32 %v343, %v617
        %v619 = vpop.f32.mrf.mxu0
        %620 = vmatprep.mubr.bf16.mxu0 0
        %621 = vmatmul.mubr.bf16.gmra.mxu0 %v449
        %v622 = vpop.f32.mrf.mxu0
        %v623 = vadd.f32 %v343, %v622
        %v624 = vpop.f32.mrf.mxu0
        %v625 = vpop.f32.mrf.mxu0
        %v626 = vadd.f32 %v343, %v625
        %v627 = vpop.f32.mrf.mxu0
        %628 = vmatprep.mubr.bf16.mxu0 0
        %629 = vmatmul.mubr.bf16.gmra.mxu0 %v452
        %v630 = vpop.f32.mrf.mxu0
        %v631 = vadd.f32 %v343, %v630
        %v632 = vpop.f32.mrf.mxu0
        %v633 = vpop.f32.mrf.mxu0
        %v634 = vadd.f32 %v343, %v633
        %v635 = vpop.f32.mrf.mxu0
        %636 = vmatprep.mubr.bf16.mxu0 0
        %637 = vmatmul.mubr.bf16.gmra.mxu0 %v455
        %v638 = vpop.f32.mrf.mxu0
        %v639 = vadd.f32 %v343, %v638
        %v640 = vpop.f32.mrf.mxu0
        %v641 = vpop.f32.mrf.mxu0
        %v642 = vadd.f32 %v343, %v641
        %v643 = vpop.f32.mrf.mxu0
        %644 = vmatprep.mubr.bf16.mxu0 0
        %645 = vmatmul.mubr.bf16.gmra.mxu0 %v458
        %v646 = vpop.f32.mrf.mxu0
        %v647 = vadd.f32 %v343, %v646
        %v648 = vpop.f32.mrf.mxu0
        %v649 = vpop.f32.mrf.mxu0
        %v650 = vadd.f32 %v343, %v649
        %v651 = vpop.f32.mrf.mxu0
        %652 = vdwg.mxu0
        %v653 = vmax.f32 %v495, 0.0
        %v654 = vmax.f32 %v498, 0.0
        %v655 = vmax.f32 %v503, 0.0
        %v656 = vmax.f32 %v506, 0.0
        %v657 = vmax.f32 %v511, 0.0
        %v658 = vmax.f32 %v514, 0.0
        %v659 = vmax.f32 %v519, 0.0
        %v660 = vmax.f32 %v522, 0.0
        %v661 = vmax.f32 %v527, 0.0
        %v662 = vmax.f32 %v530, 0.0
        %v663 = vmax.f32 %v535, 0.0
        %v664 = vmax.f32 %v538, 0.0
        %v665 = vmax.f32 %v543, 0.0
        %v666 = vmax.f32 %v546, 0.0
        %v667 = vmax.f32 %v551, 0.0
        %v668 = vmax.f32 %v554, 0.0
        %v669 = vmax.f32 %v559, 0.0
        %v670 = vmax.f32 %v562, 0.0
        %v671 = vmax.f32 %v567, 0.0
        %v672 = vmax.f32 %v570, 0.0
        %v673 = vmax.f32 %v575, 0.0
        %v674 = vmax.f32 %v578, 0.0
        %v675 = vmax.f32 %v583, 0.0
        %v676 = vmax.f32 %v586, 0.0
        %v677 = vmax.f32 %v591, 0.0
        %v678 = vmax.f32 %v594, 0.0
        %v679 = vmax.f32 %v599, 0.0
        %v680 = vmax.f32 %v602, 0.0
        %v681 = vmax.f32 %v607, 0.0
        %v682 = vmax.f32 %v610, 0.0
        %v683 = vmax.f32 %v615, 0.0
        %v684 = vmax.f32 %v618, 0.0
        %v685 = vmax.f32 %v623, 0.0
        %v686 = vmax.f32 %v626, 0.0
        %v687 = vmax.f32 %v631, 0.0
        %v688 = vmax.f32 %v634, 0.0
        %v689 = vmax.f32 %v639, 0.0
        %v690 = vmax.f32 %v642, 0.0
        %v691 = vmax.f32 %v647, 0.0
        %v692 = vmax.f32 %v650, 0.0
        %v693 = vpack.c.bf16 %v654, %v653
        %v694 = vpack.c.bf16 %v656, %v655
        %v695 = vpack.c.bf16 %v658, %v657
        %v696 = vpack.c.bf16 %v660, %v659
        %v697 = vpack.c.bf16 %v662, %v661
        %v698 = vpack.c.bf16 %v664, %v663
        %v699 = vpack.c.bf16 %v666, %v665
        %v700 = vpack.c.bf16 %v668, %v667
        %v701 = vpack.c.bf16 %v670, %v669
        %v702 = vpack.c.bf16 %v672, %v671
        %v703 = vpack.c.bf16 %v674, %v673
        %v704 = vpack.c.bf16 %v676, %v675
        %v705 = vpack.c.bf16 %v678, %v677
        %v706 = vpack.c.bf16 %v680, %v679
        %v707 = vpack.c.bf16 %v682, %v681
        %v708 = vpack.c.bf16 %v684, %v683
        %v709 = vpack.c.bf16 %v686, %v685
        %v710 = vpack.c.bf16 %v688, %v687
        %v711 = vpack.c.bf16 %v690, %v689
        %v712 = vpack.c.bf16 %v692, %v691
        %v713 = vld [vmem:[%s3] sm:$0xf]
        %v714 = vld [vmem:[%s3 + $0x4] sm:$0xf]
        %v715 = vld [vmem:[%s3 + $0x8] sm:$0xf]
        %v716 = vld [vmem:[%s3 + $0xc] sm:$0xf]
        %v717 = vld [vmem:[%s3 + $0x10] sm:$0xf]
        %v718 = vld [vmem:[%s3 + $0x14] sm:$0xf]
        %v719 = vld [vmem:[%s3 + $0x18] sm:$0xf]
        %v720 = vld [vmem:[%s3 + $0x1c] sm:$0xf]
        %v721 = vld [vmem:[%s4] sm:$0x1]
        %v723 = vlaneseq
        %v724 = vshrl.u32 %v723, 7
        %v725 = vsub.s32 0, %v724
        %v726 = vrot.slane %v721, %v725
        %v736 = vunpack.c.l.b16 %v713
        %v737 = vunpack.c.l.b16 %v714
        %v738 = vunpack.c.l.b16 %v715
        %v739 = vunpack.c.l.b16 %v716
        %v740 = vunpack.c.l.b16 %v717
        %v741 = vunpack.c.l.b16 %v718
        %v742 = vunpack.c.l.b16 %v719
        %v743 = vunpack.c.l.b16 %v720
        %v744 = vpack.c.b16 %v737, %v736
        %v745 = vpack.c.b16 %v739, %v738
        %v746 = vpack.c.b16 %v741, %v740
        %v747 = vpack.c.b16 %v743, %v742
        %vm752 = vcmask 523264
        %v754 = vsel %vm752, %v693, 0
        %v757 = vsel %vm752, %v694, 0
        %v760 = vsel %vm752, %v695, 0
        %v763 = vsel %vm752, %v696, 0
        %v766 = vsel %vm752, %v697, 0
        %v769 = vsel %vm752, %v698, 0
        %v772 = vsel %vm752, %v699, 0
        %v775 = vsel %vm752, %v700, 0
        %v778 = vsel %vm752, %v701, 0
        %v781 = vsel %vm752, %v702, 0
        %v784 = vsel %vm752, %v703, 0
        %v787 = vsel %vm752, %v704, 0
        %v790 = vsel %vm752, %v705, 0
        %v793 = vsel %vm752, %v706, 0
        %v796 = vsel %vm752, %v707, 0
        %v799 = vsel %vm752, %v708, 0
        %v802 = vsel %vm752, %v709, 0
        %v805 = vsel %vm752, %v710, 0
        %v808 = vsel %vm752, %v711, 0
        %v811 = vsel %vm752, %v712, 0
        %813 = vmatprep.subr.bf16.mxu0 0
        %814 = vmatpush1.bf16.msra.mxu0 0
        %815 = vmatprep.subr.bf16.mxu0 0
        %816 = vmatpush1.bf16.msra.mxu0 0
        %817 = vmatprep.subr.bf16.mxu0 0
        %818 = vmatpush1.bf16.msra.mxu0 0
        %819 = vmatprep.subr.bf16.mxu0 0
        %820 = vmatpush1.bf16.msra.mxu0 0
        %821 = vmatprep.subr.bf16.mxu0 0
        %822 = vmatpush1.bf16.msra.mxu0 %v747
        %823 = vmatprep.subr.bf16.mxu0 0
        %824 = vmatpush1.bf16.msra.mxu0 %v746
        %825 = vmatprep.subr.bf16.mxu0 0
        %826 = vmatpush1.bf16.msra.mxu0 %v745
        %827 = vmatprep.subr.bf16.mxu0 0
        %828 = vmatpush1.bf16.msra.mxu0 %v744
        %829 = vmatprep.subr.bf16.mxu0 0
        %830 = vmatpush2.bf16.msra.mxu0 0
        %831 = vmatprep.subr.bf16.mxu0 0
        %832 = vmatpush2.bf16.msra.mxu0 0
        %833 = vmatprep.subr.bf16.mxu0 0
        %834 = vmatpush2.bf16.msra.mxu0 0
        %835 = vmatprep.subr.bf16.mxu0 0
        %836 = vmatpush2.bf16.msra.mxu0 0
        %837 = vmatprep.subr.bf16.mxu0 0
        %838 = vmatpush2.bf16.msra.mxu0 0
        %839 = vmatprep.subr.bf16.mxu0 0
        %840 = vmatpush2.bf16.msra.mxu0 0
        %841 = vmatprep.subr.bf16.mxu0 0
        %842 = vmatpush2.bf16.msra.mxu0 0
        %843 = vmatprep.subr.bf16.mxu0 0
        %844 = vmatpush2.bf16.msra.mxu0 0
        %845 = vmatprep.mubr.bf16.mxu0 0
        %846 = vmatmul.mubr.bf16.gmra.mxu0 %v754
        %v847 = vpop.f32.mrf.mxu0
        %v848 = vadd.f32 %v726, %v847
        %v849 = vpop.f32.mrf.mxu0
        %v850 = vpop.f32.mrf.mxu0
        %v851 = vadd.f32 %v726, %v850
        %v852 = vpop.f32.mrf.mxu0
        %853 = vmatprep.mubr.bf16.mxu0 0
        %854 = vmatmul.mubr.bf16.gmra.mxu0 %v757
        %v855 = vpop.f32.mrf.mxu0
        %v856 = vadd.f32 %v726, %v855
        %v857 = vpop.f32.mrf.mxu0
        %v858 = vpop.f32.mrf.mxu0
        %v859 = vadd.f32 %v726, %v858
        %v860 = vpop.f32.mrf.mxu0
        %861 = vmatprep.mubr.bf16.mxu0 0
        %862 = vmatmul.mubr.bf16.gmra.mxu0 %v760
        %v863 = vpop.f32.mrf.mxu0
        %v864 = vadd.f32 %v726, %v863
        %v865 = vpop.f32.mrf.mxu0
        %v866 = vpop.f32.mrf.mxu0
        %v867 = vadd.f32 %v726, %v866
        %v868 = vpop.f32.mrf.mxu0
        %869 = vmatprep.mubr.bf16.mxu0 0
        %870 = vmatmul.mubr.bf16.gmra.mxu0 %v763
        %v871 = vpop.f32.mrf.mxu0
        %v872 = vadd.f32 %v726, %v871
        %v873 = vpop.f32.mrf.mxu0
        %v874 = vpop.f32.mrf.mxu0
        %v875 = vadd.f32 %v726, %v874
        %v876 = vpop.f32.mrf.mxu0
        %877 = vmatprep.mubr.bf16.mxu0 0
        %878 = vmatmul.mubr.bf16.gmra.mxu0 %v766
        %v879 = vpop.f32.mrf.mxu0
        %v880 = vadd.f32 %v726, %v879
        %v881 = vpop.f32.mrf.mxu0
        %v882 = vpop.f32.mrf.mxu0
        %v883 = vadd.f32 %v726, %v882
        %v884 = vpop.f32.mrf.mxu0
        %885 = vmatprep.mubr.bf16.mxu0 0
        %886 = vmatmul.mubr.bf16.gmra.mxu0 %v769
        %v887 = vpop.f32.mrf.mxu0
        %v888 = vadd.f32 %v726, %v887
        %v889 = vpop.f32.mrf.mxu0
        %v890 = vpop.f32.mrf.mxu0
        %v891 = vadd.f32 %v726, %v890
        %v892 = vpop.f32.mrf.mxu0
        %893 = vmatprep.mubr.bf16.mxu0 0
        %894 = vmatmul.mubr.bf16.gmra.mxu0 %v772
        %v895 = vpop.f32.mrf.mxu0
        %v896 = vadd.f32 %v726, %v895
        %v897 = vpop.f32.mrf.mxu0
        %v898 = vpop.f32.mrf.mxu0
        %v899 = vadd.f32 %v726, %v898
        %v900 = vpop.f32.mrf.mxu0
        %901 = vmatprep.mubr.bf16.mxu0 0
        %902 = vmatmul.mubr.bf16.gmra.mxu0 %v775
        %v903 = vpop.f32.mrf.mxu0
        %v904 = vadd.f32 %v726, %v903
        %v905 = vpop.f32.mrf.mxu0
        %v906 = vpop.f32.mrf.mxu0
        %v907 = vadd.f32 %v726, %v906
        %v908 = vpop.f32.mrf.mxu0
        %909 = vmatprep.mubr.bf16.mxu0 0
        %910 = vmatmul.mubr.bf16.gmra.mxu0 %v778
        %v911 = vpop.f32.mrf.mxu0
        %v912 = vadd.f32 %v726, %v911
        %v913 = vpop.f32.mrf.mxu0
        %v914 = vpop.f32.mrf.mxu0
        %v915 = vadd.f32 %v726, %v914
        %v916 = vpop.f32.mrf.mxu0
        %917 = vmatprep.mubr.bf16.mxu0 0
        %918 = vmatmul.mubr.bf16.gmra.mxu0 %v781
        %v919 = vpop.f32.mrf.mxu0
        %v920 = vadd.f32 %v726, %v919
        %v921 = vpop.f32.mrf.mxu0
        %v922 = vpop.f32.mrf.mxu0
        %v923 = vadd.f32 %v726, %v922
        %v924 = vpop.f32.mrf.mxu0
        %925 = vmatprep.mubr.bf16.mxu0 0
        %926 = vmatmul.mubr.bf16.gmra.mxu0 %v784
        %v927 = vpop.f32.mrf.mxu0
        %v928 = vadd.f32 %v726, %v927
        %v929 = vpop.f32.mrf.mxu0
        %v930 = vpop.f32.mrf.mxu0
        %v931 = vadd.f32 %v726, %v930
        %v932 = vpop.f32.mrf.mxu0
        %933 = vmatprep.mubr.bf16.mxu0 0
        %934 = vmatmul.mubr.bf16.gmra.mxu0 %v787
        %v935 = vpop.f32.mrf.mxu0
        %v936 = vadd.f32 %v726, %v935
        %v937 = vpop.f32.mrf.mxu0
        %v938 = vpop.f32.mrf.mxu0
        %v939 = vadd.f32 %v726, %v938
        %v940 = vpop.f32.mrf.mxu0
        %941 = vmatprep.mubr.bf16.mxu0 0
        %942 = vmatmul.mubr.bf16.gmra.mxu0 %v790
        %v943 = vpop.f32.mrf.mxu0
        %v944 = vadd.f32 %v726, %v943
        %v945 = vpop.f32.mrf.mxu0
        %v946 = vpop.f32.mrf.mxu0
        %v947 = vadd.f32 %v726, %v946
        %v948 = vpop.f32.mrf.mxu0
        %949 = vmatprep.mubr.bf16.mxu0 0
        %950 = vmatmul.mubr.bf16.gmra.mxu0 %v793
        %v951 = vpop.f32.mrf.mxu0
        %v952 = vadd.f32 %v726, %v951
        %v953 = vpop.f32.mrf.mxu0
        %v954 = vpop.f32.mrf.mxu0
        %v955 = vadd.f32 %v726, %v954
        %v956 = vpop.f32.mrf.mxu0
        %957 = vmatprep.mubr.bf16.mxu0 0
        %958 = vmatmul.mubr.bf16.gmra.mxu0 %v796
        %v959 = vpop.f32.mrf.mxu0
        %v960 = vadd.f32 %v726, %v959
        %v961 = vpop.f32.mrf.mxu0
        %v962 = vpop.f32.mrf.mxu0
        %v963 = vadd.f32 %v726, %v962
        %v964 = vpop.f32.mrf.mxu0
        %965 = vmatprep.mubr.bf16.mxu0 0
        %966 = vmatmul.mubr.bf16.gmra.mxu0 %v799
        %v967 = vpop.f32.mrf.mxu0
        %v968 = vadd.f32 %v726, %v967
        %v969 = vpop.f32.mrf.mxu0
        %v970 = vpop.f32.mrf.mxu0
        %v971 = vadd.f32 %v726, %v970
        %v972 = vpop.f32.mrf.mxu0
        %973 = vmatprep.mubr.bf16.mxu0 0
        %974 = vmatmul.mubr.bf16.gmra.mxu0 %v802
        %v975 = vpop.f32.mrf.mxu0
        %v976 = vadd.f32 %v726, %v975
        %v977 = vpop.f32.mrf.mxu0
        %v978 = vpop.f32.mrf.mxu0
        %v979 = vadd.f32 %v726, %v978
        %v980 = vpop.f32.mrf.mxu0
        %981 = vmatprep.mubr.bf16.mxu0 0
        %982 = vmatmul.mubr.bf16.gmra.mxu0 %v805
        %v983 = vpop.f32.mrf.mxu0
        %v984 = vadd.f32 %v726, %v983
        %v985 = vpop.f32.mrf.mxu0
        %v986 = vpop.f32.mrf.mxu0
        %v987 = vadd.f32 %v726, %v986
        %v988 = vpop.f32.mrf.mxu0
        %989 = vmatprep.mubr.bf16.mxu0 0
        %990 = vmatmul.mubr.bf16.gmra.mxu0 %v808
        %v991 = vpop.f32.mrf.mxu0
        %v992 = vadd.f32 %v726, %v991
        %v993 = vpop.f32.mrf.mxu0
        %v994 = vpop.f32.mrf.mxu0
        %v995 = vadd.f32 %v726, %v994
        %v996 = vpop.f32.mrf.mxu0
        %997 = vmatprep.mubr.bf16.mxu0 0
        %998 = vmatmul.mubr.bf16.gmra.mxu0 %v811
        %v999 = vpop.f32.mrf.mxu0
        %v1000 = vadd.f32 %v726, %v999
        %v1001 = vpop.f32.mrf.mxu0
        %v1002 = vpop.f32.mrf.mxu0
        %v1003 = vadd.f32 %v726, %v1002
        %v1004 = vpop.f32.mrf.mxu0
        %1005 = vdwg.mxu0
        %v1006 = vmax.f32 %v848, 0.0
        %v1007 = vmax.f32 %v851, 0.0
        %v1008 = vmax.f32 %v856, 0.0
        %v1009 = vmax.f32 %v859, 0.0
        %v1010 = vmax.f32 %v864, 0.0
        %v1011 = vmax.f32 %v867, 0.0
        %v1012 = vmax.f32 %v872, 0.0
        %v1013 = vmax.f32 %v875, 0.0
        %v1014 = vmax.f32 %v880, 0.0
        %v1015 = vmax.f32 %v883, 0.0
        %v1016 = vmax.f32 %v888, 0.0
        %v1017 = vmax.f32 %v891, 0.0
        %v1018 = vmax.f32 %v896, 0.0
        %v1019 = vmax.f32 %v899, 0.0
        %v1020 = vmax.f32 %v904, 0.0
        %v1021 = vmax.f32 %v907, 0.0
        %v1022 = vmax.f32 %v912, 0.0
        %v1023 = vmax.f32 %v915, 0.0
        %v1024 = vmax.f32 %v920, 0.0
        %v1025 = vmax.f32 %v923, 0.0
        %v1026 = vmax.f32 %v928, 0.0
        %v1027 = vmax.f32 %v931, 0.0
        %v1028 = vmax.f32 %v936, 0.0
        %v1029 = vmax.f32 %v939, 0.0
        %v1030 = vmax.f32 %v944, 0.0
        %v1031 = vmax.f32 %v947, 0.0
        %v1032 = vmax.f32 %v952, 0.0
        %v1033 = vmax.f32 %v955, 0.0
        %v1034 = vmax.f32 %v960, 0.0
        %v1035 = vmax.f32 %v963, 0.0
        %v1036 = vmax.f32 %v968, 0.0
        %v1037 = vmax.f32 %v971, 0.0
        %v1038 = vmax.f32 %v976, 0.0
        %v1039 = vmax.f32 %v979, 0.0
        %v1040 = vmax.f32 %v984, 0.0
        %v1041 = vmax.f32 %v987, 0.0
        %v1042 = vmax.f32 %v992, 0.0
        %v1043 = vmax.f32 %v995, 0.0
        %v1044 = vmax.f32 %v1000, 0.0
        %v1045 = vmax.f32 %v1003, 0.0
        %v1046 = vpack.c.bf16 %v1007, %v1006
        %v1047 = vpack.c.bf16 %v1009, %v1008
        %v1048 = vpack.c.bf16 %v1011, %v1010
        %v1049 = vpack.c.bf16 %v1013, %v1012
        %v1050 = vpack.c.bf16 %v1015, %v1014
        %v1051 = vpack.c.bf16 %v1017, %v1016
        %v1052 = vpack.c.bf16 %v1019, %v1018
        %v1053 = vpack.c.bf16 %v1021, %v1020
        %v1054 = vpack.c.bf16 %v1023, %v1022
        %v1055 = vpack.c.bf16 %v1025, %v1024
        %v1056 = vpack.c.bf16 %v1027, %v1026
        %v1057 = vpack.c.bf16 %v1029, %v1028
        %v1058 = vpack.c.bf16 %v1031, %v1030
        %v1059 = vpack.c.bf16 %v1033, %v1032
        %v1060 = vpack.c.bf16 %v1035, %v1034
        %v1061 = vpack.c.bf16 %v1037, %v1036
        %v1062 = vpack.c.bf16 %v1039, %v1038
        %v1063 = vpack.c.bf16 %v1041, %v1040
        %v1064 = vpack.c.bf16 %v1043, %v1042
        %v1065 = vpack.c.bf16 %v1045, %v1044
        %v1066 = vld [vmem:[%s5] sm:$0xff]
        %v1067 = vld [vmem:[%s5 + $0x8] sm:$0xff]
        %v1068 = vld [vmem:[%s5 + $0x10] sm:$0xff]
        %v1069 = vld [vmem:[%s5 + $0x18] sm:$0xff]
        %v1070 = vld [vmem:[%s5 + $0x20] sm:$0xff]
        %v1071 = vld [vmem:[%s5 + $0x28] sm:$0xff]
        %v1072 = vld [vmem:[%s5 + $0x30] sm:$0xff]
        %v1073 = vld [vmem:[%s5 + $0x38] sm:$0xff]
        %v1074 = vld [vmem:[%s5 + $0x40] sm:$0xff]
        %v1075 = vld [vmem:[%s5 + $0x48] sm:$0xff]
        %v1076 = vld [vmem:[%s5 + $0x50] sm:$0xff]
        %v1077 = vld [vmem:[%s5 + $0x58] sm:$0xff]
        %v1078 = vld [vmem:[%s5 + $0x60] sm:$0xff]
        %v1079 = vld [vmem:[%s5 + $0x68] sm:$0xff]
        %v1080 = vld [vmem:[%s5 + $0x70] sm:$0xff]
        %v1081 = vld [vmem:[%s5 + $0x78] sm:$0xff]
        %v1082 = vld [vmem:[%s5 + $0x80] sm:$0xff]
        %v1083 = vld [vmem:[%s5 + $0x88] sm:$0xff]
        %v1084 = vld [vmem:[%s5 + $0x90] sm:$0xff]
        %v1085 = vld [vmem:[%s5 + $0x98] sm:$0xff]
        %v1086 = vld [vmem:[%s5 + $0xa0] sm:$0xff]
        %v1087 = vld [vmem:[%s5 + $0xa8] sm:$0xff]
        %v1088 = vld [vmem:[%s5 + $0xb0] sm:$0xff]
        %v1089 = vld [vmem:[%s5 + $0xb8] sm:$0xff]
        %v1090 = vld [vmem:[%s5 + $0xc0] sm:$0xff]
        %v1091 = vld [vmem:[%s5 + $0xc8] sm:$0xff]
        %v1092 = vld [vmem:[%s5 + $0xd0] sm:$0xff]
        %v1093 = vld [vmem:[%s5 + $0xd8] sm:$0xff]
        %v1094 = vld [vmem:[%s5 + $0xe0] sm:$0xff]
        %v1095 = vld [vmem:[%s5 + $0xe8] sm:$0xff]
        %v1096 = vld [vmem:[%s5 + $0xf0] sm:$0xff]
        %v1097 = vld [vmem:[%s5 + $0xf8] sm:$0xff]
        %v1098 = vld [vmem:[%s5 + $0x100] sm:$0xff]
        %v1099 = vld [vmem:[%s5 + $0x108] sm:$0xff]
        %v1100 = vld [vmem:[%s5 + $0x110] sm:$0xff]
        %v1101 = vld [vmem:[%s5 + $0x118] sm:$0xff]
        %v1102 = vld [vmem:[%s5 + $0x120] sm:$0xff]
        %v1103 = vld [vmem:[%s5 + $0x128] sm:$0xff]
        %v1104 = vld [vmem:[%s5 + $0x130] sm:$0xff]
        %v1105 = vld [vmem:[%s5 + $0x138] sm:$0xff]
        %v1106 = vld [vmem:[%s5 + $0x140] sm:$0xff]
        %v1107 = vld [vmem:[%s5 + $0x148] sm:$0xff]
        %v1108 = vld [vmem:[%s5 + $0x150] sm:$0xff]
        %v1109 = vld [vmem:[%s5 + $0x158] sm:$0xff]
        %v1110 = vld [vmem:[%s5 + $0x160] sm:$0xff]
        %v1111 = vld [vmem:[%s5 + $0x168] sm:$0xff]
        %v1112 = vld [vmem:[%s5 + $0x170] sm:$0xff]
        %v1113 = vld [vmem:[%s5 + $0x178] sm:$0xff]
        %v1114 = vld [vmem:[%s5 + $0x180] sm:$0xff]
        %v1115 = vld [vmem:[%s5 + $0x188] sm:$0xff]
        %v1116 = vld [vmem:[%s5 + $0x190] sm:$0xff]
        %v1117 = vld [vmem:[%s5 + $0x198] sm:$0xff]
        %v1118 = vld [vmem:[%s5 + $0x1a0] sm:$0xff]
        %v1119 = vld [vmem:[%s5 + $0x1a8] sm:$0xff]
        %v1120 = vld [vmem:[%s5 + $0x1b0] sm:$0xff]
        %v1121 = vld [vmem:[%s5 + $0x1b8] sm:$0xff]
        %v1122 = vld [vmem:[%s5 + $0x1c0] sm:$0xff]
        %v1123 = vld [vmem:[%s5 + $0x1c8] sm:$0xff]
        %v1124 = vld [vmem:[%s5 + $0x1d0] sm:$0xff]
        %v1125 = vld [vmem:[%s5 + $0x1d8] sm:$0xff]
        %v1126 = vld [vmem:[%s5 + $0x1e0] sm:$0xff]
        %v1127 = vld [vmem:[%s5 + $0x1e8] sm:$0xff]
        %v1128 = vld [vmem:[%s5 + $0x1f0] sm:$0xff]
        %v1129 = vld [vmem:[%s5 + $0x1f8] sm:$0xff]
        %v1130 = vld [vmem:[%s6] sm:$0xff]
        %v1132 = vlaneseq
        %v1133 = vshrl.u32 %v1132, 7
        %v1134 = vsub.s32 0, %v1133
        %v1135 = vrot.slane %v1130, %v1134
        %v1136 = vlaneseq
        %v1137 = vshrl.u32 %v1136, 7
        %v1138 = vsub.s32 1, %v1137
        %v1139 = vrot.slane %v1130, %v1138
        %v1140 = vlaneseq
        %v1141 = vshrl.u32 %v1140, 7
        %v1142 = vsub.s32 2, %v1141
        %v1143 = vrot.slane %v1130, %v1142
        %v1144 = vlaneseq
        %v1145 = vshrl.u32 %v1144, 7
        %v1146 = vsub.s32 3, %v1145
        %v1147 = vrot.slane %v1130, %v1146
        %v1148 = vlaneseq
        %v1149 = vshrl.u32 %v1148, 7
        %v1150 = vsub.s32 4, %v1149
        %v1151 = vrot.slane %v1130, %v1150
        %v1152 = vlaneseq
        %v1153 = vshrl.u32 %v1152, 7
        %v1154 = vsub.s32 5, %v1153
        %v1155 = vrot.slane %v1130, %v1154
        %v1156 = vlaneseq
        %v1157 = vshrl.u32 %v1156, 7
        %v1158 = vsub.s32 6, %v1157
        %v1159 = vrot.slane %v1130, %v1158
        %v1160 = vlaneseq
        %v1161 = vshrl.u32 %v1160, 7
        %v1162 = vsub.s32 7, %v1161
        %v1163 = vrot.slane %v1130, %v1162
        %v1236 = vunpack.c.l.b16 %v1066
        %v1237 = vunpack.c.h.b16 %v1066
        %v1238 = vunpack.c.l.b16 %v1067
        %v1239 = vunpack.c.h.b16 %v1067
        %v1240 = vunpack.c.l.b16 %v1068
        %v1241 = vunpack.c.h.b16 %v1068
        %v1242 = vunpack.c.l.b16 %v1069
        %v1243 = vunpack.c.h.b16 %v1069
        %v1244 = vunpack.c.l.b16 %v1070
        %v1245 = vunpack.c.h.b16 %v1070
        %v1246 = vunpack.c.l.b16 %v1071
        %v1247 = vunpack.c.h.b16 %v1071
        %v1248 = vunpack.c.l.b16 %v1072
        %v1249 = vunpack.c.h.b16 %v1072
        %v1250 = vunpack.c.l.b16 %v1073
        %v1251 = vunpack.c.h.b16 %v1073
        %v1252 = vunpack.c.l.b16 %v1074
        %v1253 = vunpack.c.h.b16 %v1074
        %v1254 = vunpack.c.l.b16 %v1075
        %v1255 = vunpack.c.h.b16 %v1075
        %v1256 = vunpack.c.l.b16 %v1076
        %v1257 = vunpack.c.h.b16 %v1076
        %v1258 = vunpack.c.l.b16 %v1077
        %v1259 = vunpack.c.h.b16 %v1077
        %v1260 = vunpack.c.l.b16 %v1078
        %v1261 = vunpack.c.h.b16 %v1078
        %v1262 = vunpack.c.l.b16 %v1079
        %v1263 = vunpack.c.h.b16 %v1079
        %v1264 = vunpack.c.l.b16 %v1080
        %v1265 = vunpack.c.h.b16 %v1080
        %v1266 = vunpack.c.l.b16 %v1081
        %v1267 = vunpack.c.h.b16 %v1081
        %v1268 = vunpack.c.l.b16 %v1082
        %v1269 = vunpack.c.h.b16 %v1082
        %v1270 = vunpack.c.l.b16 %v1083
        %v1271 = vunpack.c.h.b16 %v1083
        %v1272 = vunpack.c.l.b16 %v1084
        %v1273 = vunpack.c.h.b16 %v1084
        %v1274 = vunpack.c.l.b16 %v1085
        %v1275 = vunpack.c.h.b16 %v1085
        %v1276 = vunpack.c.l.b16 %v1086
        %v1277 = vunpack.c.h.b16 %v1086
        %v1278 = vunpack.c.l.b16 %v1087
        %v1279 = vunpack.c.h.b16 %v1087
        %v1280 = vunpack.c.l.b16 %v1088
        %v1281 = vunpack.c.h.b16 %v1088
        %v1282 = vunpack.c.l.b16 %v1089
        %v1283 = vunpack.c.h.b16 %v1089
        %v1284 = vunpack.c.l.b16 %v1090
        %v1285 = vunpack.c.h.b16 %v1090
        %v1286 = vunpack.c.l.b16 %v1091
        %v1287 = vunpack.c.h.b16 %v1091
        %v1288 = vunpack.c.l.b16 %v1092
        %v1289 = vunpack.c.h.b16 %v1092
        %v1290 = vunpack.c.l.b16 %v1093
        %v1291 = vunpack.c.h.b16 %v1093
        %v1292 = vunpack.c.l.b16 %v1094
        %v1293 = vunpack.c.h.b16 %v1094
        %v1294 = vunpack.c.l.b16 %v1095
        %v1295 = vunpack.c.h.b16 %v1095
        %v1296 = vunpack.c.l.b16 %v1096
        %v1297 = vunpack.c.h.b16 %v1096
        %v1298 = vunpack.c.l.b16 %v1097
        %v1299 = vunpack.c.h.b16 %v1097
        %v1300 = vunpack.c.l.b16 %v1098
        %v1301 = vunpack.c.h.b16 %v1098
        %v1302 = vunpack.c.l.b16 %v1099
        %v1303 = vunpack.c.h.b16 %v1099
        %v1304 = vunpack.c.l.b16 %v1100
        %v1305 = vunpack.c.h.b16 %v1100
        %v1306 = vunpack.c.l.b16 %v1101
        %v1307 = vunpack.c.h.b16 %v1101
        %v1308 = vunpack.c.l.b16 %v1102
        %v1309 = vunpack.c.h.b16 %v1102
        %v1310 = vunpack.c.l.b16 %v1103
        %v1311 = vunpack.c.h.b16 %v1103
        %v1312 = vunpack.c.l.b16 %v1104
        %v1313 = vunpack.c.h.b16 %v1104
        %v1314 = vunpack.c.l.b16 %v1105
        %v1315 = vunpack.c.h.b16 %v1105
        %v1316 = vunpack.c.l.b16 %v1106
        %v1317 = vunpack.c.h.b16 %v1106
        %v1318 = vunpack.c.l.b16 %v1107
        %v1319 = vunpack.c.h.b16 %v1107
        %v1320 = vunpack.c.l.b16 %v1108
        %v1321 = vunpack.c.h.b16 %v1108
        %v1322 = vunpack.c.l.b16 %v1109
        %v1323 = vunpack.c.h.b16 %v1109
        %v1324 = vunpack.c.l.b16 %v1110
        %v1325 = vunpack.c.h.b16 %v1110
        %v1326 = vunpack.c.l.b16 %v1111
        %v1327 = vunpack.c.h.b16 %v1111
        %v1328 = vunpack.c.l.b16 %v1112
        %v1329 = vunpack.c.h.b16 %v1112
        %v1330 = vunpack.c.l.b16 %v1113
        %v1331 = vunpack.c.h.b16 %v1113
        %v1332 = vunpack.c.l.b16 %v1114
        %v1333 = vunpack.c.h.b16 %v1114
        %v1334 = vunpack.c.l.b16 %v1115
        %v1335 = vunpack.c.h.b16 %v1115
        %v1336 = vunpack.c.l.b16 %v1116
        %v1337 = vunpack.c.h.b16 %v1116
        %v1338 = vunpack.c.l.b16 %v1117
        %v1339 = vunpack.c.h.b16 %v1117
        %v1340 = vunpack.c.l.b16 %v1118
        %v1341 = vunpack.c.h.b16 %v1118
        %v1342 = vunpack.c.l.b16 %v1119
        %v1343 = vunpack.c.h.b16 %v1119
        %v1344 = vunpack.c.l.b16 %v1120
        %v1345 = vunpack.c.h.b16 %v1120
        %v1346 = vunpack.c.l.b16 %v1121
        %v1347 = vunpack.c.h.b16 %v1121
        %v1348 = vunpack.c.l.b16 %v1122
        %v1349 = vunpack.c.h.b16 %v1122
        %v1350 = vunpack.c.l.b16 %v1123
        %v1351 = vunpack.c.h.b16 %v1123
        %v1352 = vunpack.c.l.b16 %v1124
        %v1353 = vunpack.c.h.b16 %v1124
        %v1354 = vunpack.c.l.b16 %v1125
        %v1355 = vunpack.c.h.b16 %v1125
        %v1356 = vunpack.c.l.b16 %v1126
        %v1357 = vunpack.c.h.b16 %v1126
        %v1358 = vunpack.c.l.b16 %v1127
        %v1359 = vunpack.c.h.b16 %v1127
        %v1360 = vunpack.c.l.b16 %v1128
        %v1361 = vunpack.c.h.b16 %v1128
        %v1362 = vunpack.c.l.b16 %v1129
        %v1363 = vunpack.c.h.b16 %v1129
        %v1364 = vpack.c.b16 %v1244, %v1236
        %v1365 = vpack.c.b16 %v1245, %v1237
        %v1366 = vpack.c.b16 %v1246, %v1238
        %v1367 = vpack.c.b16 %v1247, %v1239
        %v1368 = vpack.c.b16 %v1248, %v1240
        %v1369 = vpack.c.b16 %v1249, %v1241
        %v1370 = vpack.c.b16 %v1250, %v1242
        %v1371 = vpack.c.b16 %v1251, %v1243
        %v1372 = vpack.c.b16 %v1260, %v1252
        %v1373 = vpack.c.b16 %v1261, %v1253
        %v1374 = vpack.c.b16 %v1262, %v1254
        %v1375 = vpack.c.b16 %v1263, %v1255
        %v1376 = vpack.c.b16 %v1264, %v1256
        %v1377 = vpack.c.b16 %v1265, %v1257
        %v1378 = vpack.c.b16 %v1266, %v1258
        %v1379 = vpack.c.b16 %v1267, %v1259
        %v1380 = vpack.c.b16 %v1276, %v1268
        %v1381 = vpack.c.b16 %v1277, %v1269
        %v1382 = vpack.c.b16 %v1278, %v1270
        %v1383 = vpack.c.b16 %v1279, %v1271
        %v1384 = vpack.c.b16 %v1280, %v1272
        %v1385 = vpack.c.b16 %v1281, %v1273
        %v1386 = vpack.c.b16 %v1282, %v1274
        %v1387 = vpack.c.b16 %v1283, %v1275
        %v1388 = vpack.c.b16 %v1292, %v1284
        %v1389 = vpack.c.b16 %v1293, %v1285
        %v1390 = vpack.c.b16 %v1294, %v1286
        %v1391 = vpack.c.b16 %v1295, %v1287
        %v1392 = vpack.c.b16 %v1296, %v1288
        %v1393 = vpack.c.b16 %v1297, %v1289
        %v1394 = vpack.c.b16 %v1298, %v1290
        %v1395 = vpack.c.b16 %v1299, %v1291
        %v1396 = vpack.c.b16 %v1308, %v1300
        %v1397 = vpack.c.b16 %v1309, %v1301
        %v1398 = vpack.c.b16 %v1310, %v1302
        %v1399 = vpack.c.b16 %v1311, %v1303
        %v1400 = vpack.c.b16 %v1312, %v1304
        %v1401 = vpack.c.b16 %v1313, %v1305
        %v1402 = vpack.c.b16 %v1314, %v1306
        %v1403 = vpack.c.b16 %v1315, %v1307
        %v1404 = vpack.c.b16 %v1324, %v1316
        %v1405 = vpack.c.b16 %v1325, %v1317
        %v1406 = vpack.c.b16 %v1326, %v1318
        %v1407 = vpack.c.b16 %v1327, %v1319
        %v1408 = vpack.c.b16 %v1328, %v1320
        %v1409 = vpack.c.b16 %v1329, %v1321
        %v1410 = vpack.c.b16 %v1330, %v1322
        %v1411 = vpack.c.b16 %v1331, %v1323
        %v1412 = vpack.c.b16 %v1340, %v1332
        %v1413 = vpack.c.b16 %v1341, %v1333
        %v1414 = vpack.c.b16 %v1342, %v1334
        %v1415 = vpack.c.b16 %v1343, %v1335
        %v1416 = vpack.c.b16 %v1344, %v1336
        %v1417 = vpack.c.b16 %v1345, %v1337
        %v1418 = vpack.c.b16 %v1346, %v1338
        %v1419 = vpack.c.b16 %v1347, %v1339
        %v1420 = vpack.c.b16 %v1356, %v1348
        %v1421 = vpack.c.b16 %v1357, %v1349
        %v1422 = vpack.c.b16 %v1358, %v1350
        %v1423 = vpack.c.b16 %v1359, %v1351
        %v1424 = vpack.c.b16 %v1360, %v1352
        %v1425 = vpack.c.b16 %v1361, %v1353
        %v1426 = vpack.c.b16 %v1362, %v1354
        %v1427 = vpack.c.b16 %v1363, %v1355
        %1492 = vmatprep.subr.bf16.mxu0 %v1421
        %1493 = vmatpush1.bf16.msra.mxu0 %v1420
        %1494 = vmatprep.subr.bf16.mxu0 %v1413
        %1495 = vmatpush1.bf16.msra.mxu0 %v1412
        %1496 = vmatprep.subr.bf16.mxu0 %v1405
        %1497 = vmatpush1.bf16.msra.mxu0 %v1404
        %1498 = vmatprep.subr.bf16.mxu0 %v1397
        %1499 = vmatpush1.bf16.msra.mxu0 %v1396
        %1500 = vmatprep.subr.bf16.mxu0 %v1389
        %1501 = vmatpush1.bf16.msra.mxu0 %v1388
        %1502 = vmatprep.subr.bf16.mxu0 %v1381
        %1503 = vmatpush1.bf16.msra.mxu0 %v1380
        %1504 = vmatprep.subr.bf16.mxu0 %v1373
        %1505 = vmatpush1.bf16.msra.mxu0 %v1372
        %1506 = vmatprep.subr.bf16.mxu0 %v1365
        %1507 = vmatpush1.bf16.msra.mxu0 %v1364
        %1508 = vmatprep.subr.bf16.mxu0 0
        %1509 = vmatpush2.bf16.msra.mxu0 0
        %1510 = vmatprep.subr.bf16.mxu0 0
        %1511 = vmatpush2.bf16.msra.mxu0 0
        %1512 = vmatprep.subr.bf16.mxu0 0
        %1513 = vmatpush2.bf16.msra.mxu0 0
        %1514 = vmatprep.subr.bf16.mxu0 0
        %1515 = vmatpush2.bf16.msra.mxu0 0
        %1516 = vmatprep.subr.bf16.mxu0 0
        %1517 = vmatpush2.bf16.msra.mxu0 0
        %1518 = vmatprep.subr.bf16.mxu0 0
        %1519 = vmatpush2.bf16.msra.mxu0 0
        %1520 = vmatprep.subr.bf16.mxu0 0
        %1521 = vmatpush2.bf16.msra.mxu0 0
        %1522 = vmatprep.subr.bf16.mxu0 0
        %1523 = vmatpush2.bf16.msra.mxu0 0
        %1524 = vmatprep.mubr.bf16.mxu0 0
        %1525 = vmatmul.mubr.bf16.gmra.mxu0 %v1046
        %v1526 = vpop.f32.mrf.mxu0
        %v1527 = vadd.f32 %v1135, %v1526
        %v1528 = vpop.f32.mrf.mxu0
        %v1529 = vadd.f32 %v1139, %v1528
        %v1530 = vpop.f32.mrf.mxu0
        %v1531 = vadd.f32 %v1135, %v1530
        %v1532 = vpop.f32.mrf.mxu0
        %v1533 = vadd.f32 %v1139, %v1532
        %1534 = vmatprep.mubr.bf16.mxu0 0
        %1535 = vmatmul.mubr.bf16.gmra.mxu0 %v1047
        %v1536 = vpop.f32.mrf.mxu0
        %v1537 = vadd.f32 %v1135, %v1536
        %v1538 = vpop.f32.mrf.mxu0
        %v1539 = vadd.f32 %v1139, %v1538
        %v1540 = vpop.f32.mrf.mxu0
        %v1541 = vadd.f32 %v1135, %v1540
        %v1542 = vpop.f32.mrf.mxu0
        %v1543 = vadd.f32 %v1139, %v1542
        %1544 = vmatprep.mubr.bf16.mxu0 0
        %1545 = vmatmul.mubr.bf16.gmra.mxu0 %v1048
        %v1546 = vpop.f32.mrf.mxu0
        %v1547 = vadd.f32 %v1135, %v1546
        %v1548 = vpop.f32.mrf.mxu0
        %v1549 = vadd.f32 %v1139, %v1548
        %v1550 = vpop.f32.mrf.mxu0
        %v1551 = vadd.f32 %v1135, %v1550
        %v1552 = vpop.f32.mrf.mxu0
        %v1553 = vadd.f32 %v1139, %v1552
        %1554 = vmatprep.mubr.bf16.mxu0 0
        %1555 = vmatmul.mubr.bf16.gmra.mxu0 %v1049
        %v1556 = vpop.f32.mrf.mxu0
        %v1557 = vadd.f32 %v1135, %v1556
        %v1558 = vpop.f32.mrf.mxu0
        %v1559 = vadd.f32 %v1139, %v1558
        %v1560 = vpop.f32.mrf.mxu0
        %v1561 = vadd.f32 %v1135, %v1560
        %v1562 = vpop.f32.mrf.mxu0
        %v1563 = vadd.f32 %v1139, %v1562
        %1564 = vmatprep.mubr.bf16.mxu0 0
        %1565 = vmatmul.mubr.bf16.gmra.mxu0 %v1050
        %v1566 = vpop.f32.mrf.mxu0
        %v1567 = vadd.f32 %v1135, %v1566
        %v1568 = vpop.f32.mrf.mxu0
        %v1569 = vadd.f32 %v1139, %v1568
        %v1570 = vpop.f32.mrf.mxu0
        %v1571 = vadd.f32 %v1135, %v1570
        %v1572 = vpop.f32.mrf.mxu0
        %v1573 = vadd.f32 %v1139, %v1572
        %1574 = vmatprep.mubr.bf16.mxu0 0
        %1575 = vmatmul.mubr.bf16.gmra.mxu0 %v1051
        %v1576 = vpop.f32.mrf.mxu0
        %v1577 = vadd.f32 %v1135, %v1576
        %v1578 = vpop.f32.mrf.mxu0
        %v1579 = vadd.f32 %v1139, %v1578
        %v1580 = vpop.f32.mrf.mxu0
        %v1581 = vadd.f32 %v1135, %v1580
        %v1582 = vpop.f32.mrf.mxu0
        %v1583 = vadd.f32 %v1139, %v1582
        %1584 = vmatprep.mubr.bf16.mxu0 0
        %1585 = vmatmul.mubr.bf16.gmra.mxu0 %v1052
        %v1586 = vpop.f32.mrf.mxu0
        %v1587 = vadd.f32 %v1135, %v1586
        %v1588 = vpop.f32.mrf.mxu0
        %v1589 = vadd.f32 %v1139, %v1588
        %v1590 = vpop.f32.mrf.mxu0
        %v1591 = vadd.f32 %v1135, %v1590
        %v1592 = vpop.f32.mrf.mxu0
        %v1593 = vadd.f32 %v1139, %v1592
        %1594 = vmatprep.mubr.bf16.mxu0 0
        %1595 = vmatmul.mubr.bf16.gmra.mxu0 %v1053
        %v1596 = vpop.f32.mrf.mxu0
        %v1597 = vadd.f32 %v1135, %v1596
        %v1598 = vpop.f32.mrf.mxu0
        %v1599 = vadd.f32 %v1139, %v1598
        %v1600 = vpop.f32.mrf.mxu0
        %v1601 = vadd.f32 %v1135, %v1600
        %v1602 = vpop.f32.mrf.mxu0
        %v1603 = vadd.f32 %v1139, %v1602
        %1604 = vmatprep.mubr.bf16.mxu0 0
        %1605 = vmatmul.mubr.bf16.gmra.mxu0 %v1054
        %v1606 = vpop.f32.mrf.mxu0
        %v1607 = vadd.f32 %v1135, %v1606
        %v1608 = vpop.f32.mrf.mxu0
        %v1609 = vadd.f32 %v1139, %v1608
        %v1610 = vpop.f32.mrf.mxu0
        %v1611 = vadd.f32 %v1135, %v1610
        %v1612 = vpop.f32.mrf.mxu0
        %v1613 = vadd.f32 %v1139, %v1612
        %1614 = vmatprep.mubr.bf16.mxu0 0
        %1615 = vmatmul.mubr.bf16.gmra.mxu0 %v1055
        %v1616 = vpop.f32.mrf.mxu0
        %v1617 = vadd.f32 %v1135, %v1616
        %v1618 = vpop.f32.mrf.mxu0
        %v1619 = vadd.f32 %v1139, %v1618
        %v1620 = vpop.f32.mrf.mxu0
        %v1621 = vadd.f32 %v1135, %v1620
        %v1622 = vpop.f32.mrf.mxu0
        %v1623 = vadd.f32 %v1139, %v1622
        %1624 = vmatprep.mubr.bf16.mxu0 0
        %1625 = vmatmul.mubr.bf16.gmra.mxu0 %v1056
        %v1626 = vpop.f32.mrf.mxu0
        %v1627 = vadd.f32 %v1135, %v1626
        %v1628 = vpop.f32.mrf.mxu0
        %v1629 = vadd.f32 %v1139, %v1628
        %v1630 = vpop.f32.mrf.mxu0
        %v1631 = vadd.f32 %v1135, %v1630
        %v1632 = vpop.f32.mrf.mxu0
        %v1633 = vadd.f32 %v1139, %v1632
        %1634 = vmatprep.mubr.bf16.mxu0 0
        %1635 = vmatmul.mubr.bf16.gmra.mxu0 %v1057
        %v1636 = vpop.f32.mrf.mxu0
        %v1637 = vadd.f32 %v1135, %v1636
        %v1638 = vpop.f32.mrf.mxu0
        %v1639 = vadd.f32 %v1139, %v1638
        %v1640 = vpop.f32.mrf.mxu0
        %v1641 = vadd.f32 %v1135, %v1640
        %v1642 = vpop.f32.mrf.mxu0
        %v1643 = vadd.f32 %v1139, %v1642
        %1644 = vmatprep.mubr.bf16.mxu0 0
        %1645 = vmatmul.mubr.bf16.gmra.mxu0 %v1058
        %v1646 = vpop.f32.mrf.mxu0
        %v1647 = vadd.f32 %v1135, %v1646
        %v1648 = vpop.f32.mrf.mxu0
        %v1649 = vadd.f32 %v1139, %v1648
        %v1650 = vpop.f32.mrf.mxu0
        %v1651 = vadd.f32 %v1135, %v1650
        %v1652 = vpop.f32.mrf.mxu0
        %v1653 = vadd.f32 %v1139, %v1652
        %1654 = vmatprep.mubr.bf16.mxu0 0
        %1655 = vmatmul.mubr.bf16.gmra.mxu0 %v1059
        %v1656 = vpop.f32.mrf.mxu0
        %v1657 = vadd.f32 %v1135, %v1656
        %v1658 = vpop.f32.mrf.mxu0
        %v1659 = vadd.f32 %v1139, %v1658
        %v1660 = vpop.f32.mrf.mxu0
        %v1661 = vadd.f32 %v1135, %v1660
        %v1662 = vpop.f32.mrf.mxu0
        %v1663 = vadd.f32 %v1139, %v1662
        %1664 = vmatprep.mubr.bf16.mxu0 0
        %1665 = vmatmul.mubr.bf16.gmra.mxu0 %v1060
        %v1666 = vpop.f32.mrf.mxu0
        %v1667 = vadd.f32 %v1135, %v1666
        %v1668 = vpop.f32.mrf.mxu0
        %v1669 = vadd.f32 %v1139, %v1668
        %v1670 = vpop.f32.mrf.mxu0
        %v1671 = vadd.f32 %v1135, %v1670
        %v1672 = vpop.f32.mrf.mxu0
        %v1673 = vadd.f32 %v1139, %v1672
        %1674 = vmatprep.mubr.bf16.mxu0 0
        %1675 = vmatmul.mubr.bf16.gmra.mxu0 %v1061
        %v1676 = vpop.f32.mrf.mxu0
        %v1677 = vadd.f32 %v1135, %v1676
        %v1678 = vpop.f32.mrf.mxu0
        %v1679 = vadd.f32 %v1139, %v1678
        %v1680 = vpop.f32.mrf.mxu0
        %v1681 = vadd.f32 %v1135, %v1680
        %v1682 = vpop.f32.mrf.mxu0
        %v1683 = vadd.f32 %v1139, %v1682
        %1684 = vmatprep.mubr.bf16.mxu0 0
        %1685 = vmatmul.mubr.bf16.gmra.mxu0 %v1062
        %v1686 = vpop.f32.mrf.mxu0
        %v1687 = vadd.f32 %v1135, %v1686
        %v1688 = vpop.f32.mrf.mxu0
        %v1689 = vadd.f32 %v1139, %v1688
        %v1690 = vpop.f32.mrf.mxu0
        %v1691 = vadd.f32 %v1135, %v1690
        %v1692 = vpop.f32.mrf.mxu0
        %v1693 = vadd.f32 %v1139, %v1692
        %1694 = vmatprep.mubr.bf16.mxu0 0
        %1695 = vmatmul.mubr.bf16.gmra.mxu0 %v1063
        %v1696 = vpop.f32.mrf.mxu0
        %v1697 = vadd.f32 %v1135, %v1696
        %v1698 = vpop.f32.mrf.mxu0
        %v1699 = vadd.f32 %v1139, %v1698
        %v1700 = vpop.f32.mrf.mxu0
        %v1701 = vadd.f32 %v1135, %v1700
        %v1702 = vpop.f32.mrf.mxu0
        %v1703 = vadd.f32 %v1139, %v1702
        %1704 = vmatprep.mubr.bf16.mxu0 0
        %1705 = vmatmul.mubr.bf16.gmra.mxu0 %v1064
        %v1706 = vpop.f32.mrf.mxu0
        %v1707 = vadd.f32 %v1135, %v1706
        %v1708 = vpop.f32.mrf.mxu0
        %v1709 = vadd.f32 %v1139, %v1708
        %v1710 = vpop.f32.mrf.mxu0
        %v1711 = vadd.f32 %v1135, %v1710
        %v1712 = vpop.f32.mrf.mxu0
        %v1713 = vadd.f32 %v1139, %v1712
        %1714 = vmatprep.mubr.bf16.mxu0 0
        %1715 = vmatmul.mubr.bf16.gmra.mxu0 %v1065
        %v1716 = vpop.f32.mrf.mxu0
        %v1717 = vadd.f32 %v1135, %v1716
        %v1718 = vpop.f32.mrf.mxu0
        %v1719 = vadd.f32 %v1139, %v1718
        %v1720 = vpop.f32.mrf.mxu0
        %v1721 = vadd.f32 %v1135, %v1720
        %v1722 = vpop.f32.mrf.mxu0
        %v1723 = vadd.f32 %v1139, %v1722
        %1724 = vdwg.mxu0
        %1725 = vmatprep.subr.bf16.mxu0 %v1423
        %1726 = vmatpush1.bf16.msra.mxu0 %v1422
        %1727 = vmatprep.subr.bf16.mxu0 %v1415
        %1728 = vmatpush1.bf16.msra.mxu0 %v1414
        %1729 = vmatprep.subr.bf16.mxu0 %v1407
        %1730 = vmatpush1.bf16.msra.mxu0 %v1406
        %1731 = vmatprep.subr.bf16.mxu0 %v1399
        %1732 = vmatpush1.bf16.msra.mxu0 %v1398
        %1733 = vmatprep.subr.bf16.mxu0 %v1391
        %1734 = vmatpush1.bf16.msra.mxu0 %v1390
        %1735 = vmatprep.subr.bf16.mxu0 %v1383
        %1736 = vmatpush1.bf16.msra.mxu0 %v1382
        %1737 = vmatprep.subr.bf16.mxu0 %v1375
        %1738 = vmatpush1.bf16.msra.mxu0 %v1374
        %1739 = vmatprep.subr.bf16.mxu0 %v1367
        %1740 = vmatpush1.bf16.msra.mxu0 %v1366
        %1741 = vmatprep.subr.bf16.mxu0 0
        %1742 = vmatpush2.bf16.msra.mxu0 0
        %1743 = vmatprep.subr.bf16.mxu0 0
        %1744 = vmatpush2.bf16.msra.mxu0 0
        %1745 = vmatprep.subr.bf16.mxu0 0
        %1746 = vmatpush2.bf16.msra.mxu0 0
        %1747 = vmatprep.subr.bf16.mxu0 0
        %1748 = vmatpush2.bf16.msra.mxu0 0
        %1749 = vmatprep.subr.bf16.mxu0 0
        %1750 = vmatpush2.bf16.msra.mxu0 0
        %1751 = vmatprep.subr.bf16.mxu0 0
        %1752 = vmatpush2.bf16.msra.mxu0 0
        %1753 = vmatprep.subr.bf16.mxu0 0
        %1754 = vmatpush2.bf16.msra.mxu0 0
        %1755 = vmatprep.subr.bf16.mxu0 0
        %1756 = vmatpush2.bf16.msra.mxu0 0
        %1757 = vmatprep.mubr.bf16.mxu0 0
        %1758 = vmatmul.mubr.bf16.gmra.mxu0 %v1046
        %v1759 = vpop.f32.mrf.mxu0
        %v1760 = vadd.f32 %v1143, %v1759
        %v1761 = vpop.f32.mrf.mxu0
        %v1762 = vadd.f32 %v1147, %v1761
        %v1763 = vpop.f32.mrf.mxu0
        %v1764 = vadd.f32 %v1143, %v1763
        %v1765 = vpop.f32.mrf.mxu0
        %v1766 = vadd.f32 %v1147, %v1765
        %1767 = vmatprep.mubr.bf16.mxu0 0
        %1768 = vmatmul.mubr.bf16.gmra.mxu0 %v1047
        %v1769 = vpop.f32.mrf.mxu0
        %v1770 = vadd.f32 %v1143, %v1769
        %v1771 = vpop.f32.mrf.mxu0
        %v1772 = vadd.f32 %v1147, %v1771
        %v1773 = vpop.f32.mrf.mxu0
        %v1774 = vadd.f32 %v1143, %v1773
        %v1775 = vpop.f32.mrf.mxu0
        %v1776 = vadd.f32 %v1147, %v1775
        %1777 = vmatprep.mubr.bf16.mxu0 0
        %1778 = vmatmul.mubr.bf16.gmra.mxu0 %v1048
        %v1779 = vpop.f32.mrf.mxu0
        %v1780 = vadd.f32 %v1143, %v1779
        %v1781 = vpop.f32.mrf.mxu0
        %v1782 = vadd.f32 %v1147, %v1781
        %v1783 = vpop.f32.mrf.mxu0
        %v1784 = vadd.f32 %v1143, %v1783
        %v1785 = vpop.f32.mrf.mxu0
        %v1786 = vadd.f32 %v1147, %v1785
        %1787 = vmatprep.mubr.bf16.mxu0 0
        %1788 = vmatmul.mubr.bf16.gmra.mxu0 %v1049
        %v1789 = vpop.f32.mrf.mxu0
        %v1790 = vadd.f32 %v1143, %v1789
        %v1791 = vpop.f32.mrf.mxu0
        %v1792 = vadd.f32 %v1147, %v1791
        %v1793 = vpop.f32.mrf.mxu0
        %v1794 = vadd.f32 %v1143, %v1793
        %v1795 = vpop.f32.mrf.mxu0
        %v1796 = vadd.f32 %v1147, %v1795
        %1797 = vmatprep.mubr.bf16.mxu0 0
        %1798 = vmatmul.mubr.bf16.gmra.mxu0 %v1050
        %v1799 = vpop.f32.mrf.mxu0
        %v1800 = vadd.f32 %v1143, %v1799
        %v1801 = vpop.f32.mrf.mxu0
        %v1802 = vadd.f32 %v1147, %v1801
        %v1803 = vpop.f32.mrf.mxu0
        %v1804 = vadd.f32 %v1143, %v1803
        %v1805 = vpop.f32.mrf.mxu0
        %v1806 = vadd.f32 %v1147, %v1805
        %1807 = vmatprep.mubr.bf16.mxu0 0
        %1808 = vmatmul.mubr.bf16.gmra.mxu0 %v1051
        %v1809 = vpop.f32.mrf.mxu0
        %v1810 = vadd.f32 %v1143, %v1809
        %v1811 = vpop.f32.mrf.mxu0
        %v1812 = vadd.f32 %v1147, %v1811
        %v1813 = vpop.f32.mrf.mxu0
        %v1814 = vadd.f32 %v1143, %v1813
        %v1815 = vpop.f32.mrf.mxu0
        %v1816 = vadd.f32 %v1147, %v1815
        %1817 = vmatprep.mubr.bf16.mxu0 0
        %1818 = vmatmul.mubr.bf16.gmra.mxu0 %v1052
        %v1819 = vpop.f32.mrf.mxu0
        %v1820 = vadd.f32 %v1143, %v1819
        %v1821 = vpop.f32.mrf.mxu0
        %v1822 = vadd.f32 %v1147, %v1821
        %v1823 = vpop.f32.mrf.mxu0
        %v1824 = vadd.f32 %v1143, %v1823
        %v1825 = vpop.f32.mrf.mxu0
        %v1826 = vadd.f32 %v1147, %v1825
        %1827 = vmatprep.mubr.bf16.mxu0 0
        %1828 = vmatmul.mubr.bf16.gmra.mxu0 %v1053
        %v1829 = vpop.f32.mrf.mxu0
        %v1830 = vadd.f32 %v1143, %v1829
        %v1831 = vpop.f32.mrf.mxu0
        %v1832 = vadd.f32 %v1147, %v1831
        %v1833 = vpop.f32.mrf.mxu0
        %v1834 = vadd.f32 %v1143, %v1833
        %v1835 = vpop.f32.mrf.mxu0
        %v1836 = vadd.f32 %v1147, %v1835
        %1837 = vmatprep.mubr.bf16.mxu0 0
        %1838 = vmatmul.mubr.bf16.gmra.mxu0 %v1054
        %v1839 = vpop.f32.mrf.mxu0
        %v1840 = vadd.f32 %v1143, %v1839
        %v1841 = vpop.f32.mrf.mxu0
        %v1842 = vadd.f32 %v1147, %v1841
        %v1843 = vpop.f32.mrf.mxu0
        %v1844 = vadd.f32 %v1143, %v1843
        %v1845 = vpop.f32.mrf.mxu0
        %v1846 = vadd.f32 %v1147, %v1845
        %1847 = vmatprep.mubr.bf16.mxu0 0
        %1848 = vmatmul.mubr.bf16.gmra.mxu0 %v1055
        %v1849 = vpop.f32.mrf.mxu0
        %v1850 = vadd.f32 %v1143, %v1849
        %v1851 = vpop.f32.mrf.mxu0
        %v1852 = vadd.f32 %v1147, %v1851
        %v1853 = vpop.f32.mrf.mxu0
        %v1854 = vadd.f32 %v1143, %v1853
        %v1855 = vpop.f32.mrf.mxu0
        %v1856 = vadd.f32 %v1147, %v1855
        %1857 = vmatprep.mubr.bf16.mxu0 0
        %1858 = vmatmul.mubr.bf16.gmra.mxu0 %v1056
        %v1859 = vpop.f32.mrf.mxu0
        %v1860 = vadd.f32 %v1143, %v1859
        %v1861 = vpop.f32.mrf.mxu0
        %v1862 = vadd.f32 %v1147, %v1861
        %v1863 = vpop.f32.mrf.mxu0
        %v1864 = vadd.f32 %v1143, %v1863
        %v1865 = vpop.f32.mrf.mxu0
        %v1866 = vadd.f32 %v1147, %v1865
        %1867 = vmatprep.mubr.bf16.mxu0 0
        %1868 = vmatmul.mubr.bf16.gmra.mxu0 %v1057
        %v1869 = vpop.f32.mrf.mxu0
        %v1870 = vadd.f32 %v1143, %v1869
        %v1871 = vpop.f32.mrf.mxu0
        %v1872 = vadd.f32 %v1147, %v1871
        %v1873 = vpop.f32.mrf.mxu0
        %v1874 = vadd.f32 %v1143, %v1873
        %v1875 = vpop.f32.mrf.mxu0
        %v1876 = vadd.f32 %v1147, %v1875
        %1877 = vmatprep.mubr.bf16.mxu0 0
        %1878 = vmatmul.mubr.bf16.gmra.mxu0 %v1058
        %v1879 = vpop.f32.mrf.mxu0
        %v1880 = vadd.f32 %v1143, %v1879
        %v1881 = vpop.f32.mrf.mxu0
        %v1882 = vadd.f32 %v1147, %v1881
        %v1883 = vpop.f32.mrf.mxu0
        %v1884 = vadd.f32 %v1143, %v1883
        %v1885 = vpop.f32.mrf.mxu0
        %v1886 = vadd.f32 %v1147, %v1885
        %1887 = vmatprep.mubr.bf16.mxu0 0
        %1888 = vmatmul.mubr.bf16.gmra.mxu0 %v1059
        %v1889 = vpop.f32.mrf.mxu0
        %v1890 = vadd.f32 %v1143, %v1889
        %v1891 = vpop.f32.mrf.mxu0
        %v1892 = vadd.f32 %v1147, %v1891
        %v1893 = vpop.f32.mrf.mxu0
        %v1894 = vadd.f32 %v1143, %v1893
        %v1895 = vpop.f32.mrf.mxu0
        %v1896 = vadd.f32 %v1147, %v1895
        %1897 = vmatprep.mubr.bf16.mxu0 0
        %1898 = vmatmul.mubr.bf16.gmra.mxu0 %v1060
        %v1899 = vpop.f32.mrf.mxu0
        %v1900 = vadd.f32 %v1143, %v1899
        %v1901 = vpop.f32.mrf.mxu0
        %v1902 = vadd.f32 %v1147, %v1901
        %v1903 = vpop.f32.mrf.mxu0
        %v1904 = vadd.f32 %v1143, %v1903
        %v1905 = vpop.f32.mrf.mxu0
        %v1906 = vadd.f32 %v1147, %v1905
        %1907 = vmatprep.mubr.bf16.mxu0 0
        %1908 = vmatmul.mubr.bf16.gmra.mxu0 %v1061
        %v1909 = vpop.f32.mrf.mxu0
        %v1910 = vadd.f32 %v1143, %v1909
        %v1911 = vpop.f32.mrf.mxu0
        %v1912 = vadd.f32 %v1147, %v1911
        %v1913 = vpop.f32.mrf.mxu0
        %v1914 = vadd.f32 %v1143, %v1913
        %v1915 = vpop.f32.mrf.mxu0
        %v1916 = vadd.f32 %v1147, %v1915
        %1917 = vmatprep.mubr.bf16.mxu0 0
        %1918 = vmatmul.mubr.bf16.gmra.mxu0 %v1062
        %v1919 = vpop.f32.mrf.mxu0
        %v1920 = vadd.f32 %v1143, %v1919
        %v1921 = vpop.f32.mrf.mxu0
        %v1922 = vadd.f32 %v1147, %v1921
        %v1923 = vpop.f32.mrf.mxu0
        %v1924 = vadd.f32 %v1143, %v1923
        %v1925 = vpop.f32.mrf.mxu0
        %v1926 = vadd.f32 %v1147, %v1925
        %1927 = vmatprep.mubr.bf16.mxu0 0
        %1928 = vmatmul.mubr.bf16.gmra.mxu0 %v1063
        %v1929 = vpop.f32.mrf.mxu0
        %v1930 = vadd.f32 %v1143, %v1929
        %v1931 = vpop.f32.mrf.mxu0
        %v1932 = vadd.f32 %v1147, %v1931
        %v1933 = vpop.f32.mrf.mxu0
        %v1934 = vadd.f32 %v1143, %v1933
        %v1935 = vpop.f32.mrf.mxu0
        %v1936 = vadd.f32 %v1147, %v1935
        %1937 = vmatprep.mubr.bf16.mxu0 0
        %1938 = vmatmul.mubr.bf16.gmra.mxu0 %v1064
        %v1939 = vpop.f32.mrf.mxu0
        %v1940 = vadd.f32 %v1143, %v1939
        %v1941 = vpop.f32.mrf.mxu0
        %v1942 = vadd.f32 %v1147, %v1941
        %v1943 = vpop.f32.mrf.mxu0
        %v1944 = vadd.f32 %v1143, %v1943
        %v1945 = vpop.f32.mrf.mxu0
        %v1946 = vadd.f32 %v1147, %v1945
        %1947 = vmatprep.mubr.bf16.mxu0 0
        %1948 = vmatmul.mubr.bf16.gmra.mxu0 %v1065
        %v1949 = vpop.f32.mrf.mxu0
        %v1950 = vadd.f32 %v1143, %v1949
        %v1951 = vpop.f32.mrf.mxu0
        %v1952 = vadd.f32 %v1147, %v1951
        %v1953 = vpop.f32.mrf.mxu0
        %v1954 = vadd.f32 %v1143, %v1953
        %v1955 = vpop.f32.mrf.mxu0
        %v1956 = vadd.f32 %v1147, %v1955
        %1957 = vdwg.mxu0
        %1958 = vmatprep.subr.bf16.mxu0 %v1425
        %1959 = vmatpush1.bf16.msra.mxu0 %v1424
        %1960 = vmatprep.subr.bf16.mxu0 %v1417
        %1961 = vmatpush1.bf16.msra.mxu0 %v1416
        %1962 = vmatprep.subr.bf16.mxu0 %v1409
        %1963 = vmatpush1.bf16.msra.mxu0 %v1408
        %1964 = vmatprep.subr.bf16.mxu0 %v1401
        %1965 = vmatpush1.bf16.msra.mxu0 %v1400
        %1966 = vmatprep.subr.bf16.mxu0 %v1393
        %1967 = vmatpush1.bf16.msra.mxu0 %v1392
        %1968 = vmatprep.subr.bf16.mxu0 %v1385
        %1969 = vmatpush1.bf16.msra.mxu0 %v1384
        %1970 = vmatprep.subr.bf16.mxu0 %v1377
        %1971 = vmatpush1.bf16.msra.mxu0 %v1376
        %1972 = vmatprep.subr.bf16.mxu0 %v1369
        %1973 = vmatpush1.bf16.msra.mxu0 %v1368
        %1974 = vmatprep.subr.bf16.mxu0 0
        %1975 = vmatpush2.bf16.msra.mxu0 0
        %1976 = vmatprep.subr.bf16.mxu0 0
        %1977 = vmatpush2.bf16.msra.mxu0 0
        %1978 = vmatprep.subr.bf16.mxu0 0
        %1979 = vmatpush2.bf16.msra.mxu0 0
        %1980 = vmatprep.subr.bf16.mxu0 0
        %1981 = vmatpush2.bf16.msra.mxu0 0
        %1982 = vmatprep.subr.bf16.mxu0 0
        %1983 = vmatpush2.bf16.msra.mxu0 0
        %1984 = vmatprep.subr.bf16.mxu0 0
        %1985 = vmatpush2.bf16.msra.mxu0 0
        %1986 = vmatprep.subr.bf16.mxu0 0
        %1987 = vmatpush2.bf16.msra.mxu0 0
        %1988 = vmatprep.subr.bf16.mxu0 0
        %1989 = vmatpush2.bf16.msra.mxu0 0
        %1990 = vmatprep.mubr.bf16.mxu0 0
        %1991 = vmatmul.mubr.bf16.gmra.mxu0 %v1046
        %v1992 = vpop.f32.mrf.mxu0
        %v1993 = vadd.f32 %v1151, %v1992
        %v1994 = vpop.f32.mrf.mxu0
        %v1995 = vadd.f32 %v1155, %v1994
        %v1996 = vpop.f32.mrf.mxu0
        %v1997 = vadd.f32 %v1151, %v1996
        %v1998 = vpop.f32.mrf.mxu0
        %v1999 = vadd.f32 %v1155, %v1998
        %2000 = vmatprep.mubr.bf16.mxu0 0
        %2001 = vmatmul.mubr.bf16.gmra.mxu0 %v1047
        %v2002 = vpop.f32.mrf.mxu0
        %v2003 = vadd.f32 %v1151, %v2002
        %v2004 = vpop.f32.mrf.mxu0
        %v2005 = vadd.f32 %v1155, %v2004
        %v2006 = vpop.f32.mrf.mxu0
        %v2007 = vadd.f32 %v1151, %v2006
        %v2008 = vpop.f32.mrf.mxu0
        %v2009 = vadd.f32 %v1155, %v2008
        %2010 = vmatprep.mubr.bf16.mxu0 0
        %2011 = vmatmul.mubr.bf16.gmra.mxu0 %v1048
        %v2012 = vpop.f32.mrf.mxu0
        %v2013 = vadd.f32 %v1151, %v2012
        %v2014 = vpop.f32.mrf.mxu0
        %v2015 = vadd.f32 %v1155, %v2014
        %v2016 = vpop.f32.mrf.mxu0
        %v2017 = vadd.f32 %v1151, %v2016
        %v2018 = vpop.f32.mrf.mxu0
        %v2019 = vadd.f32 %v1155, %v2018
        %2020 = vmatprep.mubr.bf16.mxu0 0
        %2021 = vmatmul.mubr.bf16.gmra.mxu0 %v1049
        %v2022 = vpop.f32.mrf.mxu0
        %v2023 = vadd.f32 %v1151, %v2022
        %v2024 = vpop.f32.mrf.mxu0
        %v2025 = vadd.f32 %v1155, %v2024
        %v2026 = vpop.f32.mrf.mxu0
        %v2027 = vadd.f32 %v1151, %v2026
        %v2028 = vpop.f32.mrf.mxu0
        %v2029 = vadd.f32 %v1155, %v2028
        %2030 = vmatprep.mubr.bf16.mxu0 0
        %2031 = vmatmul.mubr.bf16.gmra.mxu0 %v1050
        %v2032 = vpop.f32.mrf.mxu0
        %v2033 = vadd.f32 %v1151, %v2032
        %v2034 = vpop.f32.mrf.mxu0
        %v2035 = vadd.f32 %v1155, %v2034
        %v2036 = vpop.f32.mrf.mxu0
        %v2037 = vadd.f32 %v1151, %v2036
        %v2038 = vpop.f32.mrf.mxu0
        %v2039 = vadd.f32 %v1155, %v2038
        %2040 = vmatprep.mubr.bf16.mxu0 0
        %2041 = vmatmul.mubr.bf16.gmra.mxu0 %v1051
        %v2042 = vpop.f32.mrf.mxu0
        %v2043 = vadd.f32 %v1151, %v2042
        %v2044 = vpop.f32.mrf.mxu0
        %v2045 = vadd.f32 %v1155, %v2044
        %v2046 = vpop.f32.mrf.mxu0
        %v2047 = vadd.f32 %v1151, %v2046
        %v2048 = vpop.f32.mrf.mxu0
        %v2049 = vadd.f32 %v1155, %v2048
        %2050 = vmatprep.mubr.bf16.mxu0 0
        %2051 = vmatmul.mubr.bf16.gmra.mxu0 %v1052
        %v2052 = vpop.f32.mrf.mxu0
        %v2053 = vadd.f32 %v1151, %v2052
        %v2054 = vpop.f32.mrf.mxu0
        %v2055 = vadd.f32 %v1155, %v2054
        %v2056 = vpop.f32.mrf.mxu0
        %v2057 = vadd.f32 %v1151, %v2056
        %v2058 = vpop.f32.mrf.mxu0
        %v2059 = vadd.f32 %v1155, %v2058
        %2060 = vmatprep.mubr.bf16.mxu0 0
        %2061 = vmatmul.mubr.bf16.gmra.mxu0 %v1053
        %v2062 = vpop.f32.mrf.mxu0
        %v2063 = vadd.f32 %v1151, %v2062
        %v2064 = vpop.f32.mrf.mxu0
        %v2065 = vadd.f32 %v1155, %v2064
        %v2066 = vpop.f32.mrf.mxu0
        %v2067 = vadd.f32 %v1151, %v2066
        %v2068 = vpop.f32.mrf.mxu0
        %v2069 = vadd.f32 %v1155, %v2068
        %2070 = vmatprep.mubr.bf16.mxu0 0
        %2071 = vmatmul.mubr.bf16.gmra.mxu0 %v1054
        %v2072 = vpop.f32.mrf.mxu0
        %v2073 = vadd.f32 %v1151, %v2072
        %v2074 = vpop.f32.mrf.mxu0
        %v2075 = vadd.f32 %v1155, %v2074
        %v2076 = vpop.f32.mrf.mxu0
        %v2077 = vadd.f32 %v1151, %v2076
        %v2078 = vpop.f32.mrf.mxu0
        %v2079 = vadd.f32 %v1155, %v2078
        %2080 = vmatprep.mubr.bf16.mxu0 0
        %2081 = vmatmul.mubr.bf16.gmra.mxu0 %v1055
        %v2082 = vpop.f32.mrf.mxu0
        %v2083 = vadd.f32 %v1151, %v2082
        %v2084 = vpop.f32.mrf.mxu0
        %v2085 = vadd.f32 %v1155, %v2084
        %v2086 = vpop.f32.mrf.mxu0
        %v2087 = vadd.f32 %v1151, %v2086
        %v2088 = vpop.f32.mrf.mxu0
        %v2089 = vadd.f32 %v1155, %v2088
        %2090 = vmatprep.mubr.bf16.mxu0 0
        %2091 = vmatmul.mubr.bf16.gmra.mxu0 %v1056
        %v2092 = vpop.f32.mrf.mxu0
        %v2093 = vadd.f32 %v1151, %v2092
        %v2094 = vpop.f32.mrf.mxu0
        %v2095 = vadd.f32 %v1155, %v2094
        %v2096 = vpop.f32.mrf.mxu0
        %v2097 = vadd.f32 %v1151, %v2096
        %v2098 = vpop.f32.mrf.mxu0
        %v2099 = vadd.f32 %v1155, %v2098
        %2100 = vmatprep.mubr.bf16.mxu0 0
        %2101 = vmatmul.mubr.bf16.gmra.mxu0 %v1057
        %v2102 = vpop.f32.mrf.mxu0
        %v2103 = vadd.f32 %v1151, %v2102
        %v2104 = vpop.f32.mrf.mxu0
        %v2105 = vadd.f32 %v1155, %v2104
        %v2106 = vpop.f32.mrf.mxu0
        %v2107 = vadd.f32 %v1151, %v2106
        %v2108 = vpop.f32.mrf.mxu0
        %v2109 = vadd.f32 %v1155, %v2108
        %2110 = vmatprep.mubr.bf16.mxu0 0
        %2111 = vmatmul.mubr.bf16.gmra.mxu0 %v1058
        %v2112 = vpop.f32.mrf.mxu0
        %v2113 = vadd.f32 %v1151, %v2112
        %v2114 = vpop.f32.mrf.mxu0
        %v2115 = vadd.f32 %v1155, %v2114
        %v2116 = vpop.f32.mrf.mxu0
        %v2117 = vadd.f32 %v1151, %v2116
        %v2118 = vpop.f32.mrf.mxu0
        %v2119 = vadd.f32 %v1155, %v2118
        %2120 = vmatprep.mubr.bf16.mxu0 0
        %2121 = vmatmul.mubr.bf16.gmra.mxu0 %v1059
        %v2122 = vpop.f32.mrf.mxu0
        %v2123 = vadd.f32 %v1151, %v2122
        %v2124 = vpop.f32.mrf.mxu0
        %v2125 = vadd.f32 %v1155, %v2124
        %v2126 = vpop.f32.mrf.mxu0
        %v2127 = vadd.f32 %v1151, %v2126
        %v2128 = vpop.f32.mrf.mxu0
        %v2129 = vadd.f32 %v1155, %v2128
        %2130 = vmatprep.mubr.bf16.mxu0 0
        %2131 = vmatmul.mubr.bf16.gmra.mxu0 %v1060
        %v2132 = vpop.f32.mrf.mxu0
        %v2133 = vadd.f32 %v1151, %v2132
        %v2134 = vpop.f32.mrf.mxu0
        %v2135 = vadd.f32 %v1155, %v2134
        %v2136 = vpop.f32.mrf.mxu0
        %v2137 = vadd.f32 %v1151, %v2136
        %v2138 = vpop.f32.mrf.mxu0
        %v2139 = vadd.f32 %v1155, %v2138
        %2140 = vmatprep.mubr.bf16.mxu0 0
        %2141 = vmatmul.mubr.bf16.gmra.mxu0 %v1061
        %v2142 = vpop.f32.mrf.mxu0
        %v2143 = vadd.f32 %v1151, %v2142
        %v2144 = vpop.f32.mrf.mxu0
        %v2145 = vadd.f32 %v1155, %v2144
        %v2146 = vpop.f32.mrf.mxu0
        %v2147 = vadd.f32 %v1151, %v2146
        %v2148 = vpop.f32.mrf.mxu0
        %v2149 = vadd.f32 %v1155, %v2148
        %2150 = vmatprep.mubr.bf16.mxu0 0
        %2151 = vmatmul.mubr.bf16.gmra.mxu0 %v1062
        %v2152 = vpop.f32.mrf.mxu0
        %v2153 = vadd.f32 %v1151, %v2152
        %v2154 = vpop.f32.mrf.mxu0
        %v2155 = vadd.f32 %v1155, %v2154
        %v2156 = vpop.f32.mrf.mxu0
        %v2157 = vadd.f32 %v1151, %v2156
        %v2158 = vpop.f32.mrf.mxu0
        %v2159 = vadd.f32 %v1155, %v2158
        %2160 = vmatprep.mubr.bf16.mxu0 0
        %2161 = vmatmul.mubr.bf16.gmra.mxu0 %v1063
        %v2162 = vpop.f32.mrf.mxu0
        %v2163 = vadd.f32 %v1151, %v2162
        %v2164 = vpop.f32.mrf.mxu0
        %v2165 = vadd.f32 %v1155, %v2164
        %v2166 = vpop.f32.mrf.mxu0
        %v2167 = vadd.f32 %v1151, %v2166
        %v2168 = vpop.f32.mrf.mxu0
        %v2169 = vadd.f32 %v1155, %v2168
        %2170 = vmatprep.mubr.bf16.mxu0 0
        %2171 = vmatmul.mubr.bf16.gmra.mxu0 %v1064
        %v2172 = vpop.f32.mrf.mxu0
        %v2173 = vadd.f32 %v1151, %v2172
        %v2174 = vpop.f32.mrf.mxu0
        %v2175 = vadd.f32 %v1155, %v2174
        %v2176 = vpop.f32.mrf.mxu0
        %v2177 = vadd.f32 %v1151, %v2176
        %v2178 = vpop.f32.mrf.mxu0
        %v2179 = vadd.f32 %v1155, %v2178
        %2180 = vmatprep.mubr.bf16.mxu0 0
        %2181 = vmatmul.mubr.bf16.gmra.mxu0 %v1065
        %v2182 = vpop.f32.mrf.mxu0
        %v2183 = vadd.f32 %v1151, %v2182
        %v2184 = vpop.f32.mrf.mxu0
        %v2185 = vadd.f32 %v1155, %v2184
        %v2186 = vpop.f32.mrf.mxu0
        %v2187 = vadd.f32 %v1151, %v2186
        %v2188 = vpop.f32.mrf.mxu0
        %v2189 = vadd.f32 %v1155, %v2188
        %2190 = vdwg.mxu0
        %2191 = vmatprep.subr.bf16.mxu0 %v1427
        %2192 = vmatpush1.bf16.msra.mxu0 %v1426
        %2193 = vmatprep.subr.bf16.mxu0 %v1419
        %2194 = vmatpush1.bf16.msra.mxu0 %v1418
        %2195 = vmatprep.subr.bf16.mxu0 %v1411
        %2196 = vmatpush1.bf16.msra.mxu0 %v1410
        %2197 = vmatprep.subr.bf16.mxu0 %v1403
        %2198 = vmatpush1.bf16.msra.mxu0 %v1402
        %2199 = vmatprep.subr.bf16.mxu0 %v1395
        %2200 = vmatpush1.bf16.msra.mxu0 %v1394
        %2201 = vmatprep.subr.bf16.mxu0 %v1387
        %2202 = vmatpush1.bf16.msra.mxu0 %v1386
        %2203 = vmatprep.subr.bf16.mxu0 %v1379
        %2204 = vmatpush1.bf16.msra.mxu0 %v1378
        %2205 = vmatprep.subr.bf16.mxu0 %v1371
        %2206 = vmatpush1.bf16.msra.mxu0 %v1370
        %2207 = vmatprep.subr.bf16.mxu0 0
        %2208 = vmatpush2.bf16.msra.mxu0 0
        %2209 = vmatprep.subr.bf16.mxu0 0
        %2210 = vmatpush2.bf16.msra.mxu0 0
        %2211 = vmatprep.subr.bf16.mxu0 0
        %2212 = vmatpush2.bf16.msra.mxu0 0
        %2213 = vmatprep.subr.bf16.mxu0 0
        %2214 = vmatpush2.bf16.msra.mxu0 0
        %2215 = vmatprep.subr.bf16.mxu0 0
        %2216 = vmatpush2.bf16.msra.mxu0 0
        %2217 = vmatprep.subr.bf16.mxu0 0
        %2218 = vmatpush2.bf16.msra.mxu0 0
        %2219 = vmatprep.subr.bf16.mxu0 0
        %2220 = vmatpush2.bf16.msra.mxu0 0
        %2221 = vmatprep.subr.bf16.mxu0 0
        %2222 = vmatpush2.bf16.msra.mxu0 0
        %2223 = vmatprep.mubr.bf16.mxu0 0
        %2224 = vmatmul.mubr.bf16.gmra.mxu0 %v1046
        %v2225 = vpop.f32.mrf.mxu0
        %v2226 = vadd.f32 %v1159, %v2225
        %v2227 = vpop.f32.mrf.mxu0
        %v2228 = vadd.f32 %v1163, %v2227
        %v2229 = vpop.f32.mrf.mxu0
        %v2230 = vadd.f32 %v1159, %v2229
        %v2231 = vpop.f32.mrf.mxu0
        %v2232 = vadd.f32 %v1163, %v2231
        %2233 = vmatprep.mubr.bf16.mxu0 0
        %2234 = vmatmul.mubr.bf16.gmra.mxu0 %v1047
        %v2235 = vpop.f32.mrf.mxu0
        %v2236 = vadd.f32 %v1159, %v2235
        %v2237 = vpop.f32.mrf.mxu0
        %v2238 = vadd.f32 %v1163, %v2237
        %v2239 = vpop.f32.mrf.mxu0
        %v2240 = vadd.f32 %v1159, %v2239
        %v2241 = vpop.f32.mrf.mxu0
        %v2242 = vadd.f32 %v1163, %v2241
        %2243 = vmatprep.mubr.bf16.mxu0 0
        %2244 = vmatmul.mubr.bf16.gmra.mxu0 %v1048
        %v2245 = vpop.f32.mrf.mxu0
        %v2246 = vadd.f32 %v1159, %v2245
        %v2247 = vpop.f32.mrf.mxu0
        %v2248 = vadd.f32 %v1163, %v2247
        %v2249 = vpop.f32.mrf.mxu0
        %v2250 = vadd.f32 %v1159, %v2249
        %v2251 = vpop.f32.mrf.mxu0
        %v2252 = vadd.f32 %v1163, %v2251
        %2253 = vmatprep.mubr.bf16.mxu0 0
        %2254 = vmatmul.mubr.bf16.gmra.mxu0 %v1049
        %v2255 = vpop.f32.mrf.mxu0
        %v2256 = vadd.f32 %v1159, %v2255
        %v2257 = vpop.f32.mrf.mxu0
        %v2258 = vadd.f32 %v1163, %v2257
        %v2259 = vpop.f32.mrf.mxu0
        %v2260 = vadd.f32 %v1159, %v2259
        %v2261 = vpop.f32.mrf.mxu0
        %v2262 = vadd.f32 %v1163, %v2261
        %2263 = vmatprep.mubr.bf16.mxu0 0
        %2264 = vmatmul.mubr.bf16.gmra.mxu0 %v1050
        %v2265 = vpop.f32.mrf.mxu0
        %v2266 = vadd.f32 %v1159, %v2265
        %v2267 = vpop.f32.mrf.mxu0
        %v2268 = vadd.f32 %v1163, %v2267
        %v2269 = vpop.f32.mrf.mxu0
        %v2270 = vadd.f32 %v1159, %v2269
        %v2271 = vpop.f32.mrf.mxu0
        %v2272 = vadd.f32 %v1163, %v2271
        %2273 = vmatprep.mubr.bf16.mxu0 0
        %2274 = vmatmul.mubr.bf16.gmra.mxu0 %v1051
        %v2275 = vpop.f32.mrf.mxu0
        %v2276 = vadd.f32 %v1159, %v2275
        %v2277 = vpop.f32.mrf.mxu0
        %v2278 = vadd.f32 %v1163, %v2277
        %v2279 = vpop.f32.mrf.mxu0
        %v2280 = vadd.f32 %v1159, %v2279
        %v2281 = vpop.f32.mrf.mxu0
        %v2282 = vadd.f32 %v1163, %v2281
        %2283 = vmatprep.mubr.bf16.mxu0 0
        %2284 = vmatmul.mubr.bf16.gmra.mxu0 %v1052
        %v2285 = vpop.f32.mrf.mxu0
        %v2286 = vadd.f32 %v1159, %v2285
        %v2287 = vpop.f32.mrf.mxu0
        %v2288 = vadd.f32 %v1163, %v2287
        %v2289 = vpop.f32.mrf.mxu0
        %v2290 = vadd.f32 %v1159, %v2289
        %v2291 = vpop.f32.mrf.mxu0
        %v2292 = vadd.f32 %v1163, %v2291
        %2293 = vmatprep.mubr.bf16.mxu0 0
        %2294 = vmatmul.mubr.bf16.gmra.mxu0 %v1053
        %v2295 = vpop.f32.mrf.mxu0
        %v2296 = vadd.f32 %v1159, %v2295
        %v2297 = vpop.f32.mrf.mxu0
        %v2298 = vadd.f32 %v1163, %v2297
        %v2299 = vpop.f32.mrf.mxu0
        %v2300 = vadd.f32 %v1159, %v2299
        %v2301 = vpop.f32.mrf.mxu0
        %v2302 = vadd.f32 %v1163, %v2301
        %2303 = vmatprep.mubr.bf16.mxu0 0
        %2304 = vmatmul.mubr.bf16.gmra.mxu0 %v1054
        %v2305 = vpop.f32.mrf.mxu0
        %v2306 = vadd.f32 %v1159, %v2305
        %v2307 = vpop.f32.mrf.mxu0
        %v2308 = vadd.f32 %v1163, %v2307
        %v2309 = vpop.f32.mrf.mxu0
        %v2310 = vadd.f32 %v1159, %v2309
        %v2311 = vpop.f32.mrf.mxu0
        %v2312 = vadd.f32 %v1163, %v2311
        %2313 = vmatprep.mubr.bf16.mxu0 0
        %2314 = vmatmul.mubr.bf16.gmra.mxu0 %v1055
        %v2315 = vpop.f32.mrf.mxu0
        %v2316 = vadd.f32 %v1159, %v2315
        %v2317 = vpop.f32.mrf.mxu0
        %v2318 = vadd.f32 %v1163, %v2317
        %v2319 = vpop.f32.mrf.mxu0
        %v2320 = vadd.f32 %v1159, %v2319
        %v2321 = vpop.f32.mrf.mxu0
        %v2322 = vadd.f32 %v1163, %v2321
        %2323 = vmatprep.mubr.bf16.mxu0 0
        %2324 = vmatmul.mubr.bf16.gmra.mxu0 %v1056
        %v2325 = vpop.f32.mrf.mxu0
        %v2326 = vadd.f32 %v1159, %v2325
        %v2327 = vpop.f32.mrf.mxu0
        %v2328 = vadd.f32 %v1163, %v2327
        %v2329 = vpop.f32.mrf.mxu0
        %v2330 = vadd.f32 %v1159, %v2329
        %v2331 = vpop.f32.mrf.mxu0
        %v2332 = vadd.f32 %v1163, %v2331
        %2333 = vmatprep.mubr.bf16.mxu0 0
        %2334 = vmatmul.mubr.bf16.gmra.mxu0 %v1057
        %v2335 = vpop.f32.mrf.mxu0
        %v2336 = vadd.f32 %v1159, %v2335
        %v2337 = vpop.f32.mrf.mxu0
        %v2338 = vadd.f32 %v1163, %v2337
        %v2339 = vpop.f32.mrf.mxu0
        %v2340 = vadd.f32 %v1159, %v2339
        %v2341 = vpop.f32.mrf.mxu0
        %v2342 = vadd.f32 %v1163, %v2341
        %2343 = vmatprep.mubr.bf16.mxu0 0
        %2344 = vmatmul.mubr.bf16.gmra.mxu0 %v1058
        %v2345 = vpop.f32.mrf.mxu0
        %v2346 = vadd.f32 %v1159, %v2345
        %v2347 = vpop.f32.mrf.mxu0
        %v2348 = vadd.f32 %v1163, %v2347
        %v2349 = vpop.f32.mrf.mxu0
        %v2350 = vadd.f32 %v1159, %v2349
        %v2351 = vpop.f32.mrf.mxu0
        %v2352 = vadd.f32 %v1163, %v2351
        %2353 = vmatprep.mubr.bf16.mxu0 0
        %2354 = vmatmul.mubr.bf16.gmra.mxu0 %v1059
        %v2355 = vpop.f32.mrf.mxu0
        %v2356 = vadd.f32 %v1159, %v2355
        %v2357 = vpop.f32.mrf.mxu0
        %v2358 = vadd.f32 %v1163, %v2357
        %v2359 = vpop.f32.mrf.mxu0
        %v2360 = vadd.f32 %v1159, %v2359
        %v2361 = vpop.f32.mrf.mxu0
        %v2362 = vadd.f32 %v1163, %v2361
        %2363 = vmatprep.mubr.bf16.mxu0 0
        %2364 = vmatmul.mubr.bf16.gmra.mxu0 %v1060
        %v2365 = vpop.f32.mrf.mxu0
        %v2366 = vadd.f32 %v1159, %v2365
        %v2367 = vpop.f32.mrf.mxu0
        %v2368 = vadd.f32 %v1163, %v2367
        %v2369 = vpop.f32.mrf.mxu0
        %v2370 = vadd.f32 %v1159, %v2369
        %v2371 = vpop.f32.mrf.mxu0
        %v2372 = vadd.f32 %v1163, %v2371
        %2373 = vmatprep.mubr.bf16.mxu0 0
        %2374 = vmatmul.mubr.bf16.gmra.mxu0 %v1061
        %v2375 = vpop.f32.mrf.mxu0
        %v2376 = vadd.f32 %v1159, %v2375
        %v2377 = vpop.f32.mrf.mxu0
        %v2378 = vadd.f32 %v1163, %v2377
        %v2379 = vpop.f32.mrf.mxu0
        %v2380 = vadd.f32 %v1159, %v2379
        %v2381 = vpop.f32.mrf.mxu0
        %v2382 = vadd.f32 %v1163, %v2381
        %2383 = vmatprep.mubr.bf16.mxu0 0
        %2384 = vmatmul.mubr.bf16.gmra.mxu0 %v1062
        %v2385 = vpop.f32.mrf.mxu0
        %v2386 = vadd.f32 %v1159, %v2385
        %v2387 = vpop.f32.mrf.mxu0
        %v2388 = vadd.f32 %v1163, %v2387
        %v2389 = vpop.f32.mrf.mxu0
        %v2390 = vadd.f32 %v1159, %v2389
        %v2391 = vpop.f32.mrf.mxu0
        %v2392 = vadd.f32 %v1163, %v2391
        %2393 = vmatprep.mubr.bf16.mxu0 0
        %2394 = vmatmul.mubr.bf16.gmra.mxu0 %v1063
        %v2395 = vpop.f32.mrf.mxu0
        %v2396 = vadd.f32 %v1159, %v2395
        %v2397 = vpop.f32.mrf.mxu0
        %v2398 = vadd.f32 %v1163, %v2397
        %v2399 = vpop.f32.mrf.mxu0
        %v2400 = vadd.f32 %v1159, %v2399
        %v2401 = vpop.f32.mrf.mxu0
        %v2402 = vadd.f32 %v1163, %v2401
        %2403 = vmatprep.mubr.bf16.mxu0 0
        %2404 = vmatmul.mubr.bf16.gmra.mxu0 %v1064
        %v2405 = vpop.f32.mrf.mxu0
        %v2406 = vadd.f32 %v1159, %v2405
        %v2407 = vpop.f32.mrf.mxu0
        %v2408 = vadd.f32 %v1163, %v2407
        %v2409 = vpop.f32.mrf.mxu0
        %v2410 = vadd.f32 %v1159, %v2409
        %v2411 = vpop.f32.mrf.mxu0
        %v2412 = vadd.f32 %v1163, %v2411
        %2413 = vmatprep.mubr.bf16.mxu0 0
        %2414 = vmatmul.mubr.bf16.gmra.mxu0 %v1065
        %v2415 = vpop.f32.mrf.mxu0
        %v2416 = vadd.f32 %v1159, %v2415
        %v2417 = vpop.f32.mrf.mxu0
        %v2418 = vadd.f32 %v1163, %v2417
        %v2419 = vpop.f32.mrf.mxu0
        %v2420 = vadd.f32 %v1159, %v2419
        %v2421 = vpop.f32.mrf.mxu0
        %v2422 = vadd.f32 %v1163, %v2421
        %2423 = vdwg.mxu0
        %v2424 = vmax.f32 %v1527, 0.0
        %v2425 = vmax.f32 %v1529, 0.0
        %v2426 = vmax.f32 %v1760, 0.0
        %v2427 = vmax.f32 %v1762, 0.0
        %v2428 = vmax.f32 %v1993, 0.0
        %v2429 = vmax.f32 %v1995, 0.0
        %v2430 = vmax.f32 %v2226, 0.0
        %v2431 = vmax.f32 %v2228, 0.0
        %v2432 = vmax.f32 %v1531, 0.0
        %v2433 = vmax.f32 %v1533, 0.0
        %v2434 = vmax.f32 %v1764, 0.0
        %v2435 = vmax.f32 %v1766, 0.0
        %v2436 = vmax.f32 %v1997, 0.0
        %v2437 = vmax.f32 %v1999, 0.0
        %v2438 = vmax.f32 %v2230, 0.0
        %v2439 = vmax.f32 %v2232, 0.0
        %v2440 = vmax.f32 %v1537, 0.0
        %v2441 = vmax.f32 %v1539, 0.0
        %v2442 = vmax.f32 %v1770, 0.0
        %v2443 = vmax.f32 %v1772, 0.0
        %v2444 = vmax.f32 %v2003, 0.0
        %v2445 = vmax.f32 %v2005, 0.0
        %v2446 = vmax.f32 %v2236, 0.0
        %v2447 = vmax.f32 %v2238, 0.0
        %v2448 = vmax.f32 %v1541, 0.0
        %v2449 = vmax.f32 %v1543, 0.0
        %v2450 = vmax.f32 %v1774, 0.0
        %v2451 = vmax.f32 %v1776, 0.0
        %v2452 = vmax.f32 %v2007, 0.0
        %v2453 = vmax.f32 %v2009, 0.0
        %v2454 = vmax.f32 %v2240, 0.0
        %v2455 = vmax.f32 %v2242, 0.0
        %v2456 = vmax.f32 %v1547, 0.0
        %v2457 = vmax.f32 %v1549, 0.0
        %v2458 = vmax.f32 %v1780, 0.0
        %v2459 = vmax.f32 %v1782, 0.0
        %v2460 = vmax.f32 %v2013, 0.0
        %v2461 = vmax.f32 %v2015, 0.0
        %v2462 = vmax.f32 %v2246, 0.0
        %v2463 = vmax.f32 %v2248, 0.0
        %v2464 = vmax.f32 %v1551, 0.0
        %v2465 = vmax.f32 %v1553, 0.0
        %v2466 = vmax.f32 %v1784, 0.0
        %v2467 = vmax.f32 %v1786, 0.0
        %v2468 = vmax.f32 %v2017, 0.0
        %v2469 = vmax.f32 %v2019, 0.0
        %v2470 = vmax.f32 %v2250, 0.0
        %v2471 = vmax.f32 %v2252, 0.0
        %v2472 = vmax.f32 %v1557, 0.0
        %v2473 = vmax.f32 %v1559, 0.0
        %v2474 = vmax.f32 %v1790, 0.0
        %v2475 = vmax.f32 %v1792, 0.0
        %v2476 = vmax.f32 %v2023, 0.0
        %v2477 = vmax.f32 %v2025, 0.0
        %v2478 = vmax.f32 %v2256, 0.0
        %v2479 = vmax.f32 %v2258, 0.0
        %v2480 = vmax.f32 %v1561, 0.0
        %v2481 = vmax.f32 %v1563, 0.0
        %v2482 = vmax.f32 %v1794, 0.0
        %v2483 = vmax.f32 %v1796, 0.0
        %v2484 = vmax.f32 %v2027, 0.0
        %v2485 = vmax.f32 %v2029, 0.0
        %v2486 = vmax.f32 %v2260, 0.0
        %v2487 = vmax.f32 %v2262, 0.0
        %v2488 = vmax.f32 %v1567, 0.0
        %v2489 = vmax.f32 %v1569, 0.0
        %v2490 = vmax.f32 %v1800, 0.0
        %v2491 = vmax.f32 %v1802, 0.0
        %v2492 = vmax.f32 %v2033, 0.0
        %v2493 = vmax.f32 %v2035, 0.0
        %v2494 = vmax.f32 %v2266, 0.0
        %v2495 = vmax.f32 %v2268, 0.0
        %v2496 = vmax.f32 %v1571, 0.0
        %v2497 = vmax.f32 %v1573, 0.0
        %v2498 = vmax.f32 %v1804, 0.0
        %v2499 = vmax.f32 %v1806, 0.0
        %v2500 = vmax.f32 %v2037, 0.0
        %v2501 = vmax.f32 %v2039, 0.0
        %v2502 = vmax.f32 %v2270, 0.0
        %v2503 = vmax.f32 %v2272, 0.0
        %v2504 = vmax.f32 %v1577, 0.0
        %v2505 = vmax.f32 %v1579, 0.0
        %v2506 = vmax.f32 %v1810, 0.0
        %v2507 = vmax.f32 %v1812, 0.0
        %v2508 = vmax.f32 %v2043, 0.0
        %v2509 = vmax.f32 %v2045, 0.0
        %v2510 = vmax.f32 %v2276, 0.0
        %v2511 = vmax.f32 %v2278, 0.0
        %v2512 = vmax.f32 %v1581, 0.0
        %v2513 = vmax.f32 %v1583, 0.0
        %v2514 = vmax.f32 %v1814, 0.0
        %v2515 = vmax.f32 %v1816, 0.0
        %v2516 = vmax.f32 %v2047, 0.0
        %v2517 = vmax.f32 %v2049, 0.0
        %v2518 = vmax.f32 %v2280, 0.0
        %v2519 = vmax.f32 %v2282, 0.0
        %v2520 = vmax.f32 %v1587, 0.0
        %v2521 = vmax.f32 %v1589, 0.0
        %v2522 = vmax.f32 %v1820, 0.0
        %v2523 = vmax.f32 %v1822, 0.0
        %v2524 = vmax.f32 %v2053, 0.0
        %v2525 = vmax.f32 %v2055, 0.0
        %v2526 = vmax.f32 %v2286, 0.0
        %v2527 = vmax.f32 %v2288, 0.0
        %v2528 = vmax.f32 %v1591, 0.0
        %v2529 = vmax.f32 %v1593, 0.0
        %v2530 = vmax.f32 %v1824, 0.0
        %v2531 = vmax.f32 %v1826, 0.0
        %v2532 = vmax.f32 %v2057, 0.0
        %v2533 = vmax.f32 %v2059, 0.0
        %v2534 = vmax.f32 %v2290, 0.0
        %v2535 = vmax.f32 %v2292, 0.0
        %v2536 = vmax.f32 %v1597, 0.0
        %v2537 = vmax.f32 %v1599, 0.0
        %v2538 = vmax.f32 %v1830, 0.0
        %v2539 = vmax.f32 %v1832, 0.0
        %v2540 = vmax.f32 %v2063, 0.0
        %v2541 = vmax.f32 %v2065, 0.0
        %v2542 = vmax.f32 %v2296, 0.0
        %v2543 = vmax.f32 %v2298, 0.0
        %v2544 = vmax.f32 %v1601, 0.0
        %v2545 = vmax.f32 %v1603, 0.0
        %v2546 = vmax.f32 %v1834, 0.0
        %v2547 = vmax.f32 %v1836, 0.0
        %v2548 = vmax.f32 %v2067, 0.0
        %v2549 = vmax.f32 %v2069, 0.0
        %v2550 = vmax.f32 %v2300, 0.0
        %v2551 = vmax.f32 %v2302, 0.0
        %v2552 = vmax.f32 %v1607, 0.0
        %v2553 = vmax.f32 %v1609, 0.0
        %v2554 = vmax.f32 %v1840, 0.0
        %v2555 = vmax.f32 %v1842, 0.0
        %v2556 = vmax.f32 %v2073, 0.0
        %v2557 = vmax.f32 %v2075, 0.0
        %v2558 = vmax.f32 %v2306, 0.0
        %v2559 = vmax.f32 %v2308, 0.0
        %v2560 = vmax.f32 %v1611, 0.0
        %v2561 = vmax.f32 %v1613, 0.0
        %v2562 = vmax.f32 %v1844, 0.0
        %v2563 = vmax.f32 %v1846, 0.0
        %v2564 = vmax.f32 %v2077, 0.0
        %v2565 = vmax.f32 %v2079, 0.0
        %v2566 = vmax.f32 %v2310, 0.0
        %v2567 = vmax.f32 %v2312, 0.0
        %v2568 = vmax.f32 %v1617, 0.0
        %v2569 = vmax.f32 %v1619, 0.0
        %v2570 = vmax.f32 %v1850, 0.0
        %v2571 = vmax.f32 %v1852, 0.0
        %v2572 = vmax.f32 %v2083, 0.0
        %v2573 = vmax.f32 %v2085, 0.0
        %v2574 = vmax.f32 %v2316, 0.0
        %v2575 = vmax.f32 %v2318, 0.0
        %v2576 = vmax.f32 %v1621, 0.0
        %v2577 = vmax.f32 %v1623, 0.0
        %v2578 = vmax.f32 %v1854, 0.0
        %v2579 = vmax.f32 %v1856, 0.0
        %v2580 = vmax.f32 %v2087, 0.0
        %v2581 = vmax.f32 %v2089, 0.0
        %v2582 = vmax.f32 %v2320, 0.0
        %v2583 = vmax.f32 %v2322, 0.0
        %v2584 = vmax.f32 %v1627, 0.0
        %v2585 = vmax.f32 %v1629, 0.0
        %v2586 = vmax.f32 %v1860, 0.0
        %v2587 = vmax.f32 %v1862, 0.0
        %v2588 = vmax.f32 %v2093, 0.0
        %v2589 = vmax.f32 %v2095, 0.0
        %v2590 = vmax.f32 %v2326, 0.0
        %v2591 = vmax.f32 %v2328, 0.0
        %v2592 = vmax.f32 %v1631, 0.0
        %v2593 = vmax.f32 %v1633, 0.0
        %v2594 = vmax.f32 %v1864, 0.0
        %v2595 = vmax.f32 %v1866, 0.0
        %v2596 = vmax.f32 %v2097, 0.0
        %v2597 = vmax.f32 %v2099, 0.0
        %v2598 = vmax.f32 %v2330, 0.0
        %v2599 = vmax.f32 %v2332, 0.0
        %v2600 = vmax.f32 %v1637, 0.0
        %v2601 = vmax.f32 %v1639, 0.0
        %v2602 = vmax.f32 %v1870, 0.0
        %v2603 = vmax.f32 %v1872, 0.0
        %v2604 = vmax.f32 %v2103, 0.0
        %v2605 = vmax.f32 %v2105, 0.0
        %v2606 = vmax.f32 %v2336, 0.0
        %v2607 = vmax.f32 %v2338, 0.0
        %v2608 = vmax.f32 %v1641, 0.0
        %v2609 = vmax.f32 %v1643, 0.0
        %v2610 = vmax.f32 %v1874, 0.0
        %v2611 = vmax.f32 %v1876, 0.0
        %v2612 = vmax.f32 %v2107, 0.0
        %v2613 = vmax.f32 %v2109, 0.0
        %v2614 = vmax.f32 %v2340, 0.0
        %v2615 = vmax.f32 %v2342, 0.0
        %v2616 = vmax.f32 %v1647, 0.0
        %v2617 = vmax.f32 %v1649, 0.0
        %v2618 = vmax.f32 %v1880, 0.0
        %v2619 = vmax.f32 %v1882, 0.0
        %v2620 = vmax.f32 %v2113, 0.0
        %v2621 = vmax.f32 %v2115, 0.0
        %v2622 = vmax.f32 %v2346, 0.0
        %v2623 = vmax.f32 %v2348, 0.0
        %v2624 = vmax.f32 %v1651, 0.0
        %v2625 = vmax.f32 %v1653, 0.0
        %v2626 = vmax.f32 %v1884, 0.0
        %v2627 = vmax.f32 %v1886, 0.0
        %v2628 = vmax.f32 %v2117, 0.0
        %v2629 = vmax.f32 %v2119, 0.0
        %v2630 = vmax.f32 %v2350, 0.0
        %v2631 = vmax.f32 %v2352, 0.0
        %v2632 = vmax.f32 %v1657, 0.0
        %v2633 = vmax.f32 %v1659, 0.0
        %v2634 = vmax.f32 %v1890, 0.0
        %v2635 = vmax.f32 %v1892, 0.0
        %v2636 = vmax.f32 %v2123, 0.0
        %v2637 = vmax.f32 %v2125, 0.0
        %v2638 = vmax.f32 %v2356, 0.0
        %v2639 = vmax.f32 %v2358, 0.0
        %v2640 = vmax.f32 %v1661, 0.0
        %v2641 = vmax.f32 %v1663, 0.0
        %v2642 = vmax.f32 %v1894, 0.0
        %v2643 = vmax.f32 %v1896, 0.0
        %v2644 = vmax.f32 %v2127, 0.0
        %v2645 = vmax.f32 %v2129, 0.0
        %v2646 = vmax.f32 %v2360, 0.0
        %v2647 = vmax.f32 %v2362, 0.0
        %v2648 = vmax.f32 %v1667, 0.0
        %v2649 = vmax.f32 %v1669, 0.0
        %v2650 = vmax.f32 %v1900, 0.0
        %v2651 = vmax.f32 %v1902, 0.0
        %v2652 = vmax.f32 %v2133, 0.0
        %v2653 = vmax.f32 %v2135, 0.0
        %v2654 = vmax.f32 %v2366, 0.0
        %v2655 = vmax.f32 %v2368, 0.0
        %v2656 = vmax.f32 %v1671, 0.0
        %v2657 = vmax.f32 %v1673, 0.0
        %v2658 = vmax.f32 %v1904, 0.0
        %v2659 = vmax.f32 %v1906, 0.0
        %v2660 = vmax.f32 %v2137, 0.0
        %v2661 = vmax.f32 %v2139, 0.0
        %v2662 = vmax.f32 %v2370, 0.0
        %v2663 = vmax.f32 %v2372, 0.0
        %v2664 = vmax.f32 %v1677, 0.0
        %v2665 = vmax.f32 %v1679, 0.0
        %v2666 = vmax.f32 %v1910, 0.0
        %v2667 = vmax.f32 %v1912, 0.0
        %v2668 = vmax.f32 %v2143, 0.0
        %v2669 = vmax.f32 %v2145, 0.0
        %v2670 = vmax.f32 %v2376, 0.0
        %v2671 = vmax.f32 %v2378, 0.0
        %v2672 = vmax.f32 %v1681, 0.0
        %v2673 = vmax.f32 %v1683, 0.0
        %v2674 = vmax.f32 %v1914, 0.0
        %v2675 = vmax.f32 %v1916, 0.0
        %v2676 = vmax.f32 %v2147, 0.0
        %v2677 = vmax.f32 %v2149, 0.0
        %v2678 = vmax.f32 %v2380, 0.0
        %v2679 = vmax.f32 %v2382, 0.0
        %v2680 = vmax.f32 %v1687, 0.0
        %v2681 = vmax.f32 %v1689, 0.0
        %v2682 = vmax.f32 %v1920, 0.0
        %v2683 = vmax.f32 %v1922, 0.0
        %v2684 = vmax.f32 %v2153, 0.0
        %v2685 = vmax.f32 %v2155, 0.0
        %v2686 = vmax.f32 %v2386, 0.0
        %v2687 = vmax.f32 %v2388, 0.0
        %v2688 = vmax.f32 %v1691, 0.0
        %v2689 = vmax.f32 %v1693, 0.0
        %v2690 = vmax.f32 %v1924, 0.0
        %v2691 = vmax.f32 %v1926, 0.0
        %v2692 = vmax.f32 %v2157, 0.0
        %v2693 = vmax.f32 %v2159, 0.0
        %v2694 = vmax.f32 %v2390, 0.0
        %v2695 = vmax.f32 %v2392, 0.0
        %v2696 = vmax.f32 %v1697, 0.0
        %v2697 = vmax.f32 %v1699, 0.0
        %v2698 = vmax.f32 %v1930, 0.0
        %v2699 = vmax.f32 %v1932, 0.0
        %v2700 = vmax.f32 %v2163, 0.0
        %v2701 = vmax.f32 %v2165, 0.0
        %v2702 = vmax.f32 %v2396, 0.0
        %v2703 = vmax.f32 %v2398, 0.0
        %v2704 = vmax.f32 %v1701, 0.0
        %v2705 = vmax.f32 %v1703, 0.0
        %v2706 = vmax.f32 %v1934, 0.0
        %v2707 = vmax.f32 %v1936, 0.0
        %v2708 = vmax.f32 %v2167, 0.0
        %v2709 = vmax.f32 %v2169, 0.0
        %v2710 = vmax.f32 %v2400, 0.0
        %v2711 = vmax.f32 %v2402, 0.0
        %v2712 = vmax.f32 %v1707, 0.0
        %v2713 = vmax.f32 %v1709, 0.0
        %v2714 = vmax.f32 %v1940, 0.0
        %v2715 = vmax.f32 %v1942, 0.0
        %v2716 = vmax.f32 %v2173, 0.0
        %v2717 = vmax.f32 %v2175, 0.0
        %v2718 = vmax.f32 %v2406, 0.0
        %v2719 = vmax.f32 %v2408, 0.0
        %v2720 = vmax.f32 %v1711, 0.0
        %v2721 = vmax.f32 %v1713, 0.0
        %v2722 = vmax.f32 %v1944, 0.0
        %v2723 = vmax.f32 %v1946, 0.0
        %v2724 = vmax.f32 %v2177, 0.0
        %v2725 = vmax.f32 %v2179, 0.0
        %v2726 = vmax.f32 %v2410, 0.0
        %v2727 = vmax.f32 %v2412, 0.0
        %v2728 = vmax.f32 %v1717, 0.0
        %v2729 = vmax.f32 %v1719, 0.0
        %v2730 = vmax.f32 %v1950, 0.0
        %v2731 = vmax.f32 %v1952, 0.0
        %v2732 = vmax.f32 %v2183, 0.0
        %v2733 = vmax.f32 %v2185, 0.0
        %v2734 = vmax.f32 %v2416, 0.0
        %v2735 = vmax.f32 %v2418, 0.0
        %v2736 = vmax.f32 %v1721, 0.0
        %v2737 = vmax.f32 %v1723, 0.0
        %v2738 = vmax.f32 %v1954, 0.0
        %v2739 = vmax.f32 %v1956, 0.0
        %v2740 = vmax.f32 %v2187, 0.0
        %v2741 = vmax.f32 %v2189, 0.0
        %v2742 = vmax.f32 %v2420, 0.0
        %v2743 = vmax.f32 %v2422, 0.0
        %v2744 = vmax.f32 %v2424, %v2432
        %v2745 = vmax.f32 %v2744, %v2440
        %v2746 = vmax.f32 %v2745, %v2448
        %v2747 = vmax.f32 %v2746, %v2456
        %v2748 = vmax.f32 %v2747, %v2464
        %v2749 = vmax.f32 %v2748, %v2472
        %v2750 = vmax.f32 %v2749, %v2480
        %v2751 = vmax.f32 %v2750, %v2488
        %v2752 = vmax.f32 %v2751, %v2496
        %v2753 = vmax.f32 %v2752, %v2504
        %v2754 = vmax.f32 %v2753, %v2512
        %v2755 = vmax.f32 %v2754, %v2520
        %v2756 = vmax.f32 %v2755, %v2528
        %v2757 = vmax.f32 %v2756, %v2536
        %v2758 = vmax.f32 %v2757, %v2544
        %v2759 = vmax.f32 %v2758, %v2552
        %v2760 = vmax.f32 %v2759, %v2560
        %v2761 = vmax.f32 %v2760, %v2568
        %v2762 = vmax.f32 %v2761, %v2576
        %v2763 = vmax.f32 %v2762, %v2584
        %v2764 = vmax.f32 %v2763, %v2592
        %v2765 = vmax.f32 %v2764, %v2600
        %v2766 = vmax.f32 %v2765, %v2608
        %v2767 = vmax.f32 %v2766, %v2616
        %v2768 = vmax.f32 %v2767, %v2624
        %v2769 = vmax.f32 %v2768, %v2632
        %v2770 = vmax.f32 %v2769, %v2640
        %v2771 = vmax.f32 %v2770, %v2648
        %v2772 = vmax.f32 %v2771, %v2656
        %v2773 = vmax.f32 %v2772, %v2664
        %v2774 = vmax.f32 %v2773, %v2672
        %v2775 = vmax.f32 %v2774, %v2680
        %v2776 = vmax.f32 %v2775, %v2688
        %v2777 = vmax.f32 %v2776, %v2696
        %v2778 = vmax.f32 %v2777, %v2704
        %v2779 = vmax.f32 %v2778, %v2712
        %v2780 = vmax.f32 %v2779, %v2720
        %v2781 = vmax.f32 %v2780, %v2728
        %v2782 = vmax.f32 %v2781, %v2736
        %v2783 = vmax.f32 %v2425, %v2433
        %v2784 = vmax.f32 %v2783, %v2441
        %v2785 = vmax.f32 %v2784, %v2449
        %v2786 = vmax.f32 %v2785, %v2457
        %v2787 = vmax.f32 %v2786, %v2465
        %v2788 = vmax.f32 %v2787, %v2473
        %v2789 = vmax.f32 %v2788, %v2481
        %v2790 = vmax.f32 %v2789, %v2489
        %v2791 = vmax.f32 %v2790, %v2497
        %v2792 = vmax.f32 %v2791, %v2505
        %v2793 = vmax.f32 %v2792, %v2513
        %v2794 = vmax.f32 %v2793, %v2521
        %v2795 = vmax.f32 %v2794, %v2529
        %v2796 = vmax.f32 %v2795, %v2537
        %v2797 = vmax.f32 %v2796, %v2545
        %v2798 = vmax.f32 %v2797, %v2553
        %v2799 = vmax.f32 %v2798, %v2561
        %v2800 = vmax.f32 %v2799, %v2569
        %v2801 = vmax.f32 %v2800, %v2577
        %v2802 = vmax.f32 %v2801, %v2585
        %v2803 = vmax.f32 %v2802, %v2593
        %v2804 = vmax.f32 %v2803, %v2601
        %v2805 = vmax.f32 %v2804, %v2609
        %v2806 = vmax.f32 %v2805, %v2617
        %v2807 = vmax.f32 %v2806, %v2625
        %v2808 = vmax.f32 %v2807, %v2633
        %v2809 = vmax.f32 %v2808, %v2641
        %v2810 = vmax.f32 %v2809, %v2649
        %v2811 = vmax.f32 %v2810, %v2657
        %v2812 = vmax.f32 %v2811, %v2665
        %v2813 = vmax.f32 %v2812, %v2673
        %v2814 = vmax.f32 %v2813, %v2681
        %v2815 = vmax.f32 %v2814, %v2689
        %v2816 = vmax.f32 %v2815, %v2697
        %v2817 = vmax.f32 %v2816, %v2705
        %v2818 = vmax.f32 %v2817, %v2713
        %v2819 = vmax.f32 %v2818, %v2721
        %v2820 = vmax.f32 %v2819, %v2729
        %v2821 = vmax.f32 %v2820, %v2737
        %v2822 = vmax.f32 %v2426, %v2434
        %v2823 = vmax.f32 %v2822, %v2442
        %v2824 = vmax.f32 %v2823, %v2450
        %v2825 = vmax.f32 %v2824, %v2458
        %v2826 = vmax.f32 %v2825, %v2466
        %v2827 = vmax.f32 %v2826, %v2474
        %v2828 = vmax.f32 %v2827, %v2482
        %v2829 = vmax.f32 %v2828, %v2490
        %v2830 = vmax.f32 %v2829, %v2498
        %v2831 = vmax.f32 %v2830, %v2506
        %v2832 = vmax.f32 %v2831, %v2514
        %v2833 = vmax.f32 %v2832, %v2522
        %v2834 = vmax.f32 %v2833, %v2530
        %v2835 = vmax.f32 %v2834, %v2538
        %v2836 = vmax.f32 %v2835, %v2546
        %v2837 = vmax.f32 %v2836, %v2554
        %v2838 = vmax.f32 %v2837, %v2562
        %v2839 = vmax.f32 %v2838, %v2570
        %v2840 = vmax.f32 %v2839, %v2578
        %v2841 = vmax.f32 %v2840, %v2586
        %v2842 = vmax.f32 %v2841, %v2594
        %v2843 = vmax.f32 %v2842, %v2602
        %v2844 = vmax.f32 %v2843, %v2610
        %v2845 = vmax.f32 %v2844, %v2618
        %v2846 = vmax.f32 %v2845, %v2626
        %v2847 = vmax.f32 %v2846, %v2634
        %v2848 = vmax.f32 %v2847, %v2642
        %v2849 = vmax.f32 %v2848, %v2650
        %v2850 = vmax.f32 %v2849, %v2658
        %v2851 = vmax.f32 %v2850, %v2666
        %v2852 = vmax.f32 %v2851, %v2674
        %v2853 = vmax.f32 %v2852, %v2682
        %v2854 = vmax.f32 %v2853, %v2690
        %v2855 = vmax.f32 %v2854, %v2698
        %v2856 = vmax.f32 %v2855, %v2706
        %v2857 = vmax.f32 %v2856, %v2714
        %v2858 = vmax.f32 %v2857, %v2722
        %v2859 = vmax.f32 %v2858, %v2730
        %v2860 = vmax.f32 %v2859, %v2738
        %v2861 = vmax.f32 %v2427, %v2435
        %v2862 = vmax.f32 %v2861, %v2443
        %v2863 = vmax.f32 %v2862, %v2451
        %v2864 = vmax.f32 %v2863, %v2459
        %v2865 = vmax.f32 %v2864, %v2467
        %v2866 = vmax.f32 %v2865, %v2475
        %v2867 = vmax.f32 %v2866, %v2483
        %v2868 = vmax.f32 %v2867, %v2491
        %v2869 = vmax.f32 %v2868, %v2499
        %v2870 = vmax.f32 %v2869, %v2507
        %v2871 = vmax.f32 %v2870, %v2515
        %v2872 = vmax.f32 %v2871, %v2523
        %v2873 = vmax.f32 %v2872, %v2531
        %v2874 = vmax.f32 %v2873, %v2539
        %v2875 = vmax.f32 %v2874, %v2547
        %v2876 = vmax.f32 %v2875, %v2555
        %v2877 = vmax.f32 %v2876, %v2563
        %v2878 = vmax.f32 %v2877, %v2571
        %v2879 = vmax.f32 %v2878, %v2579
        %v2880 = vmax.f32 %v2879, %v2587
        %v2881 = vmax.f32 %v2880, %v2595
        %v2882 = vmax.f32 %v2881, %v2603
        %v2883 = vmax.f32 %v2882, %v2611
        %v2884 = vmax.f32 %v2883, %v2619
        %v2885 = vmax.f32 %v2884, %v2627
        %v2886 = vmax.f32 %v2885, %v2635
        %v2887 = vmax.f32 %v2886, %v2643
        %v2888 = vmax.f32 %v2887, %v2651
        %v2889 = vmax.f32 %v2888, %v2659
        %v2890 = vmax.f32 %v2889, %v2667
        %v2891 = vmax.f32 %v2890, %v2675
        %v2892 = vmax.f32 %v2891, %v2683
        %v2893 = vmax.f32 %v2892, %v2691
        %v2894 = vmax.f32 %v2893, %v2699
        %v2895 = vmax.f32 %v2894, %v2707
        %v2896 = vmax.f32 %v2895, %v2715
        %v2897 = vmax.f32 %v2896, %v2723
        %v2898 = vmax.f32 %v2897, %v2731
        %v2899 = vmax.f32 %v2898, %v2739
        %v2900 = vmax.f32 %v2428, %v2436
        %v2901 = vmax.f32 %v2900, %v2444
        %v2902 = vmax.f32 %v2901, %v2452
        %v2903 = vmax.f32 %v2902, %v2460
        %v2904 = vmax.f32 %v2903, %v2468
        %v2905 = vmax.f32 %v2904, %v2476
        %v2906 = vmax.f32 %v2905, %v2484
        %v2907 = vmax.f32 %v2906, %v2492
        %v2908 = vmax.f32 %v2907, %v2500
        %v2909 = vmax.f32 %v2908, %v2508
        %v2910 = vmax.f32 %v2909, %v2516
        %v2911 = vmax.f32 %v2910, %v2524
        %v2912 = vmax.f32 %v2911, %v2532
        %v2913 = vmax.f32 %v2912, %v2540
        %v2914 = vmax.f32 %v2913, %v2548
        %v2915 = vmax.f32 %v2914, %v2556
        %v2916 = vmax.f32 %v2915, %v2564
        %v2917 = vmax.f32 %v2916, %v2572
        %v2918 = vmax.f32 %v2917, %v2580
        %v2919 = vmax.f32 %v2918, %v2588
        %v2920 = vmax.f32 %v2919, %v2596
        %v2921 = vmax.f32 %v2920, %v2604
        %v2922 = vmax.f32 %v2921, %v2612
        %v2923 = vmax.f32 %v2922, %v2620
        %v2924 = vmax.f32 %v2923, %v2628
        %v2925 = vmax.f32 %v2924, %v2636
        %v2926 = vmax.f32 %v2925, %v2644
        %v2927 = vmax.f32 %v2926, %v2652
        %v2928 = vmax.f32 %v2927, %v2660
        %v2929 = vmax.f32 %v2928, %v2668
        %v2930 = vmax.f32 %v2929, %v2676
        %v2931 = vmax.f32 %v2930, %v2684
        %v2932 = vmax.f32 %v2931, %v2692
        %v2933 = vmax.f32 %v2932, %v2700
        %v2934 = vmax.f32 %v2933, %v2708
        %v2935 = vmax.f32 %v2934, %v2716
        %v2936 = vmax.f32 %v2935, %v2724
        %v2937 = vmax.f32 %v2936, %v2732
        %v2938 = vmax.f32 %v2937, %v2740
        %v2939 = vmax.f32 %v2429, %v2437
        %v2940 = vmax.f32 %v2939, %v2445
        %v2941 = vmax.f32 %v2940, %v2453
        %v2942 = vmax.f32 %v2941, %v2461
        %v2943 = vmax.f32 %v2942, %v2469
        %v2944 = vmax.f32 %v2943, %v2477
        %v2945 = vmax.f32 %v2944, %v2485
        %v2946 = vmax.f32 %v2945, %v2493
        %v2947 = vmax.f32 %v2946, %v2501
        %v2948 = vmax.f32 %v2947, %v2509
        %v2949 = vmax.f32 %v2948, %v2517
        %v2950 = vmax.f32 %v2949, %v2525
        %v2951 = vmax.f32 %v2950, %v2533
        %v2952 = vmax.f32 %v2951, %v2541
        %v2953 = vmax.f32 %v2952, %v2549
        %v2954 = vmax.f32 %v2953, %v2557
        %v2955 = vmax.f32 %v2954, %v2565
        %v2956 = vmax.f32 %v2955, %v2573
        %v2957 = vmax.f32 %v2956, %v2581
        %v2958 = vmax.f32 %v2957, %v2589
        %v2959 = vmax.f32 %v2958, %v2597
        %v2960 = vmax.f32 %v2959, %v2605
        %v2961 = vmax.f32 %v2960, %v2613
        %v2962 = vmax.f32 %v2961, %v2621
        %v2963 = vmax.f32 %v2962, %v2629
        %v2964 = vmax.f32 %v2963, %v2637
        %v2965 = vmax.f32 %v2964, %v2645
        %v2966 = vmax.f32 %v2965, %v2653
        %v2967 = vmax.f32 %v2966, %v2661
        %v2968 = vmax.f32 %v2967, %v2669
        %v2969 = vmax.f32 %v2968, %v2677
        %v2970 = vmax.f32 %v2969, %v2685
        %v2971 = vmax.f32 %v2970, %v2693
        %v2972 = vmax.f32 %v2971, %v2701
        %v2973 = vmax.f32 %v2972, %v2709
        %v2974 = vmax.f32 %v2973, %v2717
        %v2975 = vmax.f32 %v2974, %v2725
        %v2976 = vmax.f32 %v2975, %v2733
        %v2977 = vmax.f32 %v2976, %v2741
        %v2978 = vmax.f32 %v2430, %v2438
        %v2979 = vmax.f32 %v2978, %v2446
        %v2980 = vmax.f32 %v2979, %v2454
        %v2981 = vmax.f32 %v2980, %v2462
        %v2982 = vmax.f32 %v2981, %v2470
        %v2983 = vmax.f32 %v2982, %v2478
        %v2984 = vmax.f32 %v2983, %v2486
        %v2985 = vmax.f32 %v2984, %v2494
        %v2986 = vmax.f32 %v2985, %v2502
        %v2987 = vmax.f32 %v2986, %v2510
        %v2988 = vmax.f32 %v2987, %v2518
        %v2989 = vmax.f32 %v2988, %v2526
        %v2990 = vmax.f32 %v2989, %v2534
        %v2991 = vmax.f32 %v2990, %v2542
        %v2992 = vmax.f32 %v2991, %v2550
        %v2993 = vmax.f32 %v2992, %v2558
        %v2994 = vmax.f32 %v2993, %v2566
        %v2995 = vmax.f32 %v2994, %v2574
        %v2996 = vmax.f32 %v2995, %v2582
        %v2997 = vmax.f32 %v2996, %v2590
        %v2998 = vmax.f32 %v2997, %v2598
        %v2999 = vmax.f32 %v2998, %v2606
        %v3000 = vmax.f32 %v2999, %v2614
        %v3001 = vmax.f32 %v3000, %v2622
        %v3002 = vmax.f32 %v3001, %v2630
        %v3003 = vmax.f32 %v3002, %v2638
        %v3004 = vmax.f32 %v3003, %v2646
        %v3005 = vmax.f32 %v3004, %v2654
        %v3006 = vmax.f32 %v3005, %v2662
        %v3007 = vmax.f32 %v3006, %v2670
        %v3008 = vmax.f32 %v3007, %v2678
        %v3009 = vmax.f32 %v3008, %v2686
        %v3010 = vmax.f32 %v3009, %v2694
        %v3011 = vmax.f32 %v3010, %v2702
        %v3012 = vmax.f32 %v3011, %v2710
        %v3013 = vmax.f32 %v3012, %v2718
        %v3014 = vmax.f32 %v3013, %v2726
        %v3015 = vmax.f32 %v3014, %v2734
        %v3016 = vmax.f32 %v3015, %v2742
        %v3017 = vmax.f32 %v2431, %v2439
        %v3018 = vmax.f32 %v3017, %v2447
        %v3019 = vmax.f32 %v3018, %v2455
        %v3020 = vmax.f32 %v3019, %v2463
        %v3021 = vmax.f32 %v3020, %v2471
        %v3022 = vmax.f32 %v3021, %v2479
        %v3023 = vmax.f32 %v3022, %v2487
        %v3024 = vmax.f32 %v3023, %v2495
        %v3025 = vmax.f32 %v3024, %v2503
        %v3026 = vmax.f32 %v3025, %v2511
        %v3027 = vmax.f32 %v3026, %v2519
        %v3028 = vmax.f32 %v3027, %v2527
        %v3029 = vmax.f32 %v3028, %v2535
        %v3030 = vmax.f32 %v3029, %v2543
        %v3031 = vmax.f32 %v3030, %v2551
        %v3032 = vmax.f32 %v3031, %v2559
        %v3033 = vmax.f32 %v3032, %v2567
        %v3034 = vmax.f32 %v3033, %v2575
        %v3035 = vmax.f32 %v3034, %v2583
        %v3036 = vmax.f32 %v3035, %v2591
        %v3037 = vmax.f32 %v3036, %v2599
        %v3038 = vmax.f32 %v3037, %v2607
        %v3039 = vmax.f32 %v3038, %v2615
        %v3040 = vmax.f32 %v3039, %v2623
        %v3041 = vmax.f32 %v3040, %v2631
        %v3042 = vmax.f32 %v3041, %v2639
        %v3043 = vmax.f32 %v3042, %v2647
        %v3044 = vmax.f32 %v3043, %v2655
        %v3045 = vmax.f32 %v3044, %v2663
        %v3046 = vmax.f32 %v3045, %v2671
        %v3047 = vmax.f32 %v3046, %v2679
        %v3048 = vmax.f32 %v3047, %v2687
        %v3049 = vmax.f32 %v3048, %v2695
        %v3050 = vmax.f32 %v3049, %v2703
        %v3051 = vmax.f32 %v3050, %v2711
        %v3052 = vmax.f32 %v3051, %v2719
        %v3053 = vmax.f32 %v3052, %v2727
        %v3054 = vmax.f32 %v3053, %v2735
        %v3055 = vmax.f32 %v3054, %v2743
        %v3056 = vld [vmem:[#allocation2] sm:$0xff]
        %v3057 = vld [vmem:[#allocation2 + $0x8] sm:$0xff]
        %v3058 = vld [vmem:[#allocation2 + $0x10] sm:$0xff]
        %v3059 = vld [vmem:[#allocation2 + $0x18] sm:$0xff]
        %v3060 = vld [vmem:[#allocation2 + $0x20] sm:$0xff]
        %v3061 = vld [vmem:[#allocation2 + $0x28] sm:$0xff]
        %v3062 = vld [vmem:[#allocation2 + $0x30] sm:$0xff]
        %v3063 = vld [vmem:[#allocation2 + $0x38] sm:$0xff]
        %v3064 = vmax.f32 %v3056, %v2782
        %v3065 = vmax.f32 %v3057, %v2821
        %v3066 = vmax.f32 %v3058, %v2860
        %v3067 = vmax.f32 %v3059, %v2899
        %v3068 = vmax.f32 %v3060, %v2938
        %v3069 = vmax.f32 %v3061, %v2977
        %v3070 = vmax.f32 %v3062, %v3016
        %v3071 = vmax.f32 %v3063, %v3055
        %3072 = vst [vmem:[#allocation2] sm:$0xff] %v3064
        %3073 = vst [vmem:[#allocation2 + $0x8] sm:$0xff] %v3065
        %3074 = vst [vmem:[#allocation2 + $0x10] sm:$0xff] %v3066
        %3075 = vst [vmem:[#allocation2 + $0x18] sm:$0xff] %v3067
        %3076 = vst [vmem:[#allocation2 + $0x20] sm:$0xff] %v3068
        %3077 = vst [vmem:[#allocation2 + $0x28] sm:$0xff] %v3069
        %3078 = vst [vmem:[#allocation2 + $0x30] sm:$0xff] %v3070
        %3079 = vst [vmem:[#allocation2 + $0x38] sm:$0xff] %v3071
        // Predicated region
        $region57: #{stnkd_forward.2} parent=47 // pred_check
          %p3080 = pneg %p315
        $region58: #{stnkd_forward.2} parent=47 // pred_check_branch
          %3082 = sbr.rel (%p3080) target = $region60
        $region59: #{stnkd_forward.2} parent=47 // pred_region
          %v3083 = vld [vmem:[#allocation2] sm:$0xff]
          %v3084 = vld [vmem:[#allocation2 + $0x8] sm:$0xff]
          %v3085 = vld [vmem:[#allocation2 + $0x10] sm:$0xff]
          %v3086 = vld [vmem:[#allocation2 + $0x18] sm:$0xff]
          %v3087 = vld [vmem:[#allocation2 + $0x20] sm:$0xff]
          %v3088 = vld [vmem:[#allocation2 + $0x28] sm:$0xff]
          %v3089 = vld [vmem:[#allocation2 + $0x30] sm:$0xff]
          %v3090 = vld [vmem:[#allocation2 + $0x38] sm:$0xff]
          %v3091 = vrot.slane %v3083, 4
          %v3092 = vmax.f32 %v3083, %v3091
          %v3093 = vrot.slane %v3092, 2
          %v3094 = vmax.f32 %v3092, %v3093
          %v3095 = vrot.slane %v3094, 1
          %v3096 = vmax.f32 %v3094, %v3095
          %v3097 = vrot.slane %v3084, 4
          %v3098 = vmax.f32 %v3084, %v3097
          %v3099 = vrot.slane %v3098, 2
          %v3100 = vmax.f32 %v3098, %v3099
          %v3101 = vrot.slane %v3100, 1
          %v3102 = vmax.f32 %v3100, %v3101
          %v3103 = vrot.slane %v3085, 4
          %v3104 = vmax.f32 %v3085, %v3103
          %v3105 = vrot.slane %v3104, 2
          %v3106 = vmax.f32 %v3104, %v3105
          %v3107 = vrot.slane %v3106, 1
          %v3108 = vmax.f32 %v3106, %v3107
          %v3109 = vrot.slane %v3086, 4
          %v3110 = vmax.f32 %v3086, %v3109
          %v3111 = vrot.slane %v3110, 2
          %v3112 = vmax.f32 %v3110, %v3111
          %v3113 = vrot.slane %v3112, 1
          %v3114 = vmax.f32 %v3112, %v3113
          %v3115 = vrot.slane %v3087, 4
          %v3116 = vmax.f32 %v3087, %v3115
          %v3117 = vrot.slane %v3116, 2
          %v3118 = vmax.f32 %v3116, %v3117
          %v3119 = vrot.slane %v3118, 1
          %v3120 = vmax.f32 %v3118, %v3119
          %v3121 = vrot.slane %v3088, 4
          %v3122 = vmax.f32 %v3088, %v3121
          %v3123 = vrot.slane %v3122, 2
          %v3124 = vmax.f32 %v3122, %v3123
          %v3125 = vrot.slane %v3124, 1
          %v3126 = vmax.f32 %v3124, %v3125
          %v3127 = vrot.slane %v3089, 4
          %v3128 = vmax.f32 %v3089, %v3127
          %v3129 = vrot.slane %v3128, 2
          %v3130 = vmax.f32 %v3128, %v3129
          %v3131 = vrot.slane %v3130, 1
          %v3132 = vmax.f32 %v3130, %v3131
          %v3133 = vrot.slane %v3090, 4
          %v3134 = vmax.f32 %v3090, %v3133
          %v3135 = vrot.slane %v3134, 2
          %v3136 = vmax.f32 %v3134, %v3135
          %v3137 = vrot.slane %v3136, 1
          %v3138 = vmax.f32 %v3136, %v3137
          %v3147 = vcombine.low %v3096, %v3102
          %v3148 = vcombine.low %v3108, %v3114
          %v3149 = vcombine.low %v3120, %v3126
          %v3150 = vcombine.low %v3132, %v3138
          %v3152 = vunpack.c.l.s4 1966171168
          %v3153 = vunpack.c.0.s8 %v3152
          %v3154 = vlaneseq
          %v3155 = vshrl.u32 %v3154, 7
          %v3156 = vsub.s32 %v3153, %v3155
          %v3157 = vrot.slane %v3147, %v3156
          %v3159 = vunpack.c.l.s4 1966171168
          %v3160 = vunpack.c.0.s8 %v3159
          %v3161 = vlaneseq
          %v3162 = vshrl.u32 %v3161, 7
          %v3163 = vsub.s32 %v3160, %v3162
          %v3164 = vrot.slane %v3148, %v3163
          %v3166 = vunpack.c.l.s4 1966171168
          %v3167 = vunpack.c.0.s8 %v3166
          %v3168 = vlaneseq
          %v3169 = vshrl.u32 %v3168, 7
          %v3170 = vsub.s32 %v3167, %v3169
          %v3171 = vrot.slane %v3149, %v3170
          %v3173 = vunpack.c.l.s4 1966171168
          %v3174 = vunpack.c.0.s8 %v3173
          %v3175 = vlaneseq
          %v3176 = vshrl.u32 %v3175, 7
          %v3177 = vsub.s32 %v3174, %v3176
          %v3178 = vrot.slane %v3150, %v3177
          %v3179 = vcombine.low %v3157, %v3164
          %v3180 = vcombine.low %v3171, %v3178
          %v3182 = vunpack.c.l.s4 1966171168
          %v3183 = vunpack.c.0.s8 %v3182
          %v3184 = vlaneseq
          %v3185 = vshrl.u32 %v3184, 7
          %v3186 = vsub.s32 %v3183, %v3185
          %v3187 = vrot.slane %v3179, %v3186
          %v3189 = vunpack.c.l.s4 1966171168
          %v3190 = vunpack.c.0.s8 %v3189
          %v3191 = vlaneseq
          %v3192 = vshrl.u32 %v3191, 7
          %v3193 = vsub.s32 %v3190, %v3192
          %v3194 = vrot.slane %v3180, %v3193
          %v3195 = vcombine.low %v3187, %v3194
          %3197 = vst [vmem:[%s313] sm:$0xff] %v3195
        $region60: #{stnkd_forward.2} parent=47 // pred_fallthru
          _
        %p3198 = scmp.lt.s32.totalorder %s25, 1
        %s3199 = scalar_select %p3198, %s25, 1
        %s3200 = smul.addr %s3199, 8
        %s3201 = scalar_lea.vmem %s7, %s3200
        // Predicated region
        $region61: #{stnkd_forward.2} parent=47 // pred_check
          %p3202 = pneg %p205
        $region62: #{stnkd_forward.2} parent=47 // pred_check_branch
          %3204 = sbr.rel (%p3202) target = $region64
        $region63: #{stnkd_forward.2} parent=47 // pred_region
          _
        $region64: #{stnkd_forward.2} parent=47 // pred_fallthru
          _
      $region48: #{stnkd_forward.2} parent=5 // pred_fallthru
        _
      %p3205 = scmp.le.s32.totalorder 2, %s16
      // Predicated region
      $region65: #{stnkd_forward.2} parent=5 // pred_check
        %p3206 = pneg %p3205
      $region66: #{stnkd_forward.2} parent=5 // pred_check_branch
        %3208 = sbr.rel (%p3206) target = $region68
      $region67: #{stnkd_forward.2} parent=5 // pred_region
        %s3209 = ssub.s32 %s16, 2
        // Predicated region
        $region69: #{stnkd_forward.2} parent=67 // pred_check
          %p3210 = pneg %p211
        $region70: #{stnkd_forward.2} parent=67 // pred_check_branch
          %3212 = sbr.rel (%p3210) target = $region72
        $region71: #{stnkd_forward.2} parent=67 // pred_region
          %p3213 = scmp.lt.s32.totalorder %s27, 1
          %s3214 = scalar_select %p3213, %s27, 1
          %s3215 = smul.addr %s3214, 8
          %s3216 = scalar_lea.vmem %s7, %s3215
        $region72: #{stnkd_forward.2} parent=67 // pred_fallthru
          _
      $region68: #{stnkd_forward.2} parent=5 // pred_fallthru
        _
    $region6: #{stnkd_forward.2} parent=1 // loop_footer
      %s20 = sadd.s32 1, %s16
    $region7: #{stnkd_forward.2} parent=1 // loop_footer_branch
      %15 = sbr.rel target = $region3
    $region8: #{stnkd_forward.2} parent=1 // loop_exit
      _
    %3217 = vsyncpa [#allocation4], 1
    %s3218 = scalar_lea.sflag [#allocation4], 1
    %3219 = vsyncpa %s3218, 1

// kernel: stnkd_forward.3
$region0: #{stnkd_forward.3}
  #allocation0 [shape = 'u32[]', space=smem, size = 0x4, offset = 0x4, fixed_abs, tag = 'smem constant byte address 0x4 - core index']
  #allocation1 [shape = 'u32[144,128]{1,0:T(1,128)}', space=vmem, size = 0x12000, scoped, tag = 'internal scratch']
  %s0 = inlined_call_operand.vmem [shape: f32[2,1024], index: 0, kind: input, shape index: {}]
  %s1 = inlined_call_operand.vmem [shape: f32[1024,512], index: 1, kind: input, shape index: {}]
  %s2 = inlined_call_operand.vmem [shape: f32[1,512], index: 2, kind: input, shape index: {}]
  %s3 = inlined_call_operand.vmem [shape: f32[512,256], index: 3, kind: input, shape index: {}]
  %s4 = inlined_call_operand.vmem [shape: f32[1,256], index: 4, kind: input, shape index: {}]
  %s5 = inlined_call_operand.vmem [shape: f32[256,256], index: 5, kind: input, shape index: {}]
  %s6 = inlined_call_operand.vmem [shape: f32[1,256], index: 6, kind: input, shape index: {}]
  %s7 = inlined_call_operand.vmem [shape: f32[2,256], index: 7, kind: output, shape index: {}]
  %s8 = sld [smem:[#allocation0]]
  $region38: #{stnkd_forward.3} parent=0
    _
  %s10 = ssub.s32 1, %s8
  %s11 = scalar_select 0, %s10, %s8
  // Predicated region
  $region2: #{stnkd_forward.3} parent=0 // pred_check
    _
  $region3: #{stnkd_forward.3} parent=0 // pred_check_branch
    %13 = sbr.rel (0) target = $region5
  $region4: #{stnkd_forward.3} parent=0 // pred_region
    _
  $region5: #{stnkd_forward.3} parent=0 // pred_fallthru
    _
  // Predicated region
  $region6: #{stnkd_forward.3} parent=0 // pred_check
    _
  $region7: #{stnkd_forward.3} parent=0 // pred_check_branch
    %15 = sbr.rel (0) target = $region9
  $region8: #{stnkd_forward.3} parent=0 // pred_region
    _
  $region9: #{stnkd_forward.3} parent=0 // pred_fallthru
    _
  // Predicated region
  $region10: #{stnkd_forward.3} parent=0 // pred_check
    _
  $region11: #{stnkd_forward.3} parent=0 // pred_check_branch
    %17 = sbr.rel (0) target = $region13
  $region12: #{stnkd_forward.3} parent=0 // pred_region
    _
  $region13: #{stnkd_forward.3} parent=0 // pred_fallthru
    _
  // Predicated region
  $region14: #{stnkd_forward.3} parent=0 // pred_check
    _
  $region15: #{stnkd_forward.3} parent=0 // pred_check_branch
    %19 = sbr.rel (0) target = $region17
  $region16: #{stnkd_forward.3} parent=0 // pred_region
    _
  $region17: #{stnkd_forward.3} parent=0 // pred_fallthru
    _
  // Predicated region
  $region18: #{stnkd_forward.3} parent=0 // pred_check
    _
  $region19: #{stnkd_forward.3} parent=0 // pred_check_branch
    %21 = sbr.rel (0) target = $region21
  $region20: #{stnkd_forward.3} parent=0 // pred_region
    _
  $region21: #{stnkd_forward.3} parent=0 // pred_fallthru
    _
  // Predicated region
  $region22: #{stnkd_forward.3} parent=0 // pred_check
    _
  $region23: #{stnkd_forward.3} parent=0 // pred_check_branch
    %23 = sbr.rel (0) target = $region25
  $region24: #{stnkd_forward.3} parent=0 // pred_region
    _
  $region25: #{stnkd_forward.3} parent=0 // pred_fallthru
    _
  // Predicated region
  $region26: #{stnkd_forward.3} parent=0 // pred_check
    _
  $region27: #{stnkd_forward.3} parent=0 // pred_check_branch
    %25 = sbr.rel (0) target = $region29
  $region28: #{stnkd_forward.3} parent=0 // pred_region
    _
  $region29: #{stnkd_forward.3} parent=0 // pred_fallthru
    _
  %v26 = vld [vmem:[%s0] sm:$0xff]
  %v27 = vld [vmem:[%s0 + $0x8] sm:$0xff]
  %v28 = vld [vmem:[%s1] sm:$0xff]
  %v29 = vld [vmem:[%s1 + $0x8] sm:$0xff]
  %v30 = vld [vmem:[%s1 + $0x10] sm:$0xff]
  %v31 = vld [vmem:[%s1 + $0x18] sm:$0xff]
  %v32 = vld [vmem:[%s1 + $0x20] sm:$0xff]
  %v33 = vld [vmem:[%s1 + $0x28] sm:$0xff]
  %v34 = vld [vmem:[%s1 + $0x30] sm:$0xff]
  %v35 = vld [vmem:[%s1 + $0x38] sm:$0xff]
  %v36 = vld [vmem:[%s1 + $0x40] sm:$0xff]
  %v37 = vld [vmem:[%s1 + $0x48] sm:$0xff]
  %v38 = vld [vmem:[%s1 + $0x50] sm:$0xff]
  %v39 = vld [vmem:[%s1 + $0x58] sm:$0xff]
  %v40 = vld [vmem:[%s1 + $0x60] sm:$0xff]
  %v41 = vld [vmem:[%s1 + $0x68] sm:$0xff]
  %v42 = vld [vmem:[%s1 + $0x70] sm:$0xff]
  %v43 = vld [vmem:[%s1 + $0x78] sm:$0xff]
  %v44 = vld [vmem:[%s1 + $0x80] sm:$0xff]
  %v45 = vld [vmem:[%s1 + $0x88] sm:$0xff]
  %v46 = vld [vmem:[%s1 + $0x90] sm:$0xff]
  %v47 = vld [vmem:[%s1 + $0x98] sm:$0xff]
  %v48 = vld [vmem:[%s1 + $0xa0] sm:$0xff]
  %v49 = vld [vmem:[%s1 + $0xa8] sm:$0xff]
  %v50 = vld [vmem:[%s1 + $0xb0] sm:$0xff]
  %v51 = vld [vmem:[%s1 + $0xb8] sm:$0xff]
  %v52 = vld [vmem:[%s1 + $0xc0] sm:$0xff]
  %v53 = vld [vmem:[%s1 + $0xc8] sm:$0xff]
  %v54 = vld [vmem:[%s1 + $0xd0] sm:$0xff]
  %v55 = vld [vmem:[%s1 + $0xd8] sm:$0xff]
  %v56 = vld [vmem:[%s1 + $0xe0] sm:$0xff]
  %v57 = vld [vmem:[%s1 + $0xe8] sm:$0xff]
  %v58 = vld [vmem:[%s1 + $0xf0] sm:$0xff]
  %v59 = vld [vmem:[%s1 + $0xf8] sm:$0xff]
  %v60 = vld [vmem:[%s1 + $0x100] sm:$0xff]
  %v61 = vld [vmem:[%s1 + $0x108] sm:$0xff]
  %v62 = vld [vmem:[%s1 + $0x110] sm:$0xff]
  %v63 = vld [vmem:[%s1 + $0x118] sm:$0xff]
  %v64 = vld [vmem:[%s1 + $0x120] sm:$0xff]
  %v65 = vld [vmem:[%s1 + $0x128] sm:$0xff]
  %v66 = vld [vmem:[%s1 + $0x130] sm:$0xff]
  %v67 = vld [vmem:[%s1 + $0x138] sm:$0xff]
  %v68 = vld [vmem:[%s1 + $0x140] sm:$0xff]
  %v69 = vld [vmem:[%s1 + $0x148] sm:$0xff]
  %v70 = vld [vmem:[%s1 + $0x150] sm:$0xff]
  %v71 = vld [vmem:[%s1 + $0x158] sm:$0xff]
  %v72 = vld [vmem:[%s1 + $0x160] sm:$0xff]
  %v73 = vld [vmem:[%s1 + $0x168] sm:$0xff]
  %v74 = vld [vmem:[%s1 + $0x170] sm:$0xff]
  %v75 = vld [vmem:[%s1 + $0x178] sm:$0xff]
  %v76 = vld [vmem:[%s1 + $0x180] sm:$0xff]
  %v77 = vld [vmem:[%s1 + $0x188] sm:$0xff]
  %v78 = vld [vmem:[%s1 + $0x190] sm:$0xff]
  %v79 = vld [vmem:[%s1 + $0x198] sm:$0xff]
  %v80 = vld [vmem:[%s1 + $0x1a0] sm:$0xff]
  %v81 = vld [vmem:[%s1 + $0x1a8] sm:$0xff]
  %v82 = vld [vmem:[%s1 + $0x1b0] sm:$0xff]
  %v83 = vld [vmem:[%s1 + $0x1b8] sm:$0xff]
  %v84 = vld [vmem:[%s1 + $0x1c0] sm:$0xff]
  %v85 = vld [vmem:[%s1 + $0x1c8] sm:$0xff]
  %v86 = vld [vmem:[%s1 + $0x1d0] sm:$0xff]
  %v87 = vld [vmem:[%s1 + $0x1d8] sm:$0xff]
  %v88 = vld [vmem:[%s1 + $0x1e0] sm:$0xff]
  %v89 = vld [vmem:[%s1 + $0x1e8] sm:$0xff]
  %v90 = vld [vmem:[%s1 + $0x1f0] sm:$0xff]
  %v91 = vld [vmem:[%s1 + $0x1f8] sm:$0xff]
  %v92 = vld [vmem:[%s1 + $0x200] sm:$0xff]
  %v93 = vld [vmem:[%s1 + $0x208] sm:$0xff]
  %v94 = vld [vmem:[%s1 + $0x210] sm:$0xff]
  %v95 = vld [vmem:[%s1 + $0x218] sm:$0xff]
  %v96 = vld [vmem:[%s1 + $0x220] sm:$0xff]
  %v97 = vld [vmem:[%s1 + $0x228] sm:$0xff]
  %v98 = vld [vmem:[%s1 + $0x230] sm:$0xff]
  %v99 = vld [vmem:[%s1 + $0x238] sm:$0xff]
  %v100 = vld [vmem:[%s1 + $0x240] sm:$0xff]
  %v101 = vld [vmem:[%s1 + $0x248] sm:$0xff]
  %v102 = vld [vmem:[%s1 + $0x250] sm:$0xff]
  %v103 = vld [vmem:[%s1 + $0x258] sm:$0xff]
  %v104 = vld [vmem:[%s1 + $0x260] sm:$0xff]
  %v105 = vld [vmem:[%s1 + $0x268] sm:$0xff]
  %v106 = vld [vmem:[%s1 + $0x270] sm:$0xff]
  %v107 = vld [vmem:[%s1 + $0x278] sm:$0xff]
  %v108 = vld [vmem:[%s1 + $0x280] sm:$0xff]
  %v109 = vld [vmem:[%s1 + $0x288] sm:$0xff]
  %v110 = vld [vmem:[%s1 + $0x290] sm:$0xff]
  %v111 = vld [vmem:[%s1 + $0x298] sm:$0xff]
  %v112 = vld [vmem:[%s1 + $0x2a0] sm:$0xff]
  %v113 = vld [vmem:[%s1 + $0x2a8] sm:$0xff]
  %v114 = vld [vmem:[%s1 + $0x2b0] sm:$0xff]
  %v115 = vld [vmem:[%s1 + $0x2b8] sm:$0xff]
  %v116 = vld [vmem:[%s1 + $0x2c0] sm:$0xff]
  %v117 = vld [vmem:[%s1 + $0x2c8] sm:$0xff]
  %v118 = vld [vmem:[%s1 + $0x2d0] sm:$0xff]
  %v119 = vld [vmem:[%s1 + $0x2d8] sm:$0xff]
  %v120 = vld [vmem:[%s1 + $0x2e0] sm:$0xff]
  %v121 = vld [vmem:[%s1 + $0x2e8] sm:$0xff]
  %v122 = vld [vmem:[%s1 + $0x2f0] sm:$0xff]
  %v123 = vld [vmem:[%s1 + $0x2f8] sm:$0xff]
  %v124 = vld [vmem:[%s1 + $0x300] sm:$0xff]
  %v125 = vld [vmem:[%s1 + $0x308] sm:$0xff]
  %v126 = vld [vmem:[%s1 + $0x310] sm:$0xff]
  %v127 = vld [vmem:[%s1 + $0x318] sm:$0xff]
  %v128 = vld [vmem:[%s1 + $0x320] sm:$0xff]
  %v129 = vld [vmem:[%s1 + $0x328] sm:$0xff]
  %v130 = vld [vmem:[%s1 + $0x330] sm:$0xff]
  %v131 = vld [vmem:[%s1 + $0x338] sm:$0xff]
  %v132 = vld [vmem:[%s1 + $0x340] sm:$0xff]
  %v133 = vld [vmem:[%s1 + $0x348] sm:$0xff]
  %v134 = vld [vmem:[%s1 + $0x350] sm:$0xff]
  %v135 = vld [vmem:[%s1 + $0x358] sm:$0xff]
  %v136 = vld [vmem:[%s1 + $0x360] sm:$0xff]
  %v137 = vld [vmem:[%s1 + $0x368] sm:$0xff]
  %v138 = vld [vmem:[%s1 + $0x370] sm:$0xff]
  %v139 = vld [vmem:[%s1 + $0x378] sm:$0xff]
  %v140 = vld [vmem:[%s1 + $0x380] sm:$0xff]
  %v141 = vld [vmem:[%s1 + $0x388] sm:$0xff]
  %v142 = vld [vmem:[%s1 + $0x390] sm:$0xff]
  %v143 = vld [vmem:[%s1 + $0x398] sm:$0xff]
  %v144 = vld [vmem:[%s1 + $0x3a0] sm:$0xff]
  %v145 = vld [vmem:[%s1 + $0x3a8] sm:$0xff]
  %v146 = vld [vmem:[%s1 + $0x3b0] sm:$0xff]
  %v147 = vld [vmem:[%s1 + $0x3b8] sm:$0xff]
  %v148 = vld [vmem:[%s1 + $0x3c0] sm:$0xff]
  %v149 = vld [vmem:[%s1 + $0x3c8] sm:$0xff]
  %v150 = vld [vmem:[%s1 + $0x3d0] sm:$0xff]
  %v151 = vld [vmem:[%s1 + $0x3d8] sm:$0xff]
  %v152 = vld [vmem:[%s1 + $0x3e0] sm:$0xff]
  %v153 = vld [vmem:[%s1 + $0x3e8] sm:$0xff]
  %v154 = vld [vmem:[%s1 + $0x3f0] sm:$0xff]
  %v155 = vld [vmem:[%s1 + $0x3f8] sm:$0xff]
  %v156 = vld [vmem:[%s1 + $0x400] sm:$0xff]
  %v157 = vld [vmem:[%s1 + $0x408] sm:$0xff]
  %v158 = vld [vmem:[%s1 + $0x410] sm:$0xff]
  %v159 = vld [vmem:[%s1 + $0x418] sm:$0xff]
  %v160 = vld [vmem:[%s1 + $0x420] sm:$0xff]
  %v161 = vld [vmem:[%s1 + $0x428] sm:$0xff]
  %v162 = vld [vmem:[%s1 + $0x430] sm:$0xff]
  %v163 = vld [vmem:[%s1 + $0x438] sm:$0xff]
  %v164 = vld [vmem:[%s1 + $0x440] sm:$0xff]
  %v165 = vld [vmem:[%s1 + $0x448] sm:$0xff]
  %v166 = vld [vmem:[%s1 + $0x450] sm:$0xff]
  %v167 = vld [vmem:[%s1 + $0x458] sm:$0xff]
  %v168 = vld [vmem:[%s1 + $0x460] sm:$0xff]
  %v169 = vld [vmem:[%s1 + $0x468] sm:$0xff]
  %v170 = vld [vmem:[%s1 + $0x470] sm:$0xff]
  %v171 = vld [vmem:[%s1 + $0x478] sm:$0xff]
  %v172 = vld [vmem:[%s1 + $0x480] sm:$0xff]
  %v173 = vld [vmem:[%s1 + $0x488] sm:$0xff]
  %v174 = vld [vmem:[%s1 + $0x490] sm:$0xff]
  %v175 = vld [vmem:[%s1 + $0x498] sm:$0xff]
  %v176 = vld [vmem:[%s1 + $0x4a0] sm:$0xff]
  %v177 = vld [vmem:[%s1 + $0x4a8] sm:$0xff]
  %v178 = vld [vmem:[%s1 + $0x4b0] sm:$0xff]
  %v179 = vld [vmem:[%s1 + $0x4b8] sm:$0xff]
  %v180 = vld [vmem:[%s1 + $0x4c0] sm:$0xff]
  %v181 = vld [vmem:[%s1 + $0x4c8] sm:$0xff]
  %v182 = vld [vmem:[%s1 + $0x4d0] sm:$0xff]
  %v183 = vld [vmem:[%s1 + $0x4d8] sm:$0xff]
  %v184 = vld [vmem:[%s1 + $0x4e0] sm:$0xff]
  %v185 = vld [vmem:[%s1 + $0x4e8] sm:$0xff]
  %v186 = vld [vmem:[%s1 + $0x4f0] sm:$0xff]
  %v187 = vld [vmem:[%s1 + $0x4f8] sm:$0xff]
  %v188 = vld [vmem:[%s1 + $0x500] sm:$0xff]
  %v189 = vld [vmem:[%s1 + $0x508] sm:$0xff]
  %v190 = vld [vmem:[%s1 + $0x510] sm:$0xff]
  %v191 = vld [vmem:[%s1 + $0x518] sm:$0xff]
  %v192 = vld [vmem:[%s1 + $0x520] sm:$0xff]
  %v193 = vld [vmem:[%s1 + $0x528] sm:$0xff]
  %v194 = vld [vmem:[%s1 + $0x530] sm:$0xff]
  %v195 = vld [vmem:[%s1 + $0x538] sm:$0xff]
  %v196 = vld [vmem:[%s1 + $0x540] sm:$0xff]
  %v197 = vld [vmem:[%s1 + $0x548] sm:$0xff]
  %v198 = vld [vmem:[%s1 + $0x550] sm:$0xff]
  %v199 = vld [vmem:[%s1 + $0x558] sm:$0xff]
  %v200 = vld [vmem:[%s1 + $0x560] sm:$0xff]
  %v201 = vld [vmem:[%s1 + $0x568] sm:$0xff]
  %v202 = vld [vmem:[%s1 + $0x570] sm:$0xff]
  %v203 = vld [vmem:[%s1 + $0x578] sm:$0xff]
  %v204 = vld [vmem:[%s1 + $0x580] sm:$0xff]
  %v205 = vld [vmem:[%s1 + $0x588] sm:$0xff]
  %v206 = vld [vmem:[%s1 + $0x590] sm:$0xff]
  %v207 = vld [vmem:[%s1 + $0x598] sm:$0xff]
  %v208 = vld [vmem:[%s1 + $0x5a0] sm:$0xff]
  %v209 = vld [vmem:[%s1 + $0x5a8] sm:$0xff]
  %v210 = vld [vmem:[%s1 + $0x5b0] sm:$0xff]
  %v211 = vld [vmem:[%s1 + $0x5b8] sm:$0xff]
  %v212 = vld [vmem:[%s1 + $0x5c0] sm:$0xff]
  %v213 = vld [vmem:[%s1 + $0x5c8] sm:$0xff]
  %v214 = vld [vmem:[%s1 + $0x5d0] sm:$0xff]
  %v215 = vld [vmem:[%s1 + $0x5d8] sm:$0xff]
  %v216 = vld [vmem:[%s1 + $0x5e0] sm:$0xff]
  %v217 = vld [vmem:[%s1 + $0x5e8] sm:$0xff]
  %v218 = vld [vmem:[%s1 + $0x5f0] sm:$0xff]
  %v219 = vld [vmem:[%s1 + $0x5f8] sm:$0xff]
  %v220 = vld [vmem:[%s1 + $0x600] sm:$0xff]
  %v221 = vld [vmem:[%s1 + $0x608] sm:$0xff]
  %v222 = vld [vmem:[%s1 + $0x610] sm:$0xff]
  %v223 = vld [vmem:[%s1 + $0x618] sm:$0xff]
  %v224 = vld [vmem:[%s1 + $0x620] sm:$0xff]
  %v225 = vld [vmem:[%s1 + $0x628] sm:$0xff]
  %v226 = vld [vmem:[%s1 + $0x630] sm:$0xff]
  %v227 = vld [vmem:[%s1 + $0x638] sm:$0xff]
  %v228 = vld [vmem:[%s1 + $0x640] sm:$0xff]
  %v229 = vld [vmem:[%s1 + $0x648] sm:$0xff]
  %v230 = vld [vmem:[%s1 + $0x650] sm:$0xff]
  %v231 = vld [vmem:[%s1 + $0x658] sm:$0xff]
  %v232 = vld [vmem:[%s1 + $0x660] sm:$0xff]
  %v233 = vld [vmem:[%s1 + $0x668] sm:$0xff]
  %v234 = vld [vmem:[%s1 + $0x670] sm:$0xff]
  %v235 = vld [vmem:[%s1 + $0x678] sm:$0xff]
  %v236 = vld [vmem:[%s1 + $0x680] sm:$0xff]
  %v237 = vld [vmem:[%s1 + $0x688] sm:$0xff]
  %v238 = vld [vmem:[%s1 + $0x690] sm:$0xff]
  %v239 = vld [vmem:[%s1 + $0x698] sm:$0xff]
  %v240 = vld [vmem:[%s1 + $0x6a0] sm:$0xff]
  %v241 = vld [vmem:[%s1 + $0x6a8] sm:$0xff]
  %v242 = vld [vmem:[%s1 + $0x6b0] sm:$0xff]
  %v243 = vld [vmem:[%s1 + $0x6b8] sm:$0xff]
  %v244 = vld [vmem:[%s1 + $0x6c0] sm:$0xff]
  %v245 = vld [vmem:[%s1 + $0x6c8] sm:$0xff]
  %v246 = vld [vmem:[%s1 + $0x6d0] sm:$0xff]
  %v247 = vld [vmem:[%s1 + $0x6d8] sm:$0xff]
  %v248 = vld [vmem:[%s1 + $0x6e0] sm:$0xff]
  %v249 = vld [vmem:[%s1 + $0x6e8] sm:$0xff]
  %v250 = vld [vmem:[%s1 + $0x6f0] sm:$0xff]
  %v251 = vld [vmem:[%s1 + $0x6f8] sm:$0xff]
  %v252 = vld [vmem:[%s1 + $0x700] sm:$0xff]
  %v253 = vld [vmem:[%s1 + $0x708] sm:$0xff]
  %v254 = vld [vmem:[%s1 + $0x710] sm:$0xff]
  %v255 = vld [vmem:[%s1 + $0x718] sm:$0xff]
  %v256 = vld [vmem:[%s1 + $0x720] sm:$0xff]
  %v257 = vld [vmem:[%s1 + $0x728] sm:$0xff]
  %v258 = vld [vmem:[%s1 + $0x730] sm:$0xff]
  %v259 = vld [vmem:[%s1 + $0x738] sm:$0xff]
  %v260 = vld [vmem:[%s1 + $0x740] sm:$0xff]
  %v261 = vld [vmem:[%s1 + $0x748] sm:$0xff]
  %v262 = vld [vmem:[%s1 + $0x750] sm:$0xff]
  %v263 = vld [vmem:[%s1 + $0x758] sm:$0xff]
  %v264 = vld [vmem:[%s1 + $0x760] sm:$0xff]
  %v265 = vld [vmem:[%s1 + $0x768] sm:$0xff]
  %v266 = vld [vmem:[%s1 + $0x770] sm:$0xff]
  %v267 = vld [vmem:[%s1 + $0x778] sm:$0xff]
  %v268 = vld [vmem:[%s1 + $0x780] sm:$0xff]
  %v269 = vld [vmem:[%s1 + $0x788] sm:$0xff]
  %v270 = vld [vmem:[%s1 + $0x790] sm:$0xff]
  %v271 = vld [vmem:[%s1 + $0x798] sm:$0xff]
  %v272 = vld [vmem:[%s1 + $0x7a0] sm:$0xff]
  %v273 = vld [vmem:[%s1 + $0x7a8] sm:$0xff]
  %v274 = vld [vmem:[%s1 + $0x7b0] sm:$0xff]
  %v275 = vld [vmem:[%s1 + $0x7b8] sm:$0xff]
  %v276 = vld [vmem:[%s1 + $0x7c0] sm:$0xff]
  %v277 = vld [vmem:[%s1 + $0x7c8] sm:$0xff]
  %v278 = vld [vmem:[%s1 + $0x7d0] sm:$0xff]
  %v279 = vld [vmem:[%s1 + $0x7d8] sm:$0xff]
  %v280 = vld [vmem:[%s1 + $0x7e0] sm:$0xff]
  %v281 = vld [vmem:[%s1 + $0x7e8] sm:$0xff]
  %v282 = vld [vmem:[%s1 + $0x7f0] sm:$0xff]
  %v283 = vld [vmem:[%s1 + $0x7f8] sm:$0xff]
  %v284 = vld [vmem:[%s1 + $0x800] sm:$0xff]
  %v285 = vld [vmem:[%s1 + $0x808] sm:$0xff]
  %v286 = vld [vmem:[%s1 + $0x810] sm:$0xff]
  %v287 = vld [vmem:[%s1 + $0x818] sm:$0xff]
  %v288 = vld [vmem:[%s1 + $0x820] sm:$0xff]
  %v289 = vld [vmem:[%s1 + $0x828] sm:$0xff]
  %v290 = vld [vmem:[%s1 + $0x830] sm:$0xff]
  %v291 = vld [vmem:[%s1 + $0x838] sm:$0xff]
  %v292 = vld [vmem:[%s1 + $0x840] sm:$0xff]
  %v293 = vld [vmem:[%s1 + $0x848] sm:$0xff]
  %v294 = vld [vmem:[%s1 + $0x850] sm:$0xff]
  %v295 = vld [vmem:[%s1 + $0x858] sm:$0xff]
  %v296 = vld [vmem:[%s1 + $0x860] sm:$0xff]
  %v297 = vld [vmem:[%s1 + $0x868] sm:$0xff]
  %v298 = vld [vmem:[%s1 + $0x870] sm:$0xff]
  %v299 = vld [vmem:[%s1 + $0x878] sm:$0xff]
  %v300 = vld [vmem:[%s1 + $0x880] sm:$0xff]
  %v301 = vld [vmem:[%s1 + $0x888] sm:$0xff]
  %v302 = vld [vmem:[%s1 + $0x890] sm:$0xff]
  %v303 = vld [vmem:[%s1 + $0x898] sm:$0xff]
  %v304 = vld [vmem:[%s1 + $0x8a0] sm:$0xff]
  %v305 = vld [vmem:[%s1 + $0x8a8] sm:$0xff]
  %v306 = vld [vmem:[%s1 + $0x8b0] sm:$0xff]
  %v307 = vld [vmem:[%s1 + $0x8b8] sm:$0xff]
  %v308 = vld [vmem:[%s1 + $0x8c0] sm:$0xff]
  %v309 = vld [vmem:[%s1 + $0x8c8] sm:$0xff]
  %v310 = vld [vmem:[%s1 + $0x8d0] sm:$0xff]
  %v311 = vld [vmem:[%s1 + $0x8d8] sm:$0xff]
  %v312 = vld [vmem:[%s1 + $0x8e0] sm:$0xff]
  %v313 = vld [vmem:[%s1 + $0x8e8] sm:$0xff]
  %v314 = vld [vmem:[%s1 + $0x8f0] sm:$0xff]
  %v315 = vld [vmem:[%s1 + $0x8f8] sm:$0xff]
  %v316 = vld [vmem:[%s1 + $0x900] sm:$0xff]
  %v317 = vld [vmem:[%s1 + $0x908] sm:$0xff]
  %v318 = vld [vmem:[%s1 + $0x910] sm:$0xff]
  %v319 = vld [vmem:[%s1 + $0x918] sm:$0xff]
  %v320 = vld [vmem:[%s1 + $0x920] sm:$0xff]
  %v321 = vld [vmem:[%s1 + $0x928] sm:$0xff]
  %v322 = vld [vmem:[%s1 + $0x930] sm:$0xff]
  %v323 = vld [vmem:[%s1 + $0x938] sm:$0xff]
  %v324 = vld [vmem:[%s1 + $0x940] sm:$0xff]
  %v325 = vld [vmem:[%s1 + $0x948] sm:$0xff]
  %v326 = vld [vmem:[%s1 + $0x950] sm:$0xff]
  %v327 = vld [vmem:[%s1 + $0x958] sm:$0xff]
  %v328 = vld [vmem:[%s1 + $0x960] sm:$0xff]
  %v329 = vld [vmem:[%s1 + $0x968] sm:$0xff]
  %v330 = vld [vmem:[%s1 + $0x970] sm:$0xff]
  %v331 = vld [vmem:[%s1 + $0x978] sm:$0xff]
  %v332 = vld [vmem:[%s1 + $0x980] sm:$0xff]
  %v333 = vld [vmem:[%s1 + $0x988] sm:$0xff]
  %v334 = vld [vmem:[%s1 + $0x990] sm:$0xff]
  %v335 = vld [vmem:[%s1 + $0x998] sm:$0xff]
  %v336 = vld [vmem:[%s1 + $0x9a0] sm:$0xff]
  %v337 = vld [vmem:[%s1 + $0x9a8] sm:$0xff]
  %v338 = vld [vmem:[%s1 + $0x9b0] sm:$0xff]
  %v339 = vld [vmem:[%s1 + $0x9b8] sm:$0xff]
  %v340 = vld [vmem:[%s1 + $0x9c0] sm:$0xff]
  %v341 = vld [vmem:[%s1 + $0x9c8] sm:$0xff]
  %v342 = vld [vmem:[%s1 + $0x9d0] sm:$0xff]
  %v343 = vld [vmem:[%s1 + $0x9d8] sm:$0xff]
  %v344 = vld [vmem:[%s1 + $0x9e0] sm:$0xff]
  %v345 = vld [vmem:[%s1 + $0x9e8] sm:$0xff]
  %v346 = vld [vmem:[%s1 + $0x9f0] sm:$0xff]
  %v347 = vld [vmem:[%s1 + $0x9f8] sm:$0xff]
  %v348 = vld [vmem:[%s1 + $0xa00] sm:$0xff]
  %v349 = vld [vmem:[%s1 + $0xa08] sm:$0xff]
  %v350 = vld [vmem:[%s1 + $0xa10] sm:$0xff]
  %v351 = vld [vmem:[%s1 + $0xa18] sm:$0xff]
  %v352 = vld [vmem:[%s1 + $0xa20] sm:$0xff]
  %v353 = vld [vmem:[%s1 + $0xa28] sm:$0xff]
  %v354 = vld [vmem:[%s1 + $0xa30] sm:$0xff]
  %v355 = vld [vmem:[%s1 + $0xa38] sm:$0xff]
  %v356 = vld [vmem:[%s1 + $0xa40] sm:$0xff]
  %v357 = vld [vmem:[%s1 + $0xa48] sm:$0xff]
  %v358 = vld [vmem:[%s1 + $0xa50] sm:$0xff]
  %v359 = vld [vmem:[%s1 + $0xa58] sm:$0xff]
  %v360 = vld [vmem:[%s1 + $0xa60] sm:$0xff]
  %v361 = vld [vmem:[%s1 + $0xa68] sm:$0xff]
  %v362 = vld [vmem:[%s1 + $0xa70] sm:$0xff]
  %v363 = vld [vmem:[%s1 + $0xa78] sm:$0xff]
  %v364 = vld [vmem:[%s1 + $0xa80] sm:$0xff]
  %v365 = vld [vmem:[%s1 + $0xa88] sm:$0xff]
  %v366 = vld [vmem:[%s1 + $0xa90] sm:$0xff]
  %v367 = vld [vmem:[%s1 + $0xa98] sm:$0xff]
  %v368 = vld [vmem:[%s1 + $0xaa0] sm:$0xff]
  %v369 = vld [vmem:[%s1 + $0xaa8] sm:$0xff]
  %v370 = vld [vmem:[%s1 + $0xab0] sm:$0xff]
  %v371 = vld [vmem:[%s1 + $0xab8] sm:$0xff]
  %v372 = vld [vmem:[%s1 + $0xac0] sm:$0xff]
  %v373 = vld [vmem:[%s1 + $0xac8] sm:$0xff]
  %v374 = vld [vmem:[%s1 + $0xad0] sm:$0xff]
  %v375 = vld [vmem:[%s1 + $0xad8] sm:$0xff]
  %v376 = vld [vmem:[%s1 + $0xae0] sm:$0xff]
  %v377 = vld [vmem:[%s1 + $0xae8] sm:$0xff]
  %v378 = vld [vmem:[%s1 + $0xaf0] sm:$0xff]
  %v379 = vld [vmem:[%s1 + $0xaf8] sm:$0xff]
  %v380 = vld [vmem:[%s1 + $0xb00] sm:$0xff]
  %v381 = vld [vmem:[%s1 + $0xb08] sm:$0xff]
  %v382 = vld [vmem:[%s1 + $0xb10] sm:$0xff]
  %v383 = vld [vmem:[%s1 + $0xb18] sm:$0xff]
  %v384 = vld [vmem:[%s1 + $0xb20] sm:$0xff]
  %v385 = vld [vmem:[%s1 + $0xb28] sm:$0xff]
  %v386 = vld [vmem:[%s1 + $0xb30] sm:$0xff]
  %v387 = vld [vmem:[%s1 + $0xb38] sm:$0xff]
  %v388 = vld [vmem:[%s1 + $0xb40] sm:$0xff]
  %v389 = vld [vmem:[%s1 + $0xb48] sm:$0xff]
  %v390 = vld [vmem:[%s1 + $0xb50] sm:$0xff]
  %v391 = vld [vmem:[%s1 + $0xb58] sm:$0xff]
  %v392 = vld [vmem:[%s1 + $0xb60] sm:$0xff]
  %v393 = vld [vmem:[%s1 + $0xb68] sm:$0xff]
  %v394 = vld [vmem:[%s1 + $0xb70] sm:$0xff]
  %v395 = vld [vmem:[%s1 + $0xb78] sm:$0xff]
  %v396 = vld [vmem:[%s1 + $0xb80] sm:$0xff]
  %v397 = vld [vmem:[%s1 + $0xb88] sm:$0xff]
  %v398 = vld [vmem:[%s1 + $0xb90] sm:$0xff]
  %v399 = vld [vmem:[%s1 + $0xb98] sm:$0xff]
  %v400 = vld [vmem:[%s1 + $0xba0] sm:$0xff]
  %v401 = vld [vmem:[%s1 + $0xba8] sm:$0xff]
  %v402 = vld [vmem:[%s1 + $0xbb0] sm:$0xff]
  %v403 = vld [vmem:[%s1 + $0xbb8] sm:$0xff]
  %v404 = vld [vmem:[%s1 + $0xbc0] sm:$0xff]
  %v405 = vld [vmem:[%s1 + $0xbc8] sm:$0xff]
  %v406 = vld [vmem:[%s1 + $0xbd0] sm:$0xff]
  %v407 = vld [vmem:[%s1 + $0xbd8] sm:$0xff]
  %v408 = vld [vmem:[%s1 + $0xbe0] sm:$0xff]
  %v409 = vld [vmem:[%s1 + $0xbe8] sm:$0xff]
  %v410 = vld [vmem:[%s1 + $0xbf0] sm:$0xff]
  %v411 = vld [vmem:[%s1 + $0xbf8] sm:$0xff]
  %v412 = vld [vmem:[%s1 + $0xc00] sm:$0xff]
  %v413 = vld [vmem:[%s1 + $0xc08] sm:$0xff]
  %v414 = vld [vmem:[%s1 + $0xc10] sm:$0xff]
  %v415 = vld [vmem:[%s1 + $0xc18] sm:$0xff]
  %v416 = vld [vmem:[%s1 + $0xc20] sm:$0xff]
  %v417 = vld [vmem:[%s1 + $0xc28] sm:$0xff]
  %v418 = vld [vmem:[%s1 + $0xc30] sm:$0xff]
  %v419 = vld [vmem:[%s1 + $0xc38] sm:$0xff]
  %v420 = vld [vmem:[%s1 + $0xc40] sm:$0xff]
  %v421 = vld [vmem:[%s1 + $0xc48] sm:$0xff]
  %v422 = vld [vmem:[%s1 + $0xc50] sm:$0xff]
  %v423 = vld [vmem:[%s1 + $0xc58] sm:$0xff]
  %v424 = vld [vmem:[%s1 + $0xc60] sm:$0xff]
  %v425 = vld [vmem:[%s1 + $0xc68] sm:$0xff]
  %v426 = vld [vmem:[%s1 + $0xc70] sm:$0xff]
  %v427 = vld [vmem:[%s1 + $0xc78] sm:$0xff]
  %v428 = vld [vmem:[%s1 + $0xc80] sm:$0xff]
  %v429 = vld [vmem:[%s1 + $0xc88] sm:$0xff]
  %v430 = vld [vmem:[%s1 + $0xc90] sm:$0xff]
  %v431 = vld [vmem:[%s1 + $0xc98] sm:$0xff]
  %v432 = vld [vmem:[%s1 + $0xca0] sm:$0xff]
  %v433 = vld [vmem:[%s1 + $0xca8] sm:$0xff]
  %v434 = vld [vmem:[%s1 + $0xcb0] sm:$0xff]
  %v435 = vld [vmem:[%s1 + $0xcb8] sm:$0xff]
  %v436 = vld [vmem:[%s1 + $0xcc0] sm:$0xff]
  %v437 = vld [vmem:[%s1 + $0xcc8] sm:$0xff]
  %v438 = vld [vmem:[%s1 + $0xcd0] sm:$0xff]
  %v439 = vld [vmem:[%s1 + $0xcd8] sm:$0xff]
  %v440 = vld [vmem:[%s1 + $0xce0] sm:$0xff]
  %v441 = vld [vmem:[%s1 + $0xce8] sm:$0xff]
  %v442 = vld [vmem:[%s1 + $0xcf0] sm:$0xff]
  %v443 = vld [vmem:[%s1 + $0xcf8] sm:$0xff]
  %v444 = vld [vmem:[%s1 + $0xd00] sm:$0xff]
  %v445 = vld [vmem:[%s1 + $0xd08] sm:$0xff]
  %v446 = vld [vmem:[%s1 + $0xd10] sm:$0xff]
  %v447 = vld [vmem:[%s1 + $0xd18] sm:$0xff]
  %v448 = vld [vmem:[%s1 + $0xd20] sm:$0xff]
  %v449 = vld [vmem:[%s1 + $0xd28] sm:$0xff]
  %v450 = vld [vmem:[%s1 + $0xd30] sm:$0xff]
  %v451 = vld [vmem:[%s1 + $0xd38] sm:$0xff]
  %v452 = vld [vmem:[%s1 + $0xd40] sm:$0xff]
  %v453 = vld [vmem:[%s1 + $0xd48] sm:$0xff]
  %v454 = vld [vmem:[%s1 + $0xd50] sm:$0xff]
  %v455 = vld [vmem:[%s1 + $0xd58] sm:$0xff]
  %v456 = vld [vmem:[%s1 + $0xd60] sm:$0xff]
  %v457 = vld [vmem:[%s1 + $0xd68] sm:$0xff]
  %v458 = vld [vmem:[%s1 + $0xd70] sm:$0xff]
  %v459 = vld [vmem:[%s1 + $0xd78] sm:$0xff]
  %v460 = vld [vmem:[%s1 + $0xd80] sm:$0xff]
  %v461 = vld [vmem:[%s1 + $0xd88] sm:$0xff]
  %v462 = vld [vmem:[%s1 + $0xd90] sm:$0xff]
  %v463 = vld [vmem:[%s1 + $0xd98] sm:$0xff]
  %v464 = vld [vmem:[%s1 + $0xda0] sm:$0xff]
  %v465 = vld [vmem:[%s1 + $0xda8] sm:$0xff]
  %v466 = vld [vmem:[%s1 + $0xdb0] sm:$0xff]
  %v467 = vld [vmem:[%s1 + $0xdb8] sm:$0xff]
  %v468 = vld [vmem:[%s1 + $0xdc0] sm:$0xff]
  %v469 = vld [vmem:[%s1 + $0xdc8] sm:$0xff]
  %v470 = vld [vmem:[%s1 + $0xdd0] sm:$0xff]
  %v471 = vld [vmem:[%s1 + $0xdd8] sm:$0xff]
  %v472 = vld [vmem:[%s1 + $0xde0] sm:$0xff]
  %v473 = vld [vmem:[%s1 + $0xde8] sm:$0xff]
  %v474 = vld [vmem:[%s1 + $0xdf0] sm:$0xff]
  %v475 = vld [vmem:[%s1 + $0xdf8] sm:$0xff]
  %v476 = vld [vmem:[%s1 + $0xe00] sm:$0xff]
  %v477 = vld [vmem:[%s1 + $0xe08] sm:$0xff]
  %v478 = vld [vmem:[%s1 + $0xe10] sm:$0xff]
  %v479 = vld [vmem:[%s1 + $0xe18] sm:$0xff]
  %v480 = vld [vmem:[%s1 + $0xe20] sm:$0xff]
  %v481 = vld [vmem:[%s1 + $0xe28] sm:$0xff]
  %v482 = vld [vmem:[%s1 + $0xe30] sm:$0xff]
  %v483 = vld [vmem:[%s1 + $0xe38] sm:$0xff]
  %v484 = vld [vmem:[%s1 + $0xe40] sm:$0xff]
  %v485 = vld [vmem:[%s1 + $0xe48] sm:$0xff]
  %v486 = vld [vmem:[%s1 + $0xe50] sm:$0xff]
  %v487 = vld [vmem:[%s1 + $0xe58] sm:$0xff]
  %v488 = vld [vmem:[%s1 + $0xe60] sm:$0xff]
  %v489 = vld [vmem:[%s1 + $0xe68] sm:$0xff]
  %v490 = vld [vmem:[%s1 + $0xe70] sm:$0xff]
  %v491 = vld [vmem:[%s1 + $0xe78] sm:$0xff]
  %v492 = vld [vmem:[%s1 + $0xe80] sm:$0xff]
  %v493 = vld [vmem:[%s1 + $0xe88] sm:$0xff]
  %v494 = vld [vmem:[%s1 + $0xe90] sm:$0xff]
  %v495 = vld [vmem:[%s1 + $0xe98] sm:$0xff]
  %v496 = vld [vmem:[%s1 + $0xea0] sm:$0xff]
  %v497 = vld [vmem:[%s1 + $0xea8] sm:$0xff]
  %v498 = vld [vmem:[%s1 + $0xeb0] sm:$0xff]
  %v499 = vld [vmem:[%s1 + $0xeb8] sm:$0xff]
  %v500 = vld [vmem:[%s1 + $0xec0] sm:$0xff]
  %v501 = vld [vmem:[%s1 + $0xec8] sm:$0xff]
  %v502 = vld [vmem:[%s1 + $0xed0] sm:$0xff]
  %v503 = vld [vmem:[%s1 + $0xed8] sm:$0xff]
  %v504 = vld [vmem:[%s1 + $0xee0] sm:$0xff]
  %v505 = vld [vmem:[%s1 + $0xee8] sm:$0xff]
  %v506 = vld [vmem:[%s1 + $0xef0] sm:$0xff]
  %v507 = vld [vmem:[%s1 + $0xef8] sm:$0xff]
  %v508 = vld [vmem:[%s1 + $0xf00] sm:$0xff]
  %v509 = vld [vmem:[%s1 + $0xf08] sm:$0xff]
  %v510 = vld [vmem:[%s1 + $0xf10] sm:$0xff]
  %v511 = vld [vmem:[%s1 + $0xf18] sm:$0xff]
  %v512 = vld [vmem:[%s1 + $0xf20] sm:$0xff]
  %v513 = vld [vmem:[%s1 + $0xf28] sm:$0xff]
  %v514 = vld [vmem:[%s1 + $0xf30] sm:$0xff]
  %v515 = vld [vmem:[%s1 + $0xf38] sm:$0xff]
  %v516 = vld [vmem:[%s1 + $0xf40] sm:$0xff]
  %v517 = vld [vmem:[%s1 + $0xf48] sm:$0xff]
  %v518 = vld [vmem:[%s1 + $0xf50] sm:$0xff]
  %v519 = vld [vmem:[%s1 + $0xf58] sm:$0xff]
  %v520 = vld [vmem:[%s1 + $0xf60] sm:$0xff]
  %v521 = vld [vmem:[%s1 + $0xf68] sm:$0xff]
  %v522 = vld [vmem:[%s1 + $0xf70] sm:$0xff]
  %v523 = vld [vmem:[%s1 + $0xf78] sm:$0xff]
  %v524 = vld [vmem:[%s1 + $0xf80] sm:$0xff]
  %v525 = vld [vmem:[%s1 + $0xf88] sm:$0xff]
  %v526 = vld [vmem:[%s1 + $0xf90] sm:$0xff]
  %v527 = vld [vmem:[%s1 + $0xf98] sm:$0xff]
  %v528 = vld [vmem:[%s1 + $0xfa0] sm:$0xff]
  %v529 = vld [vmem:[%s1 + $0xfa8] sm:$0xff]
  %v530 = vld [vmem:[%s1 + $0xfb0] sm:$0xff]
  %v531 = vld [vmem:[%s1 + $0xfb8] sm:$0xff]
  %v532 = vld [vmem:[%s1 + $0xfc0] sm:$0xff]
  %v533 = vld [vmem:[%s1 + $0xfc8] sm:$0xff]
  %v534 = vld [vmem:[%s1 + $0xfd0] sm:$0xff]
  %v535 = vld [vmem:[%s1 + $0xfd8] sm:$0xff]
  %v536 = vld [vmem:[%s1 + $0xfe0] sm:$0xff]
  %v537 = vld [vmem:[%s1 + $0xfe8] sm:$0xff]
  %v538 = vld [vmem:[%s1 + $0xff0] sm:$0xff]
  %v539 = vld [vmem:[%s1 + $0xff8] sm:$0xff]
  %v540 = vld [vmem:[%s2] sm:$0xf]
  %v542 = vlaneseq
  %v543 = vshrl.u32 %v542, 7
  %v544 = vsub.s32 0, %v543
  %v545 = vrot.slane %v540, %v544
  %v546 = vlaneseq
  %v547 = vshrl.u32 %v546, 7
  %v548 = vsub.s32 1, %v547
  %v549 = vrot.slane %v540, %v548
  %v550 = vlaneseq
  %v551 = vshrl.u32 %v550, 7
  %v552 = vsub.s32 2, %v551
  %v553 = vrot.slane %v540, %v552
  %v554 = vlaneseq
  %v555 = vshrl.u32 %v554, 7
  %v556 = vsub.s32 3, %v555
  %v557 = vrot.slane %v540, %v556
  %v564 = vcombine.high %v26, %v26
  %v566 = vunpack.c.l.s4 1983009808
  %v567 = vunpack.c.0.s8 %v566
  %v568 = vlaneseq
  %v569 = vshrl.u32 %v568, 7
  %v570 = vsub.s32 %v567, %v569
  %v571 = vrot.slane %v26, %v570
  %v573 = vunpack.c.l.s4 1983009808
  %v574 = vunpack.c.0.s8 %v573
  %v575 = vlaneseq
  %v576 = vshrl.u32 %v575, 7
  %v577 = vsub.s32 %v574, %v576
  %v578 = vrot.slane %v564, %v577
  %v579 = vcombine.high %v571, %v571
  %v580 = vcombine.high %v578, %v578
  %v581 = vcombine.high %v27, %v27
  %v583 = vunpack.c.l.s4 1983009808
  %v584 = vunpack.c.0.s8 %v583
  %v585 = vlaneseq
  %v586 = vshrl.u32 %v585, 7
  %v587 = vsub.s32 %v584, %v586
  %v588 = vrot.slane %v27, %v587
  %v590 = vunpack.c.l.s4 1983009808
  %v591 = vunpack.c.0.s8 %v590
  %v592 = vlaneseq
  %v593 = vshrl.u32 %v592, 7
  %v594 = vsub.s32 %v591, %v593
  %v595 = vrot.slane %v581, %v594
  %v596 = vcombine.high %v588, %v588
  %v597 = vcombine.high %v595, %v595
  %606 = vmatprep.subr.mxu0 %v89
  %607 = vmatpush1.msra.mxu0 %v88
  %608 = vmatprep.subr.mxu0 %v85
  %609 = vmatpush1.msra.mxu0 %v84
  %610 = vmatprep.subr.mxu0 %v81
  %611 = vmatpush1.msra.mxu0 %v80
  %612 = vmatprep.subr.mxu0 %v77
  %613 = vmatpush1.msra.mxu0 %v76
  %614 = vmatprep.subr.mxu0 %v73
  %615 = vmatpush1.msra.mxu0 %v72
  %616 = vmatprep.subr.mxu0 %v69
  %617 = vmatpush1.msra.mxu0 %v68
  %618 = vmatprep.subr.mxu0 %v65
  %619 = vmatpush1.msra.mxu0 %v64
  %620 = vmatprep.subr.mxu0 %v61
  %621 = vmatpush1.msra.mxu0 %v60
  %622 = vmatprep.subr.mxu0 %v57
  %623 = vmatpush1.msra.mxu0 %v56
  %624 = vmatprep.subr.mxu0 %v53
  %625 = vmatpush1.msra.mxu0 %v52
  %626 = vmatprep.subr.mxu0 %v49
  %627 = vmatpush1.msra.mxu0 %v48
  %628 = vmatprep.subr.mxu0 %v45
  %629 = vmatpush1.msra.mxu0 %v44
  %630 = vmatprep.subr.mxu0 %v41
  %631 = vmatpush1.msra.mxu0 %v40
  %632 = vmatprep.subr.mxu0 %v37
  %633 = vmatpush1.msra.mxu0 %v36
  %634 = vmatprep.subr.mxu0 %v33
  %635 = vmatpush1.msra.mxu0 %v32
  %636 = vmatprep.subr.mxu0 %v29
  %637 = vmatpush1.msra.mxu0 %v28
  %638 = vmatprep.subr.mxu0 %v153
  %639 = vmatpush2.msra.mxu0 %v152
  %640 = vmatprep.subr.mxu0 %v149
  %641 = vmatpush2.msra.mxu0 %v148
  %642 = vmatprep.subr.mxu0 %v145
  %643 = vmatpush2.msra.mxu0 %v144
  %644 = vmatprep.subr.mxu0 %v141
  %645 = vmatpush2.msra.mxu0 %v140
  %646 = vmatprep.subr.mxu0 %v137
  %647 = vmatpush2.msra.mxu0 %v136
  %648 = vmatprep.subr.mxu0 %v133
  %649 = vmatpush2.msra.mxu0 %v132
  %650 = vmatprep.subr.mxu0 %v129
  %651 = vmatpush2.msra.mxu0 %v128
  %652 = vmatprep.subr.mxu0 %v125
  %653 = vmatpush2.msra.mxu0 %v124
  %654 = vmatprep.subr.mxu0 %v121
  %655 = vmatpush2.msra.mxu0 %v120
  %656 = vmatprep.subr.mxu0 %v117
  %657 = vmatpush2.msra.mxu0 %v116
  %658 = vmatprep.subr.mxu0 %v113
  %659 = vmatpush2.msra.mxu0 %v112
  %660 = vmatprep.subr.mxu0 %v109
  %661 = vmatpush2.msra.mxu0 %v108
  %662 = vmatprep.subr.mxu0 %v105
  %663 = vmatpush2.msra.mxu0 %v104
  %664 = vmatprep.subr.mxu0 %v101
  %665 = vmatpush2.msra.mxu0 %v100
  %666 = vmatprep.subr.mxu0 %v97
  %667 = vmatpush2.msra.mxu0 %v96
  %668 = vmatprep.subr.mxu0 %v93
  %669 = vmatpush2.msra.mxu0 %v92
  %670 = vmatprep.mubr.f32.mxu0 %v579
  %671 = vmatmul.mubr.f32.gmra.mxu0 %v571
  %v672 = vpop.f32.mrf.mxu0
  %v673 = vadd.f32 %v545, %v672
  %v674 = vpop.f32.mrf.mxu0
  %v675 = vadd.f32 %v549, %v674
  %676 = vdwg.mxu0
  %677 = vmatprep.subr.mxu0 %v217
  %678 = vmatpush1.msra.mxu0 %v216
  %679 = vmatprep.subr.mxu0 %v213
  %680 = vmatpush1.msra.mxu0 %v212
  %681 = vmatprep.subr.mxu0 %v209
  %682 = vmatpush1.msra.mxu0 %v208
  %683 = vmatprep.subr.mxu0 %v205
  %684 = vmatpush1.msra.mxu0 %v204
  %685 = vmatprep.subr.mxu0 %v201
  %686 = vmatpush1.msra.mxu0 %v200
  %687 = vmatprep.subr.mxu0 %v197
  %688 = vmatpush1.msra.mxu0 %v196
  %689 = vmatprep.subr.mxu0 %v193
  %690 = vmatpush1.msra.mxu0 %v192
  %691 = vmatprep.subr.mxu0 %v189
  %692 = vmatpush1.msra.mxu0 %v188
  %693 = vmatprep.subr.mxu0 %v185
  %694 = vmatpush1.msra.mxu0 %v184
  %695 = vmatprep.subr.mxu0 %v181
  %696 = vmatpush1.msra.mxu0 %v180
  %697 = vmatprep.subr.mxu0 %v177
  %698 = vmatpush1.msra.mxu0 %v176
  %699 = vmatprep.subr.mxu0 %v173
  %700 = vmatpush1.msra.mxu0 %v172
  %701 = vmatprep.subr.mxu0 %v169
  %702 = vmatpush1.msra.mxu0 %v168
  %703 = vmatprep.subr.mxu0 %v165
  %704 = vmatpush1.msra.mxu0 %v164
  %705 = vmatprep.subr.mxu0 %v161
  %706 = vmatpush1.msra.mxu0 %v160
  %707 = vmatprep.subr.mxu0 %v157
  %708 = vmatpush1.msra.mxu0 %v156
  %709 = vmatprep.subr.mxu0 %v281
  %710 = vmatpush2.msra.mxu0 %v280
  %711 = vmatprep.subr.mxu0 %v277
  %712 = vmatpush2.msra.mxu0 %v276
  %713 = vmatprep.subr.mxu0 %v273
  %714 = vmatpush2.msra.mxu0 %v272
  %715 = vmatprep.subr.mxu0 %v269
  %716 = vmatpush2.msra.mxu0 %v268
  %717 = vmatprep.subr.mxu0 %v265
  %718 = vmatpush2.msra.mxu0 %v264
  %719 = vmatprep.subr.mxu0 %v261
  %720 = vmatpush2.msra.mxu0 %v260
  %721 = vmatprep.subr.mxu0 %v257
  %722 = vmatpush2.msra.mxu0 %v256
  %723 = vmatprep.subr.mxu0 %v253
  %724 = vmatpush2.msra.mxu0 %v252
  %725 = vmatprep.subr.mxu0 %v249
  %726 = vmatpush2.msra.mxu0 %v248
  %727 = vmatprep.subr.mxu0 %v245
  %728 = vmatpush2.msra.mxu0 %v244
  %729 = vmatprep.subr.mxu0 %v241
  %730 = vmatpush2.msra.mxu0 %v240
  %731 = vmatprep.subr.mxu0 %v237
  %732 = vmatpush2.msra.mxu0 %v236
  %733 = vmatprep.subr.mxu0 %v233
  %734 = vmatpush2.msra.mxu0 %v232
  %735 = vmatprep.subr.mxu0 %v229
  %736 = vmatpush2.msra.mxu0 %v228
  %737 = vmatprep.subr.mxu0 %v225
  %738 = vmatpush2.msra.mxu0 %v224
  %739 = vmatprep.subr.mxu0 %v221
  %740 = vmatpush2.msra.mxu0 %v220
  %741 = vmatprep.mubr.f32.mxu0 %v580
  %742 = vmatmul.mubr.f32.gmra.mxu0 %v578
  %v743 = vpop.f32.mrf.mxu0
  %v744 = vadd.f32 %v673, %v743
  %v745 = vpop.f32.mrf.mxu0
  %v746 = vadd.f32 %v675, %v745
  %747 = vdwg.mxu0
  %748 = vmatprep.subr.mxu0 %v345
  %749 = vmatpush1.msra.mxu0 %v344
  %750 = vmatprep.subr.mxu0 %v341
  %751 = vmatpush1.msra.mxu0 %v340
  %752 = vmatprep.subr.mxu0 %v337
  %753 = vmatpush1.msra.mxu0 %v336
  %754 = vmatprep.subr.mxu0 %v333
  %755 = vmatpush1.msra.mxu0 %v332
  %756 = vmatprep.subr.mxu0 %v329
  %757 = vmatpush1.msra.mxu0 %v328
  %758 = vmatprep.subr.mxu0 %v325
  %759 = vmatpush1.msra.mxu0 %v324
  %760 = vmatprep.subr.mxu0 %v321
  %761 = vmatpush1.msra.mxu0 %v320
  %762 = vmatprep.subr.mxu0 %v317
  %763 = vmatpush1.msra.mxu0 %v316
  %764 = vmatprep.subr.mxu0 %v313
  %765 = vmatpush1.msra.mxu0 %v312
  %766 = vmatprep.subr.mxu0 %v309
  %767 = vmatpush1.msra.mxu0 %v308
  %768 = vmatprep.subr.mxu0 %v305
  %769 = vmatpush1.msra.mxu0 %v304
  %770 = vmatprep.subr.mxu0 %v301
  %771 = vmatpush1.msra.mxu0 %v300
  %772 = vmatprep.subr.mxu0 %v297
  %773 = vmatpush1.msra.mxu0 %v296
  %774 = vmatprep.subr.mxu0 %v293
  %775 = vmatpush1.msra.mxu0 %v292
  %776 = vmatprep.subr.mxu0 %v289
  %777 = vmatpush1.msra.mxu0 %v288
  %778 = vmatprep.subr.mxu0 %v285
  %779 = vmatpush1.msra.mxu0 %v284
  %780 = vmatprep.subr.mxu0 %v409
  %781 = vmatpush2.msra.mxu0 %v408
  %782 = vmatprep.subr.mxu0 %v405
  %783 = vmatpush2.msra.mxu0 %v404
  %784 = vmatprep.subr.mxu0 %v401
  %785 = vmatpush2.msra.mxu0 %v400
  %786 = vmatprep.subr.mxu0 %v397
  %787 = vmatpush2.msra.mxu0 %v396
  %788 = vmatprep.subr.mxu0 %v393
  %789 = vmatpush2.msra.mxu0 %v392
  %790 = vmatprep.subr.mxu0 %v389
  %791 = vmatpush2.msra.mxu0 %v388
  %792 = vmatprep.subr.mxu0 %v385
  %793 = vmatpush2.msra.mxu0 %v384
  %794 = vmatprep.subr.mxu0 %v381
  %795 = vmatpush2.msra.mxu0 %v380
  %796 = vmatprep.subr.mxu0 %v377
  %797 = vmatpush2.msra.mxu0 %v376
  %798 = vmatprep.subr.mxu0 %v373
  %799 = vmatpush2.msra.mxu0 %v372
  %800 = vmatprep.subr.mxu0 %v369
  %801 = vmatpush2.msra.mxu0 %v368
  %802 = vmatprep.subr.mxu0 %v365
  %803 = vmatpush2.msra.mxu0 %v364
  %804 = vmatprep.subr.mxu0 %v361
  %805 = vmatpush2.msra.mxu0 %v360
  %806 = vmatprep.subr.mxu0 %v357
  %807 = vmatpush2.msra.mxu0 %v356
  %808 = vmatprep.subr.mxu0 %v353
  %809 = vmatpush2.msra.mxu0 %v352
  %810 = vmatprep.subr.mxu0 %v349
  %811 = vmatpush2.msra.mxu0 %v348
  %812 = vmatprep.mubr.f32.mxu0 %v596
  %813 = vmatmul.mubr.f32.gmra.mxu0 %v588
  %v814 = vpop.f32.mrf.mxu0
  %v815 = vadd.f32 %v744, %v814
  %v816 = vpop.f32.mrf.mxu0
  %v817 = vadd.f32 %v746, %v816
  %818 = vdwg.mxu0
  %819 = vmatprep.subr.mxu0 %v473
  %820 = vmatpush1.msra.mxu0 %v472
  %821 = vmatprep.subr.mxu0 %v469
  %822 = vmatpush1.msra.mxu0 %v468
  %823 = vmatprep.subr.mxu0 %v465
  %824 = vmatpush1.msra.mxu0 %v464
  %825 = vmatprep.subr.mxu0 %v461
  %826 = vmatpush1.msra.mxu0 %v460
  %827 = vmatprep.subr.mxu0 %v457
  %828 = vmatpush1.msra.mxu0 %v456
  %829 = vmatprep.subr.mxu0 %v453
  %830 = vmatpush1.msra.mxu0 %v452
  %831 = vmatprep.subr.mxu0 %v449
  %832 = vmatpush1.msra.mxu0 %v448
  %833 = vmatprep.subr.mxu0 %v445
  %834 = vmatpush1.msra.mxu0 %v444
  %835 = vmatprep.subr.mxu0 %v441
  %836 = vmatpush1.msra.mxu0 %v440
  %837 = vmatprep.subr.mxu0 %v437
  %838 = vmatpush1.msra.mxu0 %v436
  %839 = vmatprep.subr.mxu0 %v433
  %840 = vmatpush1.msra.mxu0 %v432
  %841 = vmatprep.subr.mxu0 %v429
  %842 = vmatpush1.msra.mxu0 %v428
  %843 = vmatprep.subr.mxu0 %v425
  %844 = vmatpush1.msra.mxu0 %v424
  %845 = vmatprep.subr.mxu0 %v421
  %846 = vmatpush1.msra.mxu0 %v420
  %847 = vmatprep.subr.mxu0 %v417
  %848 = vmatpush1.msra.mxu0 %v416
  %849 = vmatprep.subr.mxu0 %v413
  %850 = vmatpush1.msra.mxu0 %v412
  %851 = vmatprep.subr.mxu0 %v537
  %852 = vmatpush2.msra.mxu0 %v536
  %853 = vmatprep.subr.mxu0 %v533
  %854 = vmatpush2.msra.mxu0 %v532
  %855 = vmatprep.subr.mxu0 %v529
  %856 = vmatpush2.msra.mxu0 %v528
  %857 = vmatprep.subr.mxu0 %v525
  %858 = vmatpush2.msra.mxu0 %v524
  %859 = vmatprep.subr.mxu0 %v521
  %860 = vmatpush2.msra.mxu0 %v520
  %861 = vmatprep.subr.mxu0 %v517
  %862 = vmatpush2.msra.mxu0 %v516
  %863 = vmatprep.subr.mxu0 %v513
  %864 = vmatpush2.msra.mxu0 %v512
  %865 = vmatprep.subr.mxu0 %v509
  %866 = vmatpush2.msra.mxu0 %v508
  %867 = vmatprep.subr.mxu0 %v505
  %868 = vmatpush2.msra.mxu0 %v504
  %869 = vmatprep.subr.mxu0 %v501
  %870 = vmatpush2.msra.mxu0 %v500
  %871 = vmatprep.subr.mxu0 %v497
  %872 = vmatpush2.msra.mxu0 %v496
  %873 = vmatprep.subr.mxu0 %v493
  %874 = vmatpush2.msra.mxu0 %v492
  %875 = vmatprep.subr.mxu0 %v489
  %876 = vmatpush2.msra.mxu0 %v488
  %877 = vmatprep.subr.mxu0 %v485
  %878 = vmatpush2.msra.mxu0 %v484
  %879 = vmatprep.subr.mxu0 %v481
  %880 = vmatpush2.msra.mxu0 %v480
  %881 = vmatprep.subr.mxu0 %v477
  %882 = vmatpush2.msra.mxu0 %v476
  %883 = vmatprep.mubr.f32.mxu0 %v597
  %884 = vmatmul.mubr.f32.gmra.mxu0 %v595
  %v885 = vpop.f32.mrf.mxu0
  %v886 = vadd.f32 %v815, %v885
  %v887 = vpop.f32.mrf.mxu0
  %v888 = vadd.f32 %v817, %v887
  %889 = vdwg.mxu0
  %890 = vmatprep.subr.mxu0 %v91
  %891 = vmatpush1.msra.mxu0 %v90
  %892 = vmatprep.subr.mxu0 %v87
  %893 = vmatpush1.msra.mxu0 %v86
  %894 = vmatprep.subr.mxu0 %v83
  %895 = vmatpush1.msra.mxu0 %v82
  %896 = vmatprep.subr.mxu0 %v79
  %897 = vmatpush1.msra.mxu0 %v78
  %898 = vmatprep.subr.mxu0 %v75
  %899 = vmatpush1.msra.mxu0 %v74
  %900 = vmatprep.subr.mxu0 %v71
  %901 = vmatpush1.msra.mxu0 %v70
  %902 = vmatprep.subr.mxu0 %v67
  %903 = vmatpush1.msra.mxu0 %v66
  %904 = vmatprep.subr.mxu0 %v63
  %905 = vmatpush1.msra.mxu0 %v62
  %906 = vmatprep.subr.mxu0 %v59
  %907 = vmatpush1.msra.mxu0 %v58
  %908 = vmatprep.subr.mxu0 %v55
  %909 = vmatpush1.msra.mxu0 %v54
  %910 = vmatprep.subr.mxu0 %v51
  %911 = vmatpush1.msra.mxu0 %v50
  %912 = vmatprep.subr.mxu0 %v47
  %913 = vmatpush1.msra.mxu0 %v46
  %914 = vmatprep.subr.mxu0 %v43
  %915 = vmatpush1.msra.mxu0 %v42
  %916 = vmatprep.subr.mxu0 %v39
  %917 = vmatpush1.msra.mxu0 %v38
  %918 = vmatprep.subr.mxu0 %v35
  %919 = vmatpush1.msra.mxu0 %v34
  %920 = vmatprep.subr.mxu0 %v31
  %921 = vmatpush1.msra.mxu0 %v30
  %922 = vmatprep.subr.mxu0 %v155
  %923 = vmatpush2.msra.mxu0 %v154
  %924 = vmatprep.subr.mxu0 %v151
  %925 = vmatpush2.msra.mxu0 %v150
  %926 = vmatprep.subr.mxu0 %v147
  %927 = vmatpush2.msra.mxu0 %v146
  %928 = vmatprep.subr.mxu0 %v143
  %929 = vmatpush2.msra.mxu0 %v142
  %930 = vmatprep.subr.mxu0 %v139
  %931 = vmatpush2.msra.mxu0 %v138
  %932 = vmatprep.subr.mxu0 %v135
  %933 = vmatpush2.msra.mxu0 %v134
  %934 = vmatprep.subr.mxu0 %v131
  %935 = vmatpush2.msra.mxu0 %v130
  %936 = vmatprep.subr.mxu0 %v127
  %937 = vmatpush2.msra.mxu0 %v126
  %938 = vmatprep.subr.mxu0 %v123
  %939 = vmatpush2.msra.mxu0 %v122
  %940 = vmatprep.subr.mxu0 %v119
  %941 = vmatpush2.msra.mxu0 %v118
  %942 = vmatprep.subr.mxu0 %v115
  %943 = vmatpush2.msra.mxu0 %v114
  %944 = vmatprep.subr.mxu0 %v111
  %945 = vmatpush2.msra.mxu0 %v110
  %946 = vmatprep.subr.mxu0 %v107
  %947 = vmatpush2.msra.mxu0 %v106
  %948 = vmatprep.subr.mxu0 %v103
  %949 = vmatpush2.msra.mxu0 %v102
  %950 = vmatprep.subr.mxu0 %v99
  %951 = vmatpush2.msra.mxu0 %v98
  %952 = vmatprep.subr.mxu0 %v95
  %953 = vmatpush2.msra.mxu0 %v94
  %954 = vmatprep.mubr.f32.mxu0 %v579
  %955 = vmatmul.mubr.f32.gmra.mxu0 %v571
  %v956 = vpop.f32.mrf.mxu0
  %v957 = vadd.f32 %v553, %v956
  %v958 = vpop.f32.mrf.mxu0
  %v959 = vadd.f32 %v557, %v958
  %960 = vdwg.mxu0
  %961 = vmatprep.subr.mxu0 %v219
  %962 = vmatpush1.msra.mxu0 %v218
  %963 = vmatprep.subr.mxu0 %v215
  %964 = vmatpush1.msra.mxu0 %v214
  %965 = vmatprep.subr.mxu0 %v211
  %966 = vmatpush1.msra.mxu0 %v210
  %967 = vmatprep.subr.mxu0 %v207
  %968 = vmatpush1.msra.mxu0 %v206
  %969 = vmatprep.subr.mxu0 %v203
  %970 = vmatpush1.msra.mxu0 %v202
  %971 = vmatprep.subr.mxu0 %v199
  %972 = vmatpush1.msra.mxu0 %v198
  %973 = vmatprep.subr.mxu0 %v195
  %974 = vmatpush1.msra.mxu0 %v194
  %975 = vmatprep.subr.mxu0 %v191
  %976 = vmatpush1.msra.mxu0 %v190
  %977 = vmatprep.subr.mxu0 %v187
  %978 = vmatpush1.msra.mxu0 %v186
  %979 = vmatprep.subr.mxu0 %v183
  %980 = vmatpush1.msra.mxu0 %v182
  %981 = vmatprep.subr.mxu0 %v179
  %982 = vmatpush1.msra.mxu0 %v178
  %983 = vmatprep.subr.mxu0 %v175
  %984 = vmatpush1.msra.mxu0 %v174
  %985 = vmatprep.subr.mxu0 %v171
  %986 = vmatpush1.msra.mxu0 %v170
  %987 = vmatprep.subr.mxu0 %v167
  %988 = vmatpush1.msra.mxu0 %v166
  %989 = vmatprep.subr.mxu0 %v163
  %990 = vmatpush1.msra.mxu0 %v162
  %991 = vmatprep.subr.mxu0 %v159
  %992 = vmatpush1.msra.mxu0 %v158
  %993 = vmatprep.subr.mxu0 %v283
  %994 = vmatpush2.msra.mxu0 %v282
  %995 = vmatprep.subr.mxu0 %v279
  %996 = vmatpush2.msra.mxu0 %v278
  %997 = vmatprep.subr.mxu0 %v275
  %998 = vmatpush2.msra.mxu0 %v274
  %999 = vmatprep.subr.mxu0 %v271
  %1000 = vmatpush2.msra.mxu0 %v270
  %1001 = vmatprep.subr.mxu0 %v267
  %1002 = vmatpush2.msra.mxu0 %v266
  %1003 = vmatprep.subr.mxu0 %v263
  %1004 = vmatpush2.msra.mxu0 %v262
  %1005 = vmatprep.subr.mxu0 %v259
  %1006 = vmatpush2.msra.mxu0 %v258
  %1007 = vmatprep.subr.mxu0 %v255
  %1008 = vmatpush2.msra.mxu0 %v254
  %1009 = vmatprep.subr.mxu0 %v251
  %1010 = vmatpush2.msra.mxu0 %v250
  %1011 = vmatprep.subr.mxu0 %v247
  %1012 = vmatpush2.msra.mxu0 %v246
  %1013 = vmatprep.subr.mxu0 %v243
  %1014 = vmatpush2.msra.mxu0 %v242
  %1015 = vmatprep.subr.mxu0 %v239
  %1016 = vmatpush2.msra.mxu0 %v238
  %1017 = vmatprep.subr.mxu0 %v235
  %1018 = vmatpush2.msra.mxu0 %v234
  %1019 = vmatprep.subr.mxu0 %v231
  %1020 = vmatpush2.msra.mxu0 %v230
  %1021 = vmatprep.subr.mxu0 %v227
  %1022 = vmatpush2.msra.mxu0 %v226
  %1023 = vmatprep.subr.mxu0 %v223
  %1024 = vmatpush2.msra.mxu0 %v222
  %1025 = vmatprep.mubr.f32.mxu0 %v580
  %1026 = vmatmul.mubr.f32.gmra.mxu0 %v578
  %v1027 = vpop.f32.mrf.mxu0
  %v1028 = vadd.f32 %v957, %v1027
  %v1029 = vpop.f32.mrf.mxu0
  %v1030 = vadd.f32 %v959, %v1029
  %1031 = vdwg.mxu0
  %1032 = vmatprep.subr.mxu0 %v347
  %1033 = vmatpush1.msra.mxu0 %v346
  %1034 = vmatprep.subr.mxu0 %v343
  %1035 = vmatpush1.msra.mxu0 %v342
  %1036 = vmatprep.subr.mxu0 %v339
  %1037 = vmatpush1.msra.mxu0 %v338
  %1038 = vmatprep.subr.mxu0 %v335
  %1039 = vmatpush1.msra.mxu0 %v334
  %1040 = vmatprep.subr.mxu0 %v331
  %1041 = vmatpush1.msra.mxu0 %v330
  %1042 = vmatprep.subr.mxu0 %v327
  %1043 = vmatpush1.msra.mxu0 %v326
  %1044 = vmatprep.subr.mxu0 %v323
  %1045 = vmatpush1.msra.mxu0 %v322
  %1046 = vmatprep.subr.mxu0 %v319
  %1047 = vmatpush1.msra.mxu0 %v318
  %1048 = vmatprep.subr.mxu0 %v315
  %1049 = vmatpush1.msra.mxu0 %v314
  %1050 = vmatprep.subr.mxu0 %v311
  %1051 = vmatpush1.msra.mxu0 %v310
  %1052 = vmatprep.subr.mxu0 %v307
  %1053 = vmatpush1.msra.mxu0 %v306
  %1054 = vmatprep.subr.mxu0 %v303
  %1055 = vmatpush1.msra.mxu0 %v302
  %1056 = vmatprep.subr.mxu0 %v299
  %1057 = vmatpush1.msra.mxu0 %v298
  %1058 = vmatprep.subr.mxu0 %v295
  %1059 = vmatpush1.msra.mxu0 %v294
  %1060 = vmatprep.subr.mxu0 %v291
  %1061 = vmatpush1.msra.mxu0 %v290
  %1062 = vmatprep.subr.mxu0 %v287
  %1063 = vmatpush1.msra.mxu0 %v286
  %1064 = vmatprep.subr.mxu0 %v411
  %1065 = vmatpush2.msra.mxu0 %v410
  %1066 = vmatprep.subr.mxu0 %v407
  %1067 = vmatpush2.msra.mxu0 %v406
  %1068 = vmatprep.subr.mxu0 %v403
  %1069 = vmatpush2.msra.mxu0 %v402
  %1070 = vmatprep.subr.mxu0 %v399
  %1071 = vmatpush2.msra.mxu0 %v398
  %1072 = vmatprep.subr.mxu0 %v395
  %1073 = vmatpush2.msra.mxu0 %v394
  %1074 = vmatprep.subr.mxu0 %v391
  %1075 = vmatpush2.msra.mxu0 %v390
  %1076 = vmatprep.subr.mxu0 %v387
  %1077 = vmatpush2.msra.mxu0 %v386
  %1078 = vmatprep.subr.mxu0 %v383
  %1079 = vmatpush2.msra.mxu0 %v382
  %1080 = vmatprep.subr.mxu0 %v379
  %1081 = vmatpush2.msra.mxu0 %v378
  %1082 = vmatprep.subr.mxu0 %v375
  %1083 = vmatpush2.msra.mxu0 %v374
  %1084 = vmatprep.subr.mxu0 %v371
  %1085 = vmatpush2.msra.mxu0 %v370
  %1086 = vmatprep.subr.mxu0 %v367
  %1087 = vmatpush2.msra.mxu0 %v366
  %1088 = vmatprep.subr.mxu0 %v363
  %1089 = vmatpush2.msra.mxu0 %v362
  %1090 = vmatprep.subr.mxu0 %v359
  %1091 = vmatpush2.msra.mxu0 %v358
  %1092 = vmatprep.subr.mxu0 %v355
  %1093 = vmatpush2.msra.mxu0 %v354
  %1094 = vmatprep.subr.mxu0 %v351
  %1095 = vmatpush2.msra.mxu0 %v350
  %1096 = vmatprep.mubr.f32.mxu0 %v596
  %1097 = vmatmul.mubr.f32.gmra.mxu0 %v588
  %v1098 = vpop.f32.mrf.mxu0
  %v1099 = vadd.f32 %v1028, %v1098
  %v1100 = vpop.f32.mrf.mxu0
  %v1101 = vadd.f32 %v1030, %v1100
  %1102 = vdwg.mxu0
  %1103 = vmatprep.subr.mxu0 %v475
  %1104 = vmatpush1.msra.mxu0 %v474
  %1105 = vmatprep.subr.mxu0 %v471
  %1106 = vmatpush1.msra.mxu0 %v470
  %1107 = vmatprep.subr.mxu0 %v467
  %1108 = vmatpush1.msra.mxu0 %v466
  %1109 = vmatprep.subr.mxu0 %v463
  %1110 = vmatpush1.msra.mxu0 %v462
  %1111 = vmatprep.subr.mxu0 %v459
  %1112 = vmatpush1.msra.mxu0 %v458
  %1113 = vmatprep.subr.mxu0 %v455
  %1114 = vmatpush1.msra.mxu0 %v454
  %1115 = vmatprep.subr.mxu0 %v451
  %1116 = vmatpush1.msra.mxu0 %v450
  %1117 = vmatprep.subr.mxu0 %v447
  %1118 = vmatpush1.msra.mxu0 %v446
  %1119 = vmatprep.subr.mxu0 %v443
  %1120 = vmatpush1.msra.mxu0 %v442
  %1121 = vmatprep.subr.mxu0 %v439
  %1122 = vmatpush1.msra.mxu0 %v438
  %1123 = vmatprep.subr.mxu0 %v435
  %1124 = vmatpush1.msra.mxu0 %v434
  %1125 = vmatprep.subr.mxu0 %v431
  %1126 = vmatpush1.msra.mxu0 %v430
  %1127 = vmatprep.subr.mxu0 %v427
  %1128 = vmatpush1.msra.mxu0 %v426
  %1129 = vmatprep.subr.mxu0 %v423
  %1130 = vmatpush1.msra.mxu0 %v422
  %1131 = vmatprep.subr.mxu0 %v419
  %1132 = vmatpush1.msra.mxu0 %v418
  %1133 = vmatprep.subr.mxu0 %v415
  %1134 = vmatpush1.msra.mxu0 %v414
  %1135 = vmatprep.subr.mxu0 %v539
  %1136 = vmatpush2.msra.mxu0 %v538
  %1137 = vmatprep.subr.mxu0 %v535
  %1138 = vmatpush2.msra.mxu0 %v534
  %1139 = vmatprep.subr.mxu0 %v531
  %1140 = vmatpush2.msra.mxu0 %v530
  %1141 = vmatprep.subr.mxu0 %v527
  %1142 = vmatpush2.msra.mxu0 %v526
  %1143 = vmatprep.subr.mxu0 %v523
  %1144 = vmatpush2.msra.mxu0 %v522
  %1145 = vmatprep.subr.mxu0 %v519
  %1146 = vmatpush2.msra.mxu0 %v518
  %1147 = vmatprep.subr.mxu0 %v515
  %1148 = vmatpush2.msra.mxu0 %v514
  %1149 = vmatprep.subr.mxu0 %v511
  %1150 = vmatpush2.msra.mxu0 %v510
  %1151 = vmatprep.subr.mxu0 %v507
  %1152 = vmatpush2.msra.mxu0 %v506
  %1153 = vmatprep.subr.mxu0 %v503
  %1154 = vmatpush2.msra.mxu0 %v502
  %1155 = vmatprep.subr.mxu0 %v499
  %1156 = vmatpush2.msra.mxu0 %v498
  %1157 = vmatprep.subr.mxu0 %v495
  %1158 = vmatpush2.msra.mxu0 %v494
  %1159 = vmatprep.subr.mxu0 %v491
  %1160 = vmatpush2.msra.mxu0 %v490
  %1161 = vmatprep.subr.mxu0 %v487
  %1162 = vmatpush2.msra.mxu0 %v486
  %1163 = vmatprep.subr.mxu0 %v483
  %1164 = vmatpush2.msra.mxu0 %v482
  %1165 = vmatprep.subr.mxu0 %v479
  %1166 = vmatpush2.msra.mxu0 %v478
  %1167 = vmatprep.mubr.f32.mxu0 %v597
  %1168 = vmatmul.mubr.f32.gmra.mxu0 %v595
  %v1169 = vpop.f32.mrf.mxu0
  %v1170 = vadd.f32 %v1099, %v1169
  %v1171 = vpop.f32.mrf.mxu0
  %v1172 = vadd.f32 %v1101, %v1171
  %1173 = vdwg.mxu0
  %v1174 = vmax.f32 %v886, 0.0
  %v1175 = vmax.f32 %v888, 0.0
  %v1176 = vmax.f32 %v1170, 0.0
  %v1177 = vmax.f32 %v1172, 0.0
  %v1178 = vld [vmem:[%s3] sm:$0xff]
  %v1179 = vld [vmem:[%s3 + $0x8] sm:$0xff]
  %v1180 = vld [vmem:[%s3 + $0x10] sm:$0xff]
  %v1181 = vld [vmem:[%s3 + $0x18] sm:$0xff]
  %v1182 = vld [vmem:[%s3 + $0x20] sm:$0xff]
  %v1183 = vld [vmem:[%s3 + $0x28] sm:$0xff]
  %v1184 = vld [vmem:[%s3 + $0x30] sm:$0xff]
  %v1185 = vld [vmem:[%s3 + $0x38] sm:$0xff]
  %v1186 = vld [vmem:[%s3 + $0x40] sm:$0xff]
  %v1187 = vld [vmem:[%s3 + $0x48] sm:$0xff]
  %v1188 = vld [vmem:[%s3 + $0x50] sm:$0xff]
  %v1189 = vld [vmem:[%s3 + $0x58] sm:$0xff]
  %v1190 = vld [vmem:[%s3 + $0x60] sm:$0xff]
  %v1191 = vld [vmem:[%s3 + $0x68] sm:$0xff]
  %v1192 = vld [vmem:[%s3 + $0x70] sm:$0xff]
  %v1193 = vld [vmem:[%s3 + $0x78] sm:$0xff]
  %v1194 = vld [vmem:[%s3 + $0x80] sm:$0xff]
  %v1195 = vld [vmem:[%s3 + $0x88] sm:$0xff]
  %v1196 = vld [vmem:[%s3 + $0x90] sm:$0xff]
  %v1197 = vld [vmem:[%s3 + $0x98] sm:$0xff]
  %v1198 = vld [vmem:[%s3 + $0xa0] sm:$0xff]
  %v1199 = vld [vmem:[%s3 + $0xa8] sm:$0xff]
  %v1200 = vld [vmem:[%s3 + $0xb0] sm:$0xff]
  %v1201 = vld [vmem:[%s3 + $0xb8] sm:$0xff]
  %v1202 = vld [vmem:[%s3 + $0xc0] sm:$0xff]
  %v1203 = vld [vmem:[%s3 + $0xc8] sm:$0xff]
  %v1204 = vld [vmem:[%s3 + $0xd0] sm:$0xff]
  %v1205 = vld [vmem:[%s3 + $0xd8] sm:$0xff]
  %v1206 = vld [vmem:[%s3 + $0xe0] sm:$0xff]
  %v1207 = vld [vmem:[%s3 + $0xe8] sm:$0xff]
  %v1208 = vld [vmem:[%s3 + $0xf0] sm:$0xff]
  %v1209 = vld [vmem:[%s3 + $0xf8] sm:$0xff]
  %v1210 = vld [vmem:[%s3 + $0x100] sm:$0xff]
  %v1211 = vld [vmem:[%s3 + $0x108] sm:$0xff]
  %v1212 = vld [vmem:[%s3 + $0x110] sm:$0xff]
  %v1213 = vld [vmem:[%s3 + $0x118] sm:$0xff]
  %v1214 = vld [vmem:[%s3 + $0x120] sm:$0xff]
  %v1215 = vld [vmem:[%s3 + $0x128] sm:$0xff]
  %v1216 = vld [vmem:[%s3 + $0x130] sm:$0xff]
  %v1217 = vld [vmem:[%s3 + $0x138] sm:$0xff]
  %v1218 = vld [vmem:[%s3 + $0x140] sm:$0xff]
  %v1219 = vld [vmem:[%s3 + $0x148] sm:$0xff]
  %v1220 = vld [vmem:[%s3 + $0x150] sm:$0xff]
  %v1221 = vld [vmem:[%s3 + $0x158] sm:$0xff]
  %v1222 = vld [vmem:[%s3 + $0x160] sm:$0xff]
  %v1223 = vld [vmem:[%s3 + $0x168] sm:$0xff]
  %v1224 = vld [vmem:[%s3 + $0x170] sm:$0xff]
  %v1225 = vld [vmem:[%s3 + $0x178] sm:$0xff]
  %v1226 = vld [vmem:[%s3 + $0x180] sm:$0xff]
  %v1227 = vld [vmem:[%s3 + $0x188] sm:$0xff]
  %v1228 = vld [vmem:[%s3 + $0x190] sm:$0xff]
  %v1229 = vld [vmem:[%s3 + $0x198] sm:$0xff]
  %v1230 = vld [vmem:[%s3 + $0x1a0] sm:$0xff]
  %v1231 = vld [vmem:[%s3 + $0x1a8] sm:$0xff]
  %v1232 = vld [vmem:[%s3 + $0x1b0] sm:$0xff]
  %v1233 = vld [vmem:[%s3 + $0x1b8] sm:$0xff]
  %v1234 = vld [vmem:[%s3 + $0x1c0] sm:$0xff]
  %v1235 = vld [vmem:[%s3 + $0x1c8] sm:$0xff]
  %v1236 = vld [vmem:[%s3 + $0x1d0] sm:$0xff]
  %v1237 = vld [vmem:[%s3 + $0x1d8] sm:$0xff]
  %v1238 = vld [vmem:[%s3 + $0x1e0] sm:$0xff]
  %v1239 = vld [vmem:[%s3 + $0x1e8] sm:$0xff]
  %v1240 = vld [vmem:[%s3 + $0x1f0] sm:$0xff]
  %v1241 = vld [vmem:[%s3 + $0x1f8] sm:$0xff]
  %v1242 = vld [vmem:[%s3 + $0x200] sm:$0xff]
  %v1243 = vld [vmem:[%s3 + $0x208] sm:$0xff]
  %v1244 = vld [vmem:[%s3 + $0x210] sm:$0xff]
  %v1245 = vld [vmem:[%s3 + $0x218] sm:$0xff]
  %v1246 = vld [vmem:[%s3 + $0x220] sm:$0xff]
  %v1247 = vld [vmem:[%s3 + $0x228] sm:$0xff]
  %v1248 = vld [vmem:[%s3 + $0x230] sm:$0xff]
  %v1249 = vld [vmem:[%s3 + $0x238] sm:$0xff]
  %v1250 = vld [vmem:[%s3 + $0x240] sm:$0xff]
  %v1251 = vld [vmem:[%s3 + $0x248] sm:$0xff]
  %v1252 = vld [vmem:[%s3 + $0x250] sm:$0xff]
  %v1253 = vld [vmem:[%s3 + $0x258] sm:$0xff]
  %v1254 = vld [vmem:[%s3 + $0x260] sm:$0xff]
  %v1255 = vld [vmem:[%s3 + $0x268] sm:$0xff]
  %v1256 = vld [vmem:[%s3 + $0x270] sm:$0xff]
  %v1257 = vld [vmem:[%s3 + $0x278] sm:$0xff]
  %v1258 = vld [vmem:[%s3 + $0x280] sm:$0xff]
  %v1259 = vld [vmem:[%s3 + $0x288] sm:$0xff]
  %v1260 = vld [vmem:[%s3 + $0x290] sm:$0xff]
  %v1261 = vld [vmem:[%s3 + $0x298] sm:$0xff]
  %v1262 = vld [vmem:[%s3 + $0x2a0] sm:$0xff]
  %v1263 = vld [vmem:[%s3 + $0x2a8] sm:$0xff]
  %v1264 = vld [vmem:[%s3 + $0x2b0] sm:$0xff]
  %v1265 = vld [vmem:[%s3 + $0x2b8] sm:$0xff]
  %v1266 = vld [vmem:[%s3 + $0x2c0] sm:$0xff]
  %v1267 = vld [vmem:[%s3 + $0x2c8] sm:$0xff]
  %v1268 = vld [vmem:[%s3 + $0x2d0] sm:$0xff]
  %v1269 = vld [vmem:[%s3 + $0x2d8] sm:$0xff]
  %v1270 = vld [vmem:[%s3 + $0x2e0] sm:$0xff]
  %v1271 = vld [vmem:[%s3 + $0x2e8] sm:$0xff]
  %v1272 = vld [vmem:[%s3 + $0x2f0] sm:$0xff]
  %v1273 = vld [vmem:[%s3 + $0x2f8] sm:$0xff]
  %v1274 = vld [vmem:[%s3 + $0x300] sm:$0xff]
  %v1275 = vld [vmem:[%s3 + $0x308] sm:$0xff]
  %v1276 = vld [vmem:[%s3 + $0x310] sm:$0xff]
  %v1277 = vld [vmem:[%s3 + $0x318] sm:$0xff]
  %v1278 = vld [vmem:[%s3 + $0x320] sm:$0xff]
  %v1279 = vld [vmem:[%s3 + $0x328] sm:$0xff]
  %v1280 = vld [vmem:[%s3 + $0x330] sm:$0xff]
  %v1281 = vld [vmem:[%s3 + $0x338] sm:$0xff]
  %v1282 = vld [vmem:[%s3 + $0x340] sm:$0xff]
  %v1283 = vld [vmem:[%s3 + $0x348] sm:$0xff]
  %v1284 = vld [vmem:[%s3 + $0x350] sm:$0xff]
  %v1285 = vld [vmem:[%s3 + $0x358] sm:$0xff]
  %v1286 = vld [vmem:[%s3 + $0x360] sm:$0xff]
  %v1287 = vld [vmem:[%s3 + $0x368] sm:$0xff]
  %v1288 = vld [vmem:[%s3 + $0x370] sm:$0xff]
  %v1289 = vld [vmem:[%s3 + $0x378] sm:$0xff]
  %v1290 = vld [vmem:[%s3 + $0x380] sm:$0xff]
  %v1291 = vld [vmem:[%s3 + $0x388] sm:$0xff]
  %v1292 = vld [vmem:[%s3 + $0x390] sm:$0xff]
  %v1293 = vld [vmem:[%s3 + $0x398] sm:$0xff]
  %v1294 = vld [vmem:[%s3 + $0x3a0] sm:$0xff]
  %v1295 = vld [vmem:[%s3 + $0x3a8] sm:$0xff]
  %v1296 = vld [vmem:[%s3 + $0x3b0] sm:$0xff]
  %v1297 = vld [vmem:[%s3 + $0x3b8] sm:$0xff]
  %v1298 = vld [vmem:[%s3 + $0x3c0] sm:$0xff]
  %v1299 = vld [vmem:[%s3 + $0x3c8] sm:$0xff]
  %v1300 = vld [vmem:[%s3 + $0x3d0] sm:$0xff]
  %v1301 = vld [vmem:[%s3 + $0x3d8] sm:$0xff]
  %v1302 = vld [vmem:[%s3 + $0x3e0] sm:$0xff]
  %v1303 = vld [vmem:[%s3 + $0x3e8] sm:$0xff]
  %v1304 = vld [vmem:[%s3 + $0x3f0] sm:$0xff]
  %v1305 = vld [vmem:[%s3 + $0x3f8] sm:$0xff]
  %v1306 = vld [vmem:[%s4] sm:$0x3]
  %v1308 = vlaneseq
  %v1309 = vshrl.u32 %v1308, 7
  %v1310 = vsub.s32 0, %v1309
  %v1311 = vrot.slane %v1306, %v1310
  %v1312 = vlaneseq
  %v1313 = vshrl.u32 %v1312, 7
  %v1314 = vsub.s32 1, %v1313
  %v1315 = vrot.slane %v1306, %v1314
  %1318 = vmatprep.subr.mxu0 %v1209
  %1319 = vmatpush1.msra.mxu0 %v1208
  %1320 = vmatprep.subr.mxu0 %v1207
  %1321 = vmatpush1.msra.mxu0 %v1206
  %1322 = vmatprep.subr.mxu0 %v1205
  %1323 = vmatpush1.msra.mxu0 %v1204
  %1324 = vmatprep.subr.mxu0 %v1203
  %1325 = vmatpush1.msra.mxu0 %v1202
  %1326 = vmatprep.subr.mxu0 %v1201
  %1327 = vmatpush1.msra.mxu0 %v1200
  %1328 = vmatprep.subr.mxu0 %v1199
  %1329 = vmatpush1.msra.mxu0 %v1198
  %1330 = vmatprep.subr.mxu0 %v1197
  %1331 = vmatpush1.msra.mxu0 %v1196
  %1332 = vmatprep.subr.mxu0 %v1195
  %1333 = vmatpush1.msra.mxu0 %v1194
  %1334 = vmatprep.subr.mxu0 %v1193
  %1335 = vmatpush1.msra.mxu0 %v1192
  %1336 = vmatprep.subr.mxu0 %v1191
  %1337 = vmatpush1.msra.mxu0 %v1190
  %1338 = vmatprep.subr.mxu0 %v1189
  %1339 = vmatpush1.msra.mxu0 %v1188
  %1340 = vmatprep.subr.mxu0 %v1187
  %1341 = vmatpush1.msra.mxu0 %v1186
  %1342 = vmatprep.subr.mxu0 %v1185
  %1343 = vmatpush1.msra.mxu0 %v1184
  %1344 = vmatprep.subr.mxu0 %v1183
  %1345 = vmatpush1.msra.mxu0 %v1182
  %1346 = vmatprep.subr.mxu0 %v1181
  %1347 = vmatpush1.msra.mxu0 %v1180
  %1348 = vmatprep.subr.mxu0 %v1179
  %1349 = vmatpush1.msra.mxu0 %v1178
  %1350 = vmatprep.subr.mxu0 %v1241
  %1351 = vmatpush2.msra.mxu0 %v1240
  %1352 = vmatprep.subr.mxu0 %v1239
  %1353 = vmatpush2.msra.mxu0 %v1238
  %1354 = vmatprep.subr.mxu0 %v1237
  %1355 = vmatpush2.msra.mxu0 %v1236
  %1356 = vmatprep.subr.mxu0 %v1235
  %1357 = vmatpush2.msra.mxu0 %v1234
  %1358 = vmatprep.subr.mxu0 %v1233
  %1359 = vmatpush2.msra.mxu0 %v1232
  %1360 = vmatprep.subr.mxu0 %v1231
  %1361 = vmatpush2.msra.mxu0 %v1230
  %1362 = vmatprep.subr.mxu0 %v1229
  %1363 = vmatpush2.msra.mxu0 %v1228
  %1364 = vmatprep.subr.mxu0 %v1227
  %1365 = vmatpush2.msra.mxu0 %v1226
  %1366 = vmatprep.subr.mxu0 %v1225
  %1367 = vmatpush2.msra.mxu0 %v1224
  %1368 = vmatprep.subr.mxu0 %v1223
  %1369 = vmatpush2.msra.mxu0 %v1222
  %1370 = vmatprep.subr.mxu0 %v1221
  %1371 = vmatpush2.msra.mxu0 %v1220
  %1372 = vmatprep.subr.mxu0 %v1219
  %1373 = vmatpush2.msra.mxu0 %v1218
  %1374 = vmatprep.subr.mxu0 %v1217
  %1375 = vmatpush2.msra.mxu0 %v1216
  %1376 = vmatprep.subr.mxu0 %v1215
  %1377 = vmatpush2.msra.mxu0 %v1214
  %1378 = vmatprep.subr.mxu0 %v1213
  %1379 = vmatpush2.msra.mxu0 %v1212
  %1380 = vmatprep.subr.mxu0 %v1211
  %1381 = vmatpush2.msra.mxu0 %v1210
  %1382 = vmatprep.mubr.f32.mxu0 %v1175
  %1383 = vmatmul.mubr.f32.gmra.mxu0 %v1174
  %v1384 = vpop.f32.mrf.mxu0
  %v1385 = vadd.f32 %v1311, %v1384
  %v1386 = vpop.f32.mrf.mxu0
  %v1387 = vadd.f32 %v1315, %v1386
  %1388 = vdwg.mxu0
  %1389 = vmatprep.subr.mxu0 %v1273
  %1390 = vmatpush1.msra.mxu0 %v1272
  %1391 = vmatprep.subr.mxu0 %v1271
  %1392 = vmatpush1.msra.mxu0 %v1270
  %1393 = vmatprep.subr.mxu0 %v1269
  %1394 = vmatpush1.msra.mxu0 %v1268
  %1395 = vmatprep.subr.mxu0 %v1267
  %1396 = vmatpush1.msra.mxu0 %v1266
  %1397 = vmatprep.subr.mxu0 %v1265
  %1398 = vmatpush1.msra.mxu0 %v1264
  %1399 = vmatprep.subr.mxu0 %v1263
  %1400 = vmatpush1.msra.mxu0 %v1262
  %1401 = vmatprep.subr.mxu0 %v1261
  %1402 = vmatpush1.msra.mxu0 %v1260
  %1403 = vmatprep.subr.mxu0 %v1259
  %1404 = vmatpush1.msra.mxu0 %v1258
  %1405 = vmatprep.subr.mxu0 %v1257
  %1406 = vmatpush1.msra.mxu0 %v1256
  %1407 = vmatprep.subr.mxu0 %v1255
  %1408 = vmatpush1.msra.mxu0 %v1254
  %1409 = vmatprep.subr.mxu0 %v1253
  %1410 = vmatpush1.msra.mxu0 %v1252
  %1411 = vmatprep.subr.mxu0 %v1251
  %1412 = vmatpush1.msra.mxu0 %v1250
  %1413 = vmatprep.subr.mxu0 %v1249
  %1414 = vmatpush1.msra.mxu0 %v1248
  %1415 = vmatprep.subr.mxu0 %v1247
  %1416 = vmatpush1.msra.mxu0 %v1246
  %1417 = vmatprep.subr.mxu0 %v1245
  %1418 = vmatpush1.msra.mxu0 %v1244
  %1419 = vmatprep.subr.mxu0 %v1243
  %1420 = vmatpush1.msra.mxu0 %v1242
  %1421 = vmatprep.subr.mxu0 %v1305
  %1422 = vmatpush2.msra.mxu0 %v1304
  %1423 = vmatprep.subr.mxu0 %v1303
  %1424 = vmatpush2.msra.mxu0 %v1302
  %1425 = vmatprep.subr.mxu0 %v1301
  %1426 = vmatpush2.msra.mxu0 %v1300
  %1427 = vmatprep.subr.mxu0 %v1299
  %1428 = vmatpush2.msra.mxu0 %v1298
  %1429 = vmatprep.subr.mxu0 %v1297
  %1430 = vmatpush2.msra.mxu0 %v1296
  %1431 = vmatprep.subr.mxu0 %v1295
  %1432 = vmatpush2.msra.mxu0 %v1294
  %1433 = vmatprep.subr.mxu0 %v1293
  %1434 = vmatpush2.msra.mxu0 %v1292
  %1435 = vmatprep.subr.mxu0 %v1291
  %1436 = vmatpush2.msra.mxu0 %v1290
  %1437 = vmatprep.subr.mxu0 %v1289
  %1438 = vmatpush2.msra.mxu0 %v1288
  %1439 = vmatprep.subr.mxu0 %v1287
  %1440 = vmatpush2.msra.mxu0 %v1286
  %1441 = vmatprep.subr.mxu0 %v1285
  %1442 = vmatpush2.msra.mxu0 %v1284
  %1443 = vmatprep.subr.mxu0 %v1283
  %1444 = vmatpush2.msra.mxu0 %v1282
  %1445 = vmatprep.subr.mxu0 %v1281
  %1446 = vmatpush2.msra.mxu0 %v1280
  %1447 = vmatprep.subr.mxu0 %v1279
  %1448 = vmatpush2.msra.mxu0 %v1278
  %1449 = vmatprep.subr.mxu0 %v1277
  %1450 = vmatpush2.msra.mxu0 %v1276
  %1451 = vmatprep.subr.mxu0 %v1275
  %1452 = vmatpush2.msra.mxu0 %v1274
  %1453 = vmatprep.mubr.f32.mxu0 %v1177
  %1454 = vmatmul.mubr.f32.gmra.mxu0 %v1176
  %v1455 = vpop.f32.mrf.mxu0
  %v1456 = vadd.f32 %v1385, %v1455
  %v1457 = vpop.f32.mrf.mxu0
  %v1458 = vadd.f32 %v1387, %v1457
  %1459 = vdwg.mxu0
  %v1460 = vmax.f32 %v1456, 0.0
  %v1461 = vmax.f32 %v1458, 0.0
  %v1462 = vld [vmem:[%s5] sm:$0xff]
  %v1463 = vld [vmem:[%s5 + $0x8] sm:$0xff]
  %v1464 = vld [vmem:[%s5 + $0x10] sm:$0xff]
  %v1465 = vld [vmem:[%s5 + $0x18] sm:$0xff]
  %v1466 = vld [vmem:[%s5 + $0x20] sm:$0xff]
  %v1467 = vld [vmem:[%s5 + $0x28] sm:$0xff]
  %v1468 = vld [vmem:[%s5 + $0x30] sm:$0xff]
  %v1469 = vld [vmem:[%s5 + $0x38] sm:$0xff]
  %v1470 = vld [vmem:[%s5 + $0x40] sm:$0xff]
  %v1471 = vld [vmem:[%s5 + $0x48] sm:$0xff]
  %v1472 = vld [vmem:[%s5 + $0x50] sm:$0xff]
  %v1473 = vld [vmem:[%s5 + $0x58] sm:$0xff]
  %v1474 = vld [vmem:[%s5 + $0x60] sm:$0xff]
  %v1475 = vld [vmem:[%s5 + $0x68] sm:$0xff]
  %v1476 = vld [vmem:[%s5 + $0x70] sm:$0xff]
  %v1477 = vld [vmem:[%s5 + $0x78] sm:$0xff]
  %v1478 = vld [vmem:[%s5 + $0x80] sm:$0xff]
  %v1479 = vld [vmem:[%s5 + $0x88] sm:$0xff]
  %v1480 = vld [vmem:[%s5 + $0x90] sm:$0xff]
  %v1481 = vld [vmem:[%s5 + $0x98] sm:$0xff]
  %v1482 = vld [vmem:[%s5 + $0xa0] sm:$0xff]
  %v1483 = vld [vmem:[%s5 + $0xa8] sm:$0xff]
  %v1484 = vld [vmem:[%s5 + $0xb0] sm:$0xff]
  %v1485 = vld [vmem:[%s5 + $0xb8] sm:$0xff]
  %v1486 = vld [vmem:[%s5 + $0xc0] sm:$0xff]
  %v1487 = vld [vmem:[%s5 + $0xc8] sm:$0xff]
  %v1488 = vld [vmem:[%s5 + $0xd0] sm:$0xff]
  %v1489 = vld [vmem:[%s5 + $0xd8] sm:$0xff]
  %v1490 = vld [vmem:[%s5 + $0xe0] sm:$0xff]
  %v1491 = vld [vmem:[%s5 + $0xe8] sm:$0xff]
  %v1492 = vld [vmem:[%s5 + $0xf0] sm:$0xff]
  %v1493 = vld [vmem:[%s5 + $0xf8] sm:$0xff]
  %v1494 = vld [vmem:[%s5 + $0x100] sm:$0xff]
  %v1495 = vld [vmem:[%s5 + $0x108] sm:$0xff]
  %v1496 = vld [vmem:[%s5 + $0x110] sm:$0xff]
  %v1497 = vld [vmem:[%s5 + $0x118] sm:$0xff]
  %v1498 = vld [vmem:[%s5 + $0x120] sm:$0xff]
  %v1499 = vld [vmem:[%s5 + $0x128] sm:$0xff]
  %v1500 = vld [vmem:[%s5 + $0x130] sm:$0xff]
  %v1501 = vld [vmem:[%s5 + $0x138] sm:$0xff]
  %v1502 = vld [vmem:[%s5 + $0x140] sm:$0xff]
  %v1503 = vld [vmem:[%s5 + $0x148] sm:$0xff]
  %v1504 = vld [vmem:[%s5 + $0x150] sm:$0xff]
  %v1505 = vld [vmem:[%s5 + $0x158] sm:$0xff]
  %v1506 = vld [vmem:[%s5 + $0x160] sm:$0xff]
  %v1507 = vld [vmem:[%s5 + $0x168] sm:$0xff]
  %v1508 = vld [vmem:[%s5 + $0x170] sm:$0xff]
  %v1509 = vld [vmem:[%s5 + $0x178] sm:$0xff]
  %v1510 = vld [vmem:[%s5 + $0x180] sm:$0xff]
  %v1511 = vld [vmem:[%s5 + $0x188] sm:$0xff]
  %v1512 = vld [vmem:[%s5 + $0x190] sm:$0xff]
  %v1513 = vld [vmem:[%s5 + $0x198] sm:$0xff]
  %v1514 = vld [vmem:[%s5 + $0x1a0] sm:$0xff]
  %v1515 = vld [vmem:[%s5 + $0x1a8] sm:$0xff]
  %v1516 = vld [vmem:[%s5 + $0x1b0] sm:$0xff]
  %v1517 = vld [vmem:[%s5 + $0x1b8] sm:$0xff]
  %v1518 = vld [vmem:[%s5 + $0x1c0] sm:$0xff]
  %v1519 = vld [vmem:[%s5 + $0x1c8] sm:$0xff]
  %v1520 = vld [vmem:[%s5 + $0x1d0] sm:$0xff]
  %v1521 = vld [vmem:[%s5 + $0x1d8] sm:$0xff]
  %v1522 = vld [vmem:[%s5 + $0x1e0] sm:$0xff]
  %v1523 = vld [vmem:[%s5 + $0x1e8] sm:$0xff]
  %v1524 = vld [vmem:[%s5 + $0x1f0] sm:$0xff]
  %v1525 = vld [vmem:[%s5 + $0x1f8] sm:$0xff]
  %v1526 = vld [vmem:[%s6] sm:$0x3]
  %v1528 = vlaneseq
  %v1529 = vshrl.u32 %v1528, 7
  %v1530 = vsub.s32 0, %v1529
  %v1531 = vrot.slane %v1526, %v1530
  %v1532 = vlaneseq
  %v1533 = vshrl.u32 %v1532, 7
  %v1534 = vsub.s32 1, %v1533
  %v1535 = vrot.slane %v1526, %v1534
  %1538 = vmatprep.subr.mxu0 %v1493
  %1539 = vmatpush1.msra.mxu0 %v1492
  %1540 = vmatprep.subr.mxu0 %v1491
  %1541 = vmatpush1.msra.mxu0 %v1490
  %1542 = vmatprep.subr.mxu0 %v1489
  %1543 = vmatpush1.msra.mxu0 %v1488
  %1544 = vmatprep.subr.mxu0 %v1487
  %1545 = vmatpush1.msra.mxu0 %v1486
  %1546 = vmatprep.subr.mxu0 %v1485
  %1547 = vmatpush1.msra.mxu0 %v1484
  %1548 = vmatprep.subr.mxu0 %v1483
  %1549 = vmatpush1.msra.mxu0 %v1482
  %1550 = vmatprep.subr.mxu0 %v1481
  %1551 = vmatpush1.msra.mxu0 %v1480
  %1552 = vmatprep.subr.mxu0 %v1479
  %1553 = vmatpush1.msra.mxu0 %v1478
  %1554 = vmatprep.subr.mxu0 %v1477
  %1555 = vmatpush1.msra.mxu0 %v1476
  %1556 = vmatprep.subr.mxu0 %v1475
  %1557 = vmatpush1.msra.mxu0 %v1474
  %1558 = vmatprep.subr.mxu0 %v1473
  %1559 = vmatpush1.msra.mxu0 %v1472
  %1560 = vmatprep.subr.mxu0 %v1471
  %1561 = vmatpush1.msra.mxu0 %v1470
  %1562 = vmatprep.subr.mxu0 %v1469
  %1563 = vmatpush1.msra.mxu0 %v1468
  %1564 = vmatprep.subr.mxu0 %v1467
  %1565 = vmatpush1.msra.mxu0 %v1466
  %1566 = vmatprep.subr.mxu0 %v1465
  %1567 = vmatpush1.msra.mxu0 %v1464
  %1568 = vmatprep.subr.mxu0 %v1463
  %1569 = vmatpush1.msra.mxu0 %v1462
  %1570 = vmatprep.subr.mxu0 %v1525
  %1571 = vmatpush2.msra.mxu0 %v1524
  %1572 = vmatprep.subr.mxu0 %v1523
  %1573 = vmatpush2.msra.mxu0 %v1522
  %1574 = vmatprep.subr.mxu0 %v1521
  %1575 = vmatpush2.msra.mxu0 %v1520
  %1576 = vmatprep.subr.mxu0 %v1519
  %1577 = vmatpush2.msra.mxu0 %v1518
  %1578 = vmatprep.subr.mxu0 %v1517
  %1579 = vmatpush2.msra.mxu0 %v1516
  %1580 = vmatprep.subr.mxu0 %v1515
  %1581 = vmatpush2.msra.mxu0 %v1514
  %1582 = vmatprep.subr.mxu0 %v1513
  %1583 = vmatpush2.msra.mxu0 %v1512
  %1584 = vmatprep.subr.mxu0 %v1511
  %1585 = vmatpush2.msra.mxu0 %v1510
  %1586 = vmatprep.subr.mxu0 %v1509
  %1587 = vmatpush2.msra.mxu0 %v1508
  %1588 = vmatprep.subr.mxu0 %v1507
  %1589 = vmatpush2.msra.mxu0 %v1506
  %1590 = vmatprep.subr.mxu0 %v1505
  %1591 = vmatpush2.msra.mxu0 %v1504
  %1592 = vmatprep.subr.mxu0 %v1503
  %1593 = vmatpush2.msra.mxu0 %v1502
  %1594 = vmatprep.subr.mxu0 %v1501
  %1595 = vmatpush2.msra.mxu0 %v1500
  %1596 = vmatprep.subr.mxu0 %v1499
  %1597 = vmatpush2.msra.mxu0 %v1498
  %1598 = vmatprep.subr.mxu0 %v1497
  %1599 = vmatpush2.msra.mxu0 %v1496
  %1600 = vmatprep.subr.mxu0 %v1495
  %1601 = vmatpush2.msra.mxu0 %v1494
  %1602 = vmatprep.mubr.f32.mxu0 %v1461
  %1603 = vmatmul.mubr.f32.gmra.mxu0 %v1460
  %v1604 = vpop.f32.mrf.mxu0
  %v1605 = vadd.f32 %v1531, %v1604
  %v1606 = vpop.f32.mrf.mxu0
  %v1607 = vadd.f32 %v1535, %v1606
  %1608 = vdwg.mxu0
  %v1611 = vcombine.low %v1605, %v1607
  %v1613 = vunpack.c.l.s4 1983009808
  %v1614 = vunpack.c.0.s8 %v1613
  %v1615 = vlaneseq
  %v1616 = vshrl.u32 %v1615, 7
  %v1617 = vsub.s32 %v1614, %v1616
  %v1618 = vrot.slane %v1611, %v1617
  %1620 = vst [vmem:[%s7] sm:$0xf] %v1618
  // Predicated region
  $region30: #{stnkd_forward.3} parent=0 // pred_check
    _
  $region31: #{stnkd_forward.3} parent=0 // pred_check_branch
    %1622 = sbr.rel (0) target = $region33
  $region32: #{stnkd_forward.3} parent=0 // pred_region
    _
  $region33: #{stnkd_forward.3} parent=0 // pred_fallthru
    _
  // Predicated region
  $region34: #{stnkd_forward.3} parent=0 // pred_check
    _
  $region35: #{stnkd_forward.3} parent=0 // pred_check_branch
    %1624 = sbr.rel (0) target = $region37
  $region36: #{stnkd_forward.3} parent=0 // pred_region
    _
  $region37: #{stnkd_forward.3} parent=0 // pred_fallthru
    _

</llo_original>
